<compile_context>
chip_gen: v7x
topology: tpu7x:2x2x1
jax: 0.10.0
libtpu: 0.0.40
codegen_flags: <defaults>
</compile_context>

<pallas_src>
import functools

import jax
import jax.numpy as jnp
from jax import lax
from jax.experimental import pallas as pl
from jax.experimental.pallas import tpu as pltpu


def _round_up(x, m):
    return ((x + m - 1) // m) * m


def maml_kernel(lr, n_way, n_steps,
                xs_ref, ys_ref, xq_ref, yq_ref,
                w1_ref, b1_ref, w2_ref, b2_ref,
                matches_ref, loss_ref,
                fw1, fb1, fw2, fb2):
    """Fused MAML test-time adaptation.

    Inputs (VMEM):  xs [Ns,Dp] f32, ys [Ns,1] i32, xq [Nq,Dp] f32, yq [Nq,1] i32,
                    meta params w1t [Dp,Hp], b1 [1,Hp], w2t [Hp,Cp], b2 [1,Cp].
    Outputs (VMEM): matches [Nq, n_steps+1] f32 (1.0 where query prediction correct),
                    loss [1,1] f32 (support loss entering the last adapt step — matches
                    the `loss` returned by the torch reference).
    Scratch (VMEM): fast weights (fw1/fb1/fw2/fb2), resident for the whole loop.
    """
    xs = xs_ref[...]                              # [Ns, Dp]
    xq = xq_ref[...]                              # [Nq, Dp]
    ys = ys_ref[...]                              # [Ns, 1] i32
    yq = yq_ref[...]                              # [Nq, 1] i32
    ns = xs.shape[0]
    nq = xq.shape[0]
    cp = w2_ref.shape[1]

    # Hoisted constants (computed once, reused by every unrolled step).
    cols_s = lax.broadcasted_iota(jnp.int32, (ns, cp), 1)
    cols_q = lax.broadcasted_iota(jnp.int32, (nq, cp), 1)
    neg = jnp.float32(-1e9)
    mask_s = jnp.where(cols_s < n_way, 0.0, neg)          # kill padded classes (support)
    mask_q = jnp.where(cols_q < n_way, 0.0, neg)          # kill padded classes (query)
    onehot = (cols_s == ys).astype(jnp.float32)           # [Ns, Cp]
    inv_n = jnp.float32(1.0 / ns)

    # fast_weights <- meta params (stay in VMEM scratch for every inner step)
    fw1[...] = w1_ref[...]
    fb1[...] = b1_ref[...]
    fw2[...] = w2_ref[...]
    fb2[...] = b2_ref[...]

    def fwd(x, w1t, b1, w2t, b2, cmask):
        # transposed layouts: contraction is always LHS-last x RHS-first (no transpose)
        z1 = jnp.dot(x, w1t, preferred_element_type=jnp.float32) + b1     # [N, Hp]
        h = jnp.maximum(z1, 0.0)
        logits = jnp.dot(h, w2t, preferred_element_type=jnp.float32) + b2 + cmask
        return z1, h, logits

    def eval_matches():
        # forward on the query set with the current fast weights; softmax-argmax ==
        # logits-argmax; first-index tie-breaking like the previous version.
        _, _, logits = fwd(xq, fw1[...], fb1[...], fw2[...], fb2[...], mask_q)
        m = jnp.max(logits, axis=1, keepdims=True)
        pred = jnp.min(jnp.where(logits >= m, cols_q, cp), axis=1, keepdims=True)
        return (pred == yq).astype(jnp.float32)            # [Nq, 1]

    def adapt():
        # one inner SGD step on the support set: CE loss, analytic grads, p <- p - lr*g
        w1t, b1, w2t, b2 = fw1[...], fb1[...], fw2[...], fb2[...]
        z1, h, logits = fwd(xs, w1t, b1, w2t, b2, mask_s)

        m = jnp.max(logits, axis=1, keepdims=True)
        e = jnp.exp(logits - m)
        s = jnp.sum(e, axis=1, keepdims=True)
        p = e / s
        lse = m + jnp.log(s)
        logit_y = jnp.sum(onehot * logits, axis=1, keepdims=True)
        loss11 = jnp.mean(lse - logit_y, keepdims=True)    # [1, 1]

        dlogits = (p - onehot) * inv_n                     # [Ns, Cp]
        dw2t = lax.dot_general(h, dlogits, (((0,), (0,)), ((), ())),
                               preferred_element_type=jnp.float32)      # [Hp, Cp]
        db2 = jnp.sum(dlogits, axis=0, keepdims=True)                   # [1, Cp]
        dh = lax.dot_general(dlogits, w2t, (((1,), (1,)), ((), ())),
                             preferred_element_type=jnp.float32)        # [Ns, Hp]
        dz1 = jnp.where(z1 > 0.0, dh, 0.0)                 # ReLU mask fused into select
        dw1t = lax.dot_general(xs, dz1, (((0,), (0,)), ((), ())),
                               preferred_element_type=jnp.float32)      # [Dp, Hp]
        db1 = jnp.sum(dz1, axis=0, keepdims=True)                       # [1, Hp]

        fw1[...] = w1t - lr * dw1t
        fb1[...] = b1 - lr * db1
        fw2[...] = w2t - lr * dw2t
        fb2[...] = b2 - lr * db2
        return loss11

    # corrects[0]: query accuracy with the meta params (fw == meta here)
    matches_ref[:, 0:1] = eval_matches()
    # first adapt step from the meta params, then corrects[1]
    loss11 = adapt()
    matches_ref[:, 1:2] = eval_matches()
    # remaining adapt steps (short & static -> Python-unrolled)
    for k in range(1, n_steps):
        loss11 = adapt()
        matches_ref[:, k + 1:k + 2] = eval_matches()
        # TODO(synk): the torch reference also computes loss_q = CE(query) here, but it
        # is unused in the returned values, so it is omitted.

    loss_ref[...] = loss11


class FixedMamlPallas:
    """JAX/Pallas port of FixedMaml.forward (test-time MAML adaptation)."""

    def __init__(self, update_lr, n_way, update_step_test, imgc, imgsz, hidden, key):
        assert update_step_test >= 1
        self.update_lr = float(update_lr)
        self.n_way = int(n_way)
        self.update_step_test = int(update_step_test)
        self.d = imgc * imgsz * imgsz
        self.dp = _round_up(self.d, 128)      # lane-friendly feature dim
        self.hp = _round_up(hidden, 128)      # lane-friendly hidden dim
        self.cp = _round_up(n_way, 128)       # lane-friendly class dim

        k1, k2 = jax.random.split(key)
        # deterministic stand-in for __load_meta_param (no checkpoint files)
        w1 = jax.random.normal(k1, (hidden, self.d), jnp.float32) * 0.1  # torch [H, D]
        b1 = jnp.zeros((hidden,), jnp.float32)
        w2 = jax.random.normal(k2, (n_way, hidden), jnp.float32) * 0.1   # torch [C, H]
        b2 = jnp.zeros((n_way,), jnp.float32)

        # Pre-transpose + zero-pad once (outside the hot path).  Zero-padded rows /
        # columns contribute nothing to the forward pass and receive zero gradients,
        # so the computation is exactly equivalent to the unpadded torch model.
        w1t = jnp.zeros((self.dp, self.hp), jnp.float32).at[:self.d, :hidden].set(w1.T)
        b1p = jnp.zeros((1, self.hp), jnp.float32).at[0, :hidden].set(b1)
        w2t = jnp.zeros((self.hp, self.cp), jnp.float32).at[:hidden, :n_way].set(w2.T)
        b2p = jnp.zeros((1, self.cp), jnp.float32).at[0, :n_way].set(b2)
        self.meta_param = (w1t, b1p, w2t, b2p)

        self._calls = {}   # jit cache keyed by (n_support, n_query)

    def _get_call(self, ns, nq):
        key = (ns, nq)
        if key in self._calls:
            return self._calls[key]

        kernel = functools.partial(maml_kernel, self.update_lr, self.n_way,
                                   self.update_step_test)
        vmem = pl.BlockSpec(memory_space=pltpu.MemorySpace.VMEM)
        pc = pl.pallas_call(
            kernel,
            out_shape=(
                jax.ShapeDtypeStruct((nq, self.update_step_test + 1), jnp.float32),
                jax.ShapeDtypeStruct((1, 1), jnp.float32),
            ),
            in_specs=[vmem] * 8,
            out_specs=(vmem, vmem),
            scratch_shapes=[
                pltpu.VMEM((self.dp, self.hp), jnp.float32),   # fast w1t
                pltpu.VMEM((1, self.hp), jnp.float32),         # fast b1
                pltpu.VMEM((self.hp, self.cp), jnp.float32),   # fast w2t
                pltpu.VMEM((1, self.cp), jnp.float32),         # fast b2
            ],
            # footprint is well under 1 MiB; keep the budget explicit (v7x has 64 MiB
            # physical VMEM) and avoid any accidental blow-up when D is scaled up.
            compiler_params=pltpu.CompilerParams(vmem_limit_bytes=16 * 1024 * 1024),
        )

        def run(xs, ys, xq, yq, w1t, b1, w2t, b2):
            matches, loss = pc(xs, ys, xq, yq, w1t, b1, w2t, b2)
            corrects = jnp.sum(matches, axis=0)         # [update_step_test + 1]
            return corrects / jnp.float32(nq), loss[0, 0]

        self._calls[key] = jax.jit(run)
        return self._calls[key]

    def forward(self, x_spt, y_spt, x_qry, y_qry):
        querysz = int(x_qry.shape[0])
        ns = int(x_spt.shape[0])
        xs = jnp.asarray(x_spt, jnp.float32).reshape(ns, -1)
        xq = jnp.asarray(x_qry, jnp.float32).reshape(querysz, -1)
        pad = self.dp - self.d
        if pad:
            xs = jnp.pad(xs, ((0, 0), (0, pad)))
            xq = jnp.pad(xq, ((0, 0), (0, pad)))
        ys = jnp.asarray(y_spt, jnp.int32).reshape(-1, 1)
        yq = jnp.asarray(y_qry, jnp.int32).reshape(-1, 1)

        accs, loss = self._get_call(ns, querysz)(xs, ys, xq, yq, *self.meta_param)
        return accs, loss


if __name__ == "__main__":
    # small, module-consistent shapes
    n_way, k_spt, k_qry = 5, 1, 3
    imgc, imgsz = 1, 16
    hidden = 128
    update_lr = 0.4
    update_step_test = 3

    key = jax.random.PRNGKey(0)
    k_param, k_spt_x, k_qry_x = jax.random.split(key, 3)

    model = FixedMamlPallas(update_lr, n_way, update_step_test, imgc, imgsz,
                            hidden, k_param)

    n_spt = n_way * k_spt
    n_qry = n_way * k_qry
    x_spt = jax.random.normal(k_spt_x, (n_spt, imgc, imgsz, imgsz), jnp.float32)
    x_qry = jax.random.normal(k_qry_x, (n_qry, imgc, imgsz, imgsz), jnp.float32)
    y_spt = jnp.tile(jnp.arange(n_way, dtype=jnp.int32), k_spt)
    y_qry = jnp.tile(jnp.arange(n_way, dtype=jnp.int32), k_qry)

    accs, loss = model.forward(x_spt, y_spt, x_qry, y_qry)
    jax.block_until_ready((accs, loss))
    assert accs.shape == (update_step_test + 1,)
    assert jnp.isfinite(loss)
    assert bool(jnp.all((accs >= 0.0) & (accs <= 1.0)))
    print("KERNEL_OK")
</pallas_src>

<mosaic_0001>
module attributes {stable_mosaic.version = 11 : i64} {
  func.func @maml_kernel(%arg0: memref<5x256xf32, #tpu.memory_space<vmem>>, %arg1: memref<5x1xi32, #tpu.memory_space<vmem>>, %arg2: memref<15x256xf32, #tpu.memory_space<vmem>>, %arg3: memref<15x1xi32, #tpu.memory_space<vmem>>, %arg4: memref<256x128xf32, #tpu.memory_space<vmem>>, %arg5: memref<1x128xf32, #tpu.memory_space<vmem>>, %arg6: memref<128x128xf32, #tpu.memory_space<vmem>>, %arg7: memref<1x128xf32, #tpu.memory_space<vmem>>, %arg8: memref<15x4xf32, #tpu.memory_space<vmem>>, %arg9: memref<1x1xf32, #tpu.memory_space<vmem>>, %arg10: memref<256x128xf32, #tpu.memory_space<vmem>>, %arg11: memref<1x128xf32, #tpu.memory_space<vmem>>, %arg12: memref<128x128xf32, #tpu.memory_space<vmem>>, %arg13: memref<1x128xf32, #tpu.memory_space<vmem>>) attributes {dimension_semantics = [], scalar_prefetch = 0 : i64, scratch_operands = 4 : i64, tpu.core_type = #tpu.core_type<tc>} {
    %c0 = arith.constant 0 : index
    %c0_0 = arith.constant 0 : index
    %0 = vector.load %arg0[%c0, %c0_0] : memref<5x256xf32, #tpu.memory_space<vmem>>, vector<5x256xf32>
    %c0_1 = arith.constant 0 : index
    %c0_2 = arith.constant 0 : index
    %1 = vector.load %arg2[%c0_1, %c0_2] : memref<15x256xf32, #tpu.memory_space<vmem>>, vector<15x256xf32>
    %c0_3 = arith.constant 0 : index
    %c0_4 = arith.constant 0 : index
    %2 = vector.load %arg1[%c0_3, %c0_4] : memref<5x1xi32, #tpu.memory_space<vmem>>, vector<5x1xi32>
    %c0_5 = arith.constant 0 : index
    %c0_6 = arith.constant 0 : index
    %3 = vector.load %arg3[%c0_5, %c0_6] : memref<15x1xi32, #tpu.memory_space<vmem>>, vector<15x1xi32>
    %4 = tpu.iota {dimensions = array<i32: 1>} : vector<5x128xi32>
    %5 = tpu.iota {dimensions = array<i32: 1>} : vector<15x128xi32>
    %c5_i32 = arith.constant 5 : i32
    %6 = vector.broadcast %c5_i32 : i32 to vector<5x128xi32>
    %7 = arith.cmpi slt, %4, %6 : vector<5x128xi32>
    %cst = arith.constant 0.000000e+00 : f32
    %cst_7 = arith.constant -1.000000e+09 : f32
    %8 = vector.broadcast %cst : f32 to vector<5x128xf32>
    %9 = vector.broadcast %cst_7 : f32 to vector<5x128xf32>
    %10 = arith.select %7, %8, %9 : vector<5x128xi1>, vector<5x128xf32>
    %c5_i32_8 = arith.constant 5 : i32
    %11 = vector.broadcast %c5_i32_8 : i32 to vector<15x128xi32>
    %12 = arith.cmpi slt, %5, %11 : vector<15x128xi32>
    %cst_9 = arith.constant 0.000000e+00 : f32
    %cst_10 = arith.constant -1.000000e+09 : f32
    %13 = vector.broadcast %cst_9 : f32 to vector<15x128xf32>
    %14 = vector.broadcast %cst_10 : f32 to vector<15x128xf32>
    %15 = arith.select %12, %13, %14 : vector<15x128xi1>, vector<15x128xf32>
    %16 = vector.broadcast %2 : vector<5x1xi32> to vector<5x128xi32>
    %17 = arith.cmpi eq, %4, %16 : vector<5x128xi32>
    %18 = arith.extui %17 : vector<5x128xi1> to vector<5x128xi32>
    %19 = arith.sitofp %18 : vector<5x128xi32> to vector<5x128xf32>
    %c0_11 = arith.constant 0 : index
    %c0_12 = arith.constant 0 : index
    %20 = vector.load %arg4[%c0_11, %c0_12] : memref<256x128xf32, #tpu.memory_space<vmem>>, vector<256x128xf32>
    %c0_13 = arith.constant 0 : index
    %c0_14 = arith.constant 0 : index
    %21 = vector.load %arg10[%c0_13, %c0_14] : memref<256x128xf32, #tpu.memory_space<vmem>>, vector<256x128xf32>
    tpu.vector_store %arg10[%c0_13, %c0_14], %20 {strides = array<i32>} : memref<256x128xf32, #tpu.memory_space<vmem>>, vector<256x128xf32>,
    %c0_15 = arith.constant 0 : index
    %c0_16 = arith.constant 0 : index
    %22 = vector.load %arg5[%c0_15, %c0_16] : memref<1x128xf32, #tpu.memory_space<vmem>>, vector<1x128xf32>
    %c0_17 = arith.constant 0 : index
    %c0_18 = arith.constant 0 : index
    %23 = vector.load %arg11[%c0_17, %c0_18] : memref<1x128xf32, #tpu.memory_space<vmem>>, vector<1x128xf32>
    tpu.vector_store %arg11[%c0_17, %c0_18], %22 {strides = array<i32>} : memref<1x128xf32, #tpu.memory_space<vmem>>, vector<1x128xf32>,
    %c0_19 = arith.constant 0 : index
    %c0_20 = arith.constant 0 : index
    %24 = vector.load %arg6[%c0_19, %c0_20] : memref<128x128xf32, #tpu.memory_space<vmem>>, vector<128x128xf32>
    %c0_21 = arith.constant 0 : index
    %c0_22 = arith.constant 0 : index
    %25 = vector.load %arg12[%c0_21, %c0_22] : memref<128x128xf32, #tpu.memory_space<vmem>>, vector<128x128xf32>
    tpu.vector_store %arg12[%c0_21, %c0_22], %24 {strides = array<i32>} : memref<128x128xf32, #tpu.memory_space<vmem>>, vector<128x128xf32>,
    %c0_23 = arith.constant 0 : index
    %c0_24 = arith.constant 0 : index
    %26 = vector.load %arg7[%c0_23, %c0_24] : memref<1x128xf32, #tpu.memory_space<vmem>>, vector<1x128xf32>
    %c0_25 = arith.constant 0 : index
    %c0_26 = arith.constant 0 : index
    %27 = vector.load %arg13[%c0_25, %c0_26] : memref<1x128xf32, #tpu.memory_space<vmem>>, vector<1x128xf32>
    tpu.vector_store %arg13[%c0_25, %c0_26], %26 {strides = array<i32>} : memref<1x128xf32, #tpu.memory_space<vmem>>, vector<1x128xf32>,
    %c0_27 = arith.constant 0 : index
    %c0_28 = arith.constant 0 : index
    %28 = vector.load %arg10[%c0_27, %c0_28] : memref<256x128xf32, #tpu.memory_space<vmem>>, vector<256x128xf32>
    %c0_29 = arith.constant 0 : index
    %c0_30 = arith.constant 0 : index
    %29 = vector.load %arg11[%c0_29, %c0_30] : memref<1x128xf32, #tpu.memory_space<vmem>>, vector<1x128xf32>
    %c0_31 = arith.constant 0 : index
    %c0_32 = arith.constant 0 : index
    %30 = vector.load %arg12[%c0_31, %c0_32] : memref<128x128xf32, #tpu.memory_space<vmem>>, vector<128x128xf32>
    %c0_33 = arith.constant 0 : index
    %c0_34 = arith.constant 0 : index
    %31 = vector.load %arg13[%c0_33, %c0_34] : memref<1x128xf32, #tpu.memory_space<vmem>>, vector<1x128xf32>
    %cst_35 = arith.constant dense<0.000000e+00> : vector<15x128xf32>
    %32 = tpu.matmul %1, %28, %cst_35 {dimension_numbers = #tpu.dot_dimension_numbers<[1], [0], [0], [1], [0, 0, 1, 1], [], []>} : vector<15x256xf32>, vector<256x128xf32>, vector<15x128xf32> -> vector<15x128xf32>
    %33 = vector.broadcast %29 : vector<1x128xf32> to vector<15x128xf32>
    %34 = arith.addf %32, %33 : vector<15x128xf32>
    %cst_36 = arith.constant 0.000000e+00 : f32
    %35 = vector.broadcast %cst_36 : f32 to vector<15x128xf32>
    %36 = arith.maximumf %34, %35 : vector<15x128xf32>
    %cst_37 = arith.constant dense<0.000000e+00> : vector<15x128xf32>
    %37 = tpu.matmul %36, %30, %cst_37 {dimension_numbers = #tpu.dot_dimension_numbers<[1], [0], [0], [1], [0, 0, 1, 1], [], []>} : vector<15x128xf32>, vector<128x128xf32>, vector<15x128xf32> -> vector<15x128xf32>
    %38 = vector.broadcast %31 : vector<1x128xf32> to vector<15x128xf32>
    %39 = arith.addf %37, %38 : vector<15x128xf32>
    %40 = arith.addf %39, %15 : vector<15x128xf32>
    %cst_38 = arith.constant dense<0xFF800000> : vector<15xf32>
    %41 = vector.multi_reduction <maximumf>, %40, %cst_38 [1] : vector<15x128xf32> to vector<15xf32>
    %42 = vector.shape_cast %41 : vector<15xf32> to vector<15x1xf32>
    %43 = vector.broadcast %42 : vector<15x1xf32> to vector<15x128xf32>
    %44 = arith.cmpf oge, %40, %43 : vector<15x128xf32>
    %c128_i32 = arith.constant 128 : i32
    %45 = vector.broadcast %c128_i32 : i32 to vector<15x128xi32>
    %46 = arith.select %44, %5, %45 : vector<15x128xi1>, vector<15x128xi32>
    %cst_39 = arith.constant dense<2147483647> : vector<15xi32>
    %47 = vector.multi_reduction <minsi>, %46, %cst_39 [1] : vector<15x128xi32> to vector<15xi32>
    %48 = vector.shape_cast %47 : vector<15xi32> to vector<15x1xi32>
    %49 = arith.cmpi eq, %48, %3 : vector<15x1xi32>
    %50 = arith.extui %49 : vector<15x1xi1> to vector<15x1xi32>
    %51 = arith.sitofp %50 : vector<15x1xi32> to vector<15x1xf32>
    %c0_40 = arith.constant 0 : index
    %c0_41 = arith.constant 0 : index
    %52 = vector.load %arg8[%c0_40, %c0_41] : memref<15x4xf32, #tpu.memory_space<vmem>>, vector<15x1xf32>
    tpu.vector_store %arg8[%c0_40, %c0_41], %51 {strides = array<i32>} : memref<15x4xf32, #tpu.memory_space<vmem>>, vector<15x1xf32>,
    %c0_42 = arith.constant 0 : index
    %c0_43 = arith.constant 0 : index
    %53 = vector.load %arg10[%c0_42, %c0_43] : memref<256x128xf32, #tpu.memory_space<vmem>>, vector<256x128xf32>
    %c0_44 = arith.constant 0 : index
    %c0_45 = arith.constant 0 : index
    %54 = vector.load %arg11[%c0_44, %c0_45] : memref<1x128xf32, #tpu.memory_space<vmem>>, vector<1x128xf32>
    %c0_46 = arith.constant 0 : index
    %c0_47 = arith.constant 0 : index
    %55 = vector.load %arg12[%c0_46, %c0_47] : memref<128x128xf32, #tpu.memory_space<vmem>>, vector<128x128xf32>
    %c0_48 = arith.constant 0 : index
    %c0_49 = arith.constant 0 : index
    %56 = vector.load %arg13[%c0_48, %c0_49] : memref<1x128xf32, #tpu.memory_space<vmem>>, vector<1x128xf32>
    %cst_50 = arith.constant dense<0.000000e+00> : vector<5x128xf32>
    %57 = tpu.matmul %0, %53, %cst_50 {dimension_numbers = #tpu.dot_dimension_numbers<[1], [0], [0], [1], [0, 0, 1, 1], [], []>} : vector<5x256xf32>, vector<256x128xf32>, vector<5x128xf32> -> vector<5x128xf32>
    %58 = vector.broadcast %54 : vector<1x128xf32> to vector<5x128xf32>
    %59 = arith.addf %57, %58 : vector<5x128xf32>
    %cst_51 = arith.constant 0.000000e+00 : f32
    %60 = vector.broadcast %cst_51 : f32 to vector<5x128xf32>
    %61 = arith.maximumf %59, %60 : vector<5x128xf32>
    %cst_52 = arith.constant dense<0.000000e+00> : vector<5x128xf32>
    %62 = tpu.matmul %61, %55, %cst_52 {dimension_numbers = #tpu.dot_dimension_numbers<[1], [0], [0], [1], [0, 0, 1, 1], [], []>} : vector<5x128xf32>, vector<128x128xf32>, vector<5x128xf32> -> vector<5x128xf32>
    %63 = vector.broadcast %56 : vector<1x128xf32> to vector<5x128xf32>
    %64 = arith.addf %62, %63 : vector<5x128xf32>
    %65 = arith.addf %64, %10 : vector<5x128xf32>
    %cst_53 = arith.constant dense<0xFF800000> : vector<5xf32>
    %66 = vector.multi_reduction <maximumf>, %65, %cst_53 [1] : vector<5x128xf32> to vector<5xf32>
    %67 = vector.shape_cast %66 : vector<5xf32> to vector<5x1xf32>
    %68 = vector.broadcast %67 : vector<5x1xf32> to vector<5x128xf32>
    %69 = arith.subf %65, %68 : vector<5x128xf32>
    %70 = math.exp %69 : vector<5x128xf32>
    %cst_54 = arith.constant dense<0.000000e+00> : vector<5xf32>
    %71 = vector.multi_reduction <add>, %70, %cst_54 [1] : vector<5x128xf32> to vector<5xf32>
    %72 = vector.shape_cast %71 : vector<5xf32> to vector<5x1xf32>
    %73 = vector.broadcast %72 : vector<5x1xf32> to vector<5x128xf32>
    %74 = arith.divf %70, %73 : vector<5x128xf32>
    %75 = arith.subf %74, %19 : vector<5x128xf32>
    %cst_55 = arith.constant 2.000000e-01 : f32
    %76 = vector.broadcast %cst_55 : f32 to vector<5x128xf32>
    %77 = arith.mulf %75, %76 : vector<5x128xf32>
    %cst_56 = arith.constant dense<0.000000e+00> : vector<128x128xf32>
    %78 = tpu.matmul %61, %77, %cst_56 {dimension_numbers = #tpu.dot_dimension_numbers<[0], [0], [1], [1], [0, 1, 1, 1], [], []>} : vector<5x128xf32>, vector<5x128xf32>, vector<128x128xf32> -> vector<128x128xf32>
    %cst_57 = arith.constant dense<0.000000e+00> : vector<128xf32>
    %79 = vector.multi_reduction <add>, %77, %cst_57 [0] : vector<5x128xf32> to vector<128xf32>
    %80 = vector.shape_cast %79 : vector<128xf32> to vector<1x128xf32>
    %cst_58 = arith.constant dense<0.000000e+00> : vector<5x128xf32>
    %81 = tpu.matmul %77, %55, %cst_58 {dimension_numbers = #tpu.dot_dimension_numbers<[1], [1], [0], [0], [0, 0, 1, 0], [], []>} : vector<5x128xf32>, vector<128x128xf32>, vector<5x128xf32> -> vector<5x128xf32>
    %cst_59 = arith.constant 0.000000e+00 : f32
    %82 = vector.broadcast %cst_59 : f32 to vector<5x128xf32>
    %83 = arith.cmpf ogt, %59, %82 : vector<5x128xf32>
    %cst_60 = arith.constant 0.000000e+00 : f32
    %84 = vector.broadcast %cst_60 : f32 to vector<5x128xf32>
    %85 = arith.select %83, %81, %84 : vector<5x128xi1>, vector<5x128xf32>
    %cst_61 = arith.constant dense<0.000000e+00> : vector<256x128xf32>
    %86 = tpu.matmul %0, %85, %cst_61 {dimension_numbers = #tpu.dot_dimension_numbers<[0], [0], [1], [1], [0, 1, 1, 1], [], []>} : vector<5x256xf32>, vector<5x128xf32>, vector<256x128xf32> -> vector<256x128xf32>
    %cst_62 = arith.constant dense<0.000000e+00> : vector<128xf32>
    %87 = vector.multi_reduction <add>, %85, %cst_62 [0] : vector<5x128xf32> to vector<128xf32>
    %88 = vector.shape_cast %87 : vector<128xf32> to vector<1x128xf32>
    %cst_63 = arith.constant 4.000000e-01 : f32
    %89 = vector.broadcast %cst_63 : f32 to vector<256x128xf32>
    %90 = arith.mulf %89, %86 : vector<256x128xf32>
    %91 = arith.subf %53, %90 : vector<256x128xf32>
    %c0_64 = arith.constant 0 : index
    %c0_65 = arith.constant 0 : index
    %92 = vector.load %arg10[%c0_64, %c0_65] : memref<256x128xf32, #tpu.memory_space<vmem>>, vector<256x128xf32>
    tpu.vector_store %arg10[%c0_64, %c0_65], %91 {strides = array<i32>} : memref<256x128xf32, #tpu.memory_space<vmem>>, vector<256x128xf32>,
    %cst_66 = arith.constant 4.000000e-01 : f32
    %93 = vector.broadcast %cst_66 : f32 to vector<1x128xf32>
    %94 = arith.mulf %93, %88 : vector<1x128xf32>
    %95 = arith.subf %54, %94 : vector<1x128xf32>
    %c0_67 = arith.constant 0 : index
    %c0_68 = arith.constant 0 : index
    %96 = vector.load %arg11[%c0_67, %c0_68] : memref<1x128xf32, #tpu.memory_space<vmem>>, vector<1x128xf32>
    tpu.vector_store %arg11[%c0_67, %c0_68], %95 {strides = array<i32>} : memref<1x128xf32, #tpu.memory_space<vmem>>, vector<1x128xf32>,
    %cst_69 = arith.constant 4.000000e-01 : f32
    %97 = vector.broadcast %cst_69 : f32 to vector<128x128xf32>
    %98 = arith.mulf %97, %78 : vector<128x128xf32>
    %99 = arith.subf %55, %98 : vector<128x128xf32>
    %c0_70 = arith.constant 0 : index
    %c0_71 = arith.constant 0 : index
    %100 = vector.load %arg12[%c0_70, %c0_71] : memref<128x128xf32, #tpu.memory_space<vmem>>, vector<128x128xf32>
    tpu.vector_store %arg12[%c0_70, %c0_71], %99 {strides = array<i32>} : memref<128x128xf32, #tpu.memory_space<vmem>>, vector<128x128xf32>,
    %cst_72 = arith.constant 4.000000e-01 : f32
    %101 = vector.broadcast %cst_72 : f32 to vector<1x128xf32>
    %102 = arith.mulf %101, %80 : vector<1x128xf32>
    %103 = arith.subf %56, %102 : vector<1x128xf32>
    %c0_73 = arith.constant 0 : index
    %c0_74 = arith.constant 0 : index
    %104 = vector.load %arg13[%c0_73, %c0_74] : memref<1x128xf32, #tpu.memory_space<vmem>>, vector<1x128xf32>
    tpu.vector_store %arg13[%c0_73, %c0_74], %103 {strides = array<i32>} : memref<1x128xf32, #tpu.memory_space<vmem>>, vector<1x128xf32>,
    %c0_75 = arith.constant 0 : index
    %c0_76 = arith.constant 0 : index
    %105 = vector.load %arg10[%c0_75, %c0_76] : memref<256x128xf32, #tpu.memory_space<vmem>>, vector<256x128xf32>
    %c0_77 = arith.constant 0 : index
    %c0_78 = arith.constant 0 : index
    %106 = vector.load %arg11[%c0_77, %c0_78] : memref<1x128xf32, #tpu.memory_space<vmem>>, vector<1x128xf32>
    %c0_79 = arith.constant 0 : index
    %c0_80 = arith.constant 0 : index
    %107 = vector.load %arg12[%c0_79, %c0_80] : memref<128x128xf32, #tpu.memory_space<vmem>>, vector<128x128xf32>
    %c0_81 = arith.constant 0 : index
    %c0_82 = arith.constant 0 : index
    %108 = vector.load %arg13[%c0_81, %c0_82] : memref<1x128xf32, #tpu.memory_space<vmem>>, vector<1x128xf32>
    %cst_83 = arith.constant dense<0.000000e+00> : vector<15x128xf32>
    %109 = tpu.matmul %1, %105, %cst_83 {dimension_numbers = #tpu.dot_dimension_numbers<[1], [0], [0], [1], [0, 0, 1, 1], [], []>} : vector<15x256xf32>, vector<256x128xf32>, vector<15x128xf32> -> vector<15x128xf32>
    %110 = vector.broadcast %106 : vector<1x128xf32> to vector<15x128xf32>
    %111 = arith.addf %109, %110 : vector<15x128xf32>
    %cst_84 = arith.constant 0.000000e+00 : f32
    %112 = vector.broadcast %cst_84 : f32 to vector<15x128xf32>
    %113 = arith.maximumf %111, %112 : vector<15x128xf32>
    %cst_85 = arith.constant dense<0.000000e+00> : vector<15x128xf32>
    %114 = tpu.matmul %113, %107, %cst_85 {dimension_numbers = #tpu.dot_dimension_numbers<[1], [0], [0], [1], [0, 0, 1, 1], [], []>} : vector<15x128xf32>, vector<128x128xf32>, vector<15x128xf32> -> vector<15x128xf32>
    %115 = vector.broadcast %108 : vector<1x128xf32> to vector<15x128xf32>
    %116 = arith.addf %114, %115 : vector<15x128xf32>
    %117 = arith.addf %116, %15 : vector<15x128xf32>
    %cst_86 = arith.constant dense<0xFF800000> : vector<15xf32>
    %118 = vector.multi_reduction <maximumf>, %117, %cst_86 [1] : vector<15x128xf32> to vector<15xf32>
    %119 = vector.shape_cast %118 : vector<15xf32> to vector<15x1xf32>
    %120 = vector.broadcast %119 : vector<15x1xf32> to vector<15x128xf32>
    %121 = arith.cmpf oge, %117, %120 : vector<15x128xf32>
    %c128_i32_87 = arith.constant 128 : i32
    %122 = vector.broadcast %c128_i32_87 : i32 to vector<15x128xi32>
    %123 = arith.select %121, %5, %122 : vector<15x128xi1>, vector<15x128xi32>
    %cst_88 = arith.constant dense<2147483647> : vector<15xi32>
    %124 = vector.multi_reduction <minsi>, %123, %cst_88 [1] : vector<15x128xi32> to vector<15xi32>
    %125 = vector.shape_cast %124 : vector<15xi32> to vector<15x1xi32>
    %126 = arith.cmpi eq, %125, %3 : vector<15x1xi32>
    %127 = arith.extui %126 : vector<15x1xi1> to vector<15x1xi32>
    %128 = arith.sitofp %127 : vector<15x1xi32> to vector<15x1xf32>
    %c0_89 = arith.constant 0 : index
    %c1 = arith.constant 1 : index
    %129 = vector.load %arg8[%c0_89, %c1] : memref<15x4xf32, #tpu.memory_space<vmem>>, vector<15x1xf32>
    tpu.vector_store %arg8[%c0_89, %c1], %128 {strides = array<i32>} : memref<15x4xf32, #tpu.memory_space<vmem>>, vector<15x1xf32>,
    %c0_90 = arith.constant 0 : index
    %c0_91 = arith.constant 0 : index
    %130 = vector.load %arg10[%c0_90, %c0_91] : memref<256x128xf32, #tpu.memory_space<vmem>>, vector<256x128xf32>
    %c0_92 = arith.constant 0 : index
    %c0_93 = arith.constant 0 : index
    %131 = vector.load %arg11[%c0_92, %c0_93] : memref<1x128xf32, #tpu.memory_space<vmem>>, vector<1x128xf32>
    %c0_94 = arith.constant 0 : index
    %c0_95 = arith.constant 0 : index
    %132 = vector.load %arg12[%c0_94, %c0_95] : memref<128x128xf32, #tpu.memory_space<vmem>>, vector<128x128xf32>
    %c0_96 = arith.constant 0 : index
    %c0_97 = arith.constant 0 : index
    %133 = vector.load %arg13[%c0_96, %c0_97] : memref<1x128xf32, #tpu.memory_space<vmem>>, vector<1x128xf32>
    %cst_98 = arith.constant dense<0.000000e+00> : vector<5x128xf32>
    %134 = tpu.matmul %0, %130, %cst_98 {dimension_numbers = #tpu.dot_dimension_numbers<[1], [0], [0], [1], [0, 0, 1, 1], [], []>} : vector<5x256xf32>, vector<256x128xf32>, vector<5x128xf32> -> vector<5x128xf32>
    %135 = vector.broadcast %131 : vector<1x128xf32> to vector<5x128xf32>
    %136 = arith.addf %134, %135 : vector<5x128xf32>
    %cst_99 = arith.constant 0.000000e+00 : f32
    %137 = vector.broadcast %cst_99 : f32 to vector<5x128xf32>
    %138 = arith.maximumf %136, %137 : vector<5x128xf32>
    %cst_100 = arith.constant dense<0.000000e+00> : vector<5x128xf32>
    %139 = tpu.matmul %138, %132, %cst_100 {dimension_numbers = #tpu.dot_dimension_numbers<[1], [0], [0], [1], [0, 0, 1, 1], [], []>} : vector<5x128xf32>, vector<128x128xf32>, vector<5x128xf32> -> vector<5x128xf32>
    %140 = vector.broadcast %133 : vector<1x128xf32> to vector<5x128xf32>
    %141 = arith.addf %139, %140 : vector<5x128xf32>
    %142 = arith.addf %141, %10 : vector<5x128xf32>
    %cst_101 = arith.constant dense<0xFF800000> : vector<5xf32>
    %143 = vector.multi_reduction <maximumf>, %142, %cst_101 [1] : vector<5x128xf32> to vector<5xf32>
    %144 = vector.shape_cast %143 : vector<5xf32> to vector<5x1xf32>
    %145 = vector.broadcast %144 : vector<5x1xf32> to vector<5x128xf32>
    %146 = arith.subf %142, %145 : vector<5x128xf32>
    %147 = math.exp %146 : vector<5x128xf32>
    %cst_102 = arith.constant dense<0.000000e+00> : vector<5xf32>
    %148 = vector.multi_reduction <add>, %147, %cst_102 [1] : vector<5x128xf32> to vector<5xf32>
    %149 = vector.shape_cast %148 : vector<5xf32> to vector<5x1xf32>
    %150 = vector.broadcast %149 : vector<5x1xf32> to vector<5x128xf32>
    %151 = arith.divf %147, %150 : vector<5x128xf32>
    %152 = arith.subf %151, %19 : vector<5x128xf32>
    %cst_103 = arith.constant 2.000000e-01 : f32
    %153 = vector.broadcast %cst_103 : f32 to vector<5x128xf32>
    %154 = arith.mulf %152, %153 : vector<5x128xf32>
    %cst_104 = arith.constant dense<0.000000e+00> : vector<128x128xf32>
    %155 = tpu.matmul %138, %154, %cst_104 {dimension_numbers = #tpu.dot_dimension_numbers<[0], [0], [1], [1], [0, 1, 1, 1], [], []>} : vector<5x128xf32>, vector<5x128xf32>, vector<128x128xf32> -> vector<128x128xf32>
    %cst_105 = arith.constant dense<0.000000e+00> : vector<128xf32>
    %156 = vector.multi_reduction <add>, %154, %cst_105 [0] : vector<5x128xf32> to vector<128xf32>
    %157 = vector.shape_cast %156 : vector<128xf32> to vector<1x128xf32>
    %cst_106 = arith.constant dense<0.000000e+00> : vector<5x128xf32>
    %158 = tpu.matmul %154, %132, %cst_106 {dimension_numbers = #tpu.dot_dimension_numbers<[1], [1], [0], [0], [0, 0, 1, 0], [], []>} : vector<5x128xf32>, vector<128x128xf32>, vector<5x128xf32> -> vector<5x128xf32>
    %cst_107 = arith.constant 0.000000e+00 : f32
    %159 = vector.broadcast %cst_107 : f32 to vector<5x128xf32>
    %160 = arith.cmpf ogt, %136, %159 : vector<5x128xf32>
    %cst_108 = arith.constant 0.000000e+00 : f32
    %161 = vector.broadcast %cst_108 : f32 to vector<5x128xf32>
    %162 = arith.select %160, %158, %161 : vector<5x128xi1>, vector<5x128xf32>
    %cst_109 = arith.constant dense<0.000000e+00> : vector<256x128xf32>
    %163 = tpu.matmul %0, %162, %cst_109 {dimension_numbers = #tpu.dot_dimension_numbers<[0], [0], [1], [1], [0, 1, 1, 1], [], []>} : vector<5x256xf32>, vector<5x128xf32>, vector<256x128xf32> -> vector<256x128xf32>
    %cst_110 = arith.constant dense<0.000000e+00> : vector<128xf32>
    %164 = vector.multi_reduction <add>, %162, %cst_110 [0] : vector<5x128xf32> to vector<128xf32>
    %165 = vector.shape_cast %164 : vector<128xf32> to vector<1x128xf32>
    %cst_111 = arith.constant 4.000000e-01 : f32
    %166 = vector.broadcast %cst_111 : f32 to vector<256x128xf32>
    %167 = arith.mulf %166, %163 : vector<256x128xf32>
    %168 = arith.subf %130, %167 : vector<256x128xf32>
    %c0_112 = arith.constant 0 : index
    %c0_113 = arith.constant 0 : index
    %169 = vector.load %arg10[%c0_112, %c0_113] : memref<256x128xf32, #tpu.memory_space<vmem>>, vector<256x128xf32>
    tpu.vector_store %arg10[%c0_112, %c0_113], %168 {strides = array<i32>} : memref<256x128xf32, #tpu.memory_space<vmem>>, vector<256x128xf32>,
    %cst_114 = arith.constant 4.000000e-01 : f32
    %170 = vector.broadcast %cst_114 : f32 to vector<1x128xf32>
    %171 = arith.mulf %170, %165 : vector<1x128xf32>
    %172 = arith.subf %131, %171 : vector<1x128xf32>
    %c0_115 = arith.constant 0 : index
    %c0_116 = arith.constant 0 : index
    %173 = vector.load %arg11[%c0_115, %c0_116] : memref<1x128xf32, #tpu.memory_space<vmem>>, vector<1x128xf32>
    tpu.vector_store %arg11[%c0_115, %c0_116], %172 {strides = array<i32>} : memref<1x128xf32, #tpu.memory_space<vmem>>, vector<1x128xf32>,
    %cst_117 = arith.constant 4.000000e-01 : f32
    %174 = vector.broadcast %cst_117 : f32 to vector<128x128xf32>
    %175 = arith.mulf %174, %155 : vector<128x128xf32>
    %176 = arith.subf %132, %175 : vector<128x128xf32>
    %c0_118 = arith.constant 0 : index
    %c0_119 = arith.constant 0 : index
    %177 = vector.load %arg12[%c0_118, %c0_119] : memref<128x128xf32, #tpu.memory_space<vmem>>, vector<128x128xf32>
    tpu.vector_store %arg12[%c0_118, %c0_119], %176 {strides = array<i32>} : memref<128x128xf32, #tpu.memory_space<vmem>>, vector<128x128xf32>,
    %cst_120 = arith.constant 4.000000e-01 : f32
    %178 = vector.broadcast %cst_120 : f32 to vector<1x128xf32>
    %179 = arith.mulf %178, %157 : vector<1x128xf32>
    %180 = arith.subf %133, %179 : vector<1x128xf32>
    %c0_121 = arith.constant 0 : index
    %c0_122 = arith.constant 0 : index
    %181 = vector.load %arg13[%c0_121, %c0_122] : memref<1x128xf32, #tpu.memory_space<vmem>>, vector<1x128xf32>
    tpu.vector_store %arg13[%c0_121, %c0_122], %180 {strides = array<i32>} : memref<1x128xf32, #tpu.memory_space<vmem>>, vector<1x128xf32>,
    %c0_123 = arith.constant 0 : index
    %c0_124 = arith.constant 0 : index
    %182 = vector.load %arg10[%c0_123, %c0_124] : memref<256x128xf32, #tpu.memory_space<vmem>>, vector<256x128xf32>
    %c0_125 = arith.constant 0 : index
    %c0_126 = arith.constant 0 : index
    %183 = vector.load %arg11[%c0_125, %c0_126] : memref<1x128xf32, #tpu.memory_space<vmem>>, vector<1x128xf32>
    %c0_127 = arith.constant 0 : index
    %c0_128 = arith.constant 0 : index
    %184 = vector.load %arg12[%c0_127, %c0_128] : memref<128x128xf32, #tpu.memory_space<vmem>>, vector<128x128xf32>
    %c0_129 = arith.constant 0 : index
    %c0_130 = arith.constant 0 : index
    %185 = vector.load %arg13[%c0_129, %c0_130] : memref<1x128xf32, #tpu.memory_space<vmem>>, vector<1x128xf32>
    %cst_131 = arith.constant dense<0.000000e+00> : vector<15x128xf32>
    %186 = tpu.matmul %1, %182, %cst_131 {dimension_numbers = #tpu.dot_dimension_numbers<[1], [0], [0], [1], [0, 0, 1, 1], [], []>} : vector<15x256xf32>, vector<256x128xf32>, vector<15x128xf32> -> vector<15x128xf32>
    %187 = vector.broadcast %183 : vector<1x128xf32> to vector<15x128xf32>
    %188 = arith.addf %186, %187 : vector<15x128xf32>
    %cst_132 = arith.constant 0.000000e+00 : f32
    %189 = vector.broadcast %cst_132 : f32 to vector<15x128xf32>
    %190 = arith.maximumf %188, %189 : vector<15x128xf32>
    %cst_133 = arith.constant dense<0.000000e+00> : vector<15x128xf32>
    %191 = tpu.matmul %190, %184, %cst_133 {dimension_numbers = #tpu.dot_dimension_numbers<[1], [0], [0], [1], [0, 0, 1, 1], [], []>} : vector<15x128xf32>, vector<128x128xf32>, vector<15x128xf32> -> vector<15x128xf32>
    %192 = vector.broadcast %185 : vector<1x128xf32> to vector<15x128xf32>
    %193 = arith.addf %191, %192 : vector<15x128xf32>
    %194 = arith.addf %193, %15 : vector<15x128xf32>
    %cst_134 = arith.constant dense<0xFF800000> : vector<15xf32>
    %195 = vector.multi_reduction <maximumf>, %194, %cst_134 [1] : vector<15x128xf32> to vector<15xf32>
    %196 = vector.shape_cast %195 : vector<15xf32> to vector<15x1xf32>
    %197 = vector.broadcast %196 : vector<15x1xf32> to vector<15x128xf32>
    %198 = arith.cmpf oge, %194, %197 : vector<15x128xf32>
    %c128_i32_135 = arith.constant 128 : i32
    %199 = vector.broadcast %c128_i32_135 : i32 to vector<15x128xi32>
    %200 = arith.select %198, %5, %199 : vector<15x128xi1>, vector<15x128xi32>
    %cst_136 = arith.constant dense<2147483647> : vector<15xi32>
    %201 = vector.multi_reduction <minsi>, %200, %cst_136 [1] : vector<15x128xi32> to vector<15xi32>
    %202 = vector.shape_cast %201 : vector<15xi32> to vector<15x1xi32>
    %203 = arith.cmpi eq, %202, %3 : vector<15x1xi32>
    %204 = arith.extui %203 : vector<15x1xi1> to vector<15x1xi32>
    %205 = arith.sitofp %204 : vector<15x1xi32> to vector<15x1xf32>
    %c0_137 = arith.constant 0 : index
    %c2 = arith.constant 2 : index
    %206 = vector.load %arg8[%c0_137, %c2] : memref<15x4xf32, #tpu.memory_space<vmem>>, vector<15x1xf32>
    tpu.vector_store %arg8[%c0_137, %c2], %205 {strides = array<i32>} : memref<15x4xf32, #tpu.memory_space<vmem>>, vector<15x1xf32>,
    %c0_138 = arith.constant 0 : index
    %c0_139 = arith.constant 0 : index
    %207 = vector.load %arg10[%c0_138, %c0_139] : memref<256x128xf32, #tpu.memory_space<vmem>>, vector<256x128xf32>
    %c0_140 = arith.constant 0 : index
    %c0_141 = arith.constant 0 : index
    %208 = vector.load %arg11[%c0_140, %c0_141] : memref<1x128xf32, #tpu.memory_space<vmem>>, vector<1x128xf32>
    %c0_142 = arith.constant 0 : index
    %c0_143 = arith.constant 0 : index
    %209 = vector.load %arg12[%c0_142, %c0_143] : memref<128x128xf32, #tpu.memory_space<vmem>>, vector<128x128xf32>
    %c0_144 = arith.constant 0 : index
    %c0_145 = arith.constant 0 : index
    %210 = vector.load %arg13[%c0_144, %c0_145] : memref<1x128xf32, #tpu.memory_space<vmem>>, vector<1x128xf32>
    %cst_146 = arith.constant dense<0.000000e+00> : vector<5x128xf32>
    %211 = tpu.matmul %0, %207, %cst_146 {dimension_numbers = #tpu.dot_dimension_numbers<[1], [0], [0], [1], [0, 0, 1, 1], [], []>} : vector<5x256xf32>, vector<256x128xf32>, vector<5x128xf32> -> vector<5x128xf32>
    %212 = vector.broadcast %208 : vector<1x128xf32> to vector<5x128xf32>
    %213 = arith.addf %211, %212 : vector<5x128xf32>
    %cst_147 = arith.constant 0.000000e+00 : f32
    %214 = vector.broadcast %cst_147 : f32 to vector<5x128xf32>
    %215 = arith.maximumf %213, %214 : vector<5x128xf32>
    %cst_148 = arith.constant dense<0.000000e+00> : vector<5x128xf32>
    %216 = tpu.matmul %215, %209, %cst_148 {dimension_numbers = #tpu.dot_dimension_numbers<[1], [0], [0], [1], [0, 0, 1, 1], [], []>} : vector<5x128xf32>, vector<128x128xf32>, vector<5x128xf32> -> vector<5x128xf32>
    %217 = vector.broadcast %210 : vector<1x128xf32> to vector<5x128xf32>
    %218 = arith.addf %216, %217 : vector<5x128xf32>
    %219 = arith.addf %218, %10 : vector<5x128xf32>
    %cst_149 = arith.constant dense<0xFF800000> : vector<5xf32>
    %220 = vector.multi_reduction <maximumf>, %219, %cst_149 [1] : vector<5x128xf32> to vector<5xf32>
    %221 = vector.shape_cast %220 : vector<5xf32> to vector<5x1xf32>
    %222 = vector.broadcast %221 : vector<5x1xf32> to vector<5x128xf32>
    %223 = arith.subf %219, %222 : vector<5x128xf32>
    %224 = math.exp %223 : vector<5x128xf32>
    %cst_150 = arith.constant dense<0.000000e+00> : vector<5xf32>
    %225 = vector.multi_reduction <add>, %224, %cst_150 [1] : vector<5x128xf32> to vector<5xf32>
    %226 = vector.shape_cast %225 : vector<5xf32> to vector<5x1xf32>
    %227 = vector.broadcast %226 : vector<5x1xf32> to vector<5x128xf32>
    %228 = arith.divf %224, %227 : vector<5x128xf32>
    %229 = math.log %226 : vector<5x1xf32>
    %230 = arith.addf %221, %229 : vector<5x1xf32>
    %231 = arith.mulf %19, %219 : vector<5x128xf32>
    %cst_151 = arith.constant dense<0.000000e+00> : vector<5xf32>
    %232 = vector.multi_reduction <add>, %231, %cst_151 [1] : vector<5x128xf32> to vector<5xf32>
    %233 = vector.shape_cast %232 : vector<5xf32> to vector<5x1xf32>
    %234 = arith.subf %230, %233 : vector<5x1xf32>
    %235 = vector.shape_cast %234 : vector<5x1xf32> to vector<1x5x1xf32>
    %cst_152 = arith.constant dense<0.000000e+00> : vector<1xf32>
    %236 = vector.multi_reduction <add>, %235, %cst_152 [1, 2] : vector<1x5x1xf32> to vector<1xf32>
    %237 = vector.shape_cast %236 : vector<1xf32> to vector<1x1x1xf32>
    %238 = vector.extract %237[0, 0, 0] : f32 from vector<1x1x1xf32>
    %239 = vector.broadcast %238 : f32 to vector<1x1xf32>
    %cst_153 = arith.constant 5.000000e+00 : f32
    %240 = vector.broadcast %cst_153 : f32 to vector<1x1xf32>
    %241 = arith.divf %239, %240 : vector<1x1xf32>
    %242 = arith.subf %228, %19 : vector<5x128xf32>
    %cst_154 = arith.constant 2.000000e-01 : f32
    %243 = vector.broadcast %cst_154 : f32 to vector<5x128xf32>
    %244 = arith.mulf %242, %243 : vector<5x128xf32>
    %cst_155 = arith.constant dense<0.000000e+00> : vector<128x128xf32>
    %245 = tpu.matmul %215, %244, %cst_155 {dimension_numbers = #tpu.dot_dimension_numbers<[0], [0], [1], [1], [0, 1, 1, 1], [], []>} : vector<5x128xf32>, vector<5x128xf32>, vector<128x128xf32> -> vector<128x128xf32>
    %cst_156 = arith.constant dense<0.000000e+00> : vector<128xf32>
    %246 = vector.multi_reduction <add>, %244, %cst_156 [0] : vector<5x128xf32> to vector<128xf32>
    %247 = vector.shape_cast %246 : vector<128xf32> to vector<1x128xf32>
    %cst_157 = arith.constant dense<0.000000e+00> : vector<5x128xf32>
    %248 = tpu.matmul %244, %209, %cst_157 {dimension_numbers = #tpu.dot_dimension_numbers<[1], [1], [0], [0], [0, 0, 1, 0], [], []>} : vector<5x128xf32>, vector<128x128xf32>, vector<5x128xf32> -> vector<5x128xf32>
    %cst_158 = arith.constant 0.000000e+00 : f32
    %249 = vector.broadcast %cst_158 : f32 to vector<5x128xf32>
    %250 = arith.cmpf ogt, %213, %249 : vector<5x128xf32>
    %cst_159 = arith.constant 0.000000e+00 : f32
    %251 = vector.broadcast %cst_159 : f32 to vector<5x128xf32>
    %252 = arith.select %250, %248, %251 : vector<5x128xi1>, vector<5x128xf32>
    %cst_160 = arith.constant dense<0.000000e+00> : vector<256x128xf32>
    %253 = tpu.matmul %0, %252, %cst_160 {dimension_numbers = #tpu.dot_dimension_numbers<[0], [0], [1], [1], [0, 1, 1, 1], [], []>} : vector<5x256xf32>, vector<5x128xf32>, vector<256x128xf32> -> vector<256x128xf32>
    %cst_161 = arith.constant dense<0.000000e+00> : vector<128xf32>
    %254 = vector.multi_reduction <add>, %252, %cst_161 [0] : vector<5x128xf32> to vector<128xf32>
    %255 = vector.shape_cast %254 : vector<128xf32> to vector<1x128xf32>
    %cst_162 = arith.constant 4.000000e-01 : f32
    %256 = vector.broadcast %cst_162 : f32 to vector<256x128xf32>
    %257 = arith.mulf %256, %253 : vector<256x128xf32>
    %258 = arith.subf %207, %257 : vector<256x128xf32>
    %c0_163 = arith.constant 0 : index
    %c0_164 = arith.constant 0 : index
    %259 = vector.load %arg10[%c0_163, %c0_164] : memref<256x128xf32, #tpu.memory_space<vmem>>, vector<256x128xf32>
    tpu.vector_store %arg10[%c0_163, %c0_164], %258 {strides = array<i32>} : memref<256x128xf32, #tpu.memory_space<vmem>>, vector<256x128xf32>,
    %cst_165 = arith.constant 4.000000e-01 : f32
    %260 = vector.broadcast %cst_165 : f32 to vector<1x128xf32>
    %261 = arith.mulf %260, %255 : vector<1x128xf32>
    %262 = arith.subf %208, %261 : vector<1x128xf32>
    %c0_166 = arith.constant 0 : index
    %c0_167 = arith.constant 0 : index
    %263 = vector.load %arg11[%c0_166, %c0_167] : memref<1x128xf32, #tpu.memory_space<vmem>>, vector<1x128xf32>
    tpu.vector_store %arg11[%c0_166, %c0_167], %262 {strides = array<i32>} : memref<1x128xf32, #tpu.memory_space<vmem>>, vector<1x128xf32>,
    %cst_168 = arith.constant 4.000000e-01 : f32
    %264 = vector.broadcast %cst_168 : f32 to vector<128x128xf32>
    %265 = arith.mulf %264, %245 : vector<128x128xf32>
    %266 = arith.subf %209, %265 : vector<128x128xf32>
    %c0_169 = arith.constant 0 : index
    %c0_170 = arith.constant 0 : index
    %267 = vector.load %arg12[%c0_169, %c0_170] : memref<128x128xf32, #tpu.memory_space<vmem>>, vector<128x128xf32>
    tpu.vector_store %arg12[%c0_169, %c0_170], %266 {strides = array<i32>} : memref<128x128xf32, #tpu.memory_space<vmem>>, vector<128x128xf32>,
    %cst_171 = arith.constant 4.000000e-01 : f32
    %268 = vector.broadcast %cst_171 : f32 to vector<1x128xf32>
    %269 = arith.mulf %268, %247 : vector<1x128xf32>
    %270 = arith.subf %210, %269 : vector<1x128xf32>
    %c0_172 = arith.constant 0 : index
    %c0_173 = arith.constant 0 : index
    %271 = vector.load %arg13[%c0_172, %c0_173] : memref<1x128xf32, #tpu.memory_space<vmem>>, vector<1x128xf32>
    tpu.vector_store %arg13[%c0_172, %c0_173], %270 {strides = array<i32>} : memref<1x128xf32, #tpu.memory_space<vmem>>, vector<1x128xf32>,
    %c0_174 = arith.constant 0 : index
    %c0_175 = arith.constant 0 : index
    %272 = vector.load %arg10[%c0_174, %c0_175] : memref<256x128xf32, #tpu.memory_space<vmem>>, vector<256x128xf32>
    %c0_176 = arith.constant 0 : index
    %c0_177 = arith.constant 0 : index
    %273 = vector.load %arg11[%c0_176, %c0_177] : memref<1x128xf32, #tpu.memory_space<vmem>>, vector<1x128xf32>
    %c0_178 = arith.constant 0 : index
    %c0_179 = arith.constant 0 : index
    %274 = vector.load %arg12[%c0_178, %c0_179] : memref<128x128xf32, #tpu.memory_space<vmem>>, vector<128x128xf32>
    %c0_180 = arith.constant 0 : index
    %c0_181 = arith.constant 0 : index
    %275 = vector.load %arg13[%c0_180, %c0_181] : memref<1x128xf32, #tpu.memory_space<vmem>>, vector<1x128xf32>
    %cst_182 = arith.constant dense<0.000000e+00> : vector<15x128xf32>
    %276 = tpu.matmul %1, %272, %cst_182 {dimension_numbers = #tpu.dot_dimension_numbers<[1], [0], [0], [1], [0, 0, 1, 1], [], []>} : vector<15x256xf32>, vector<256x128xf32>, vector<15x128xf32> -> vector<15x128xf32>
    %277 = vector.broadcast %273 : vector<1x128xf32> to vector<15x128xf32>
    %278 = arith.addf %276, %277 : vector<15x128xf32>
    %cst_183 = arith.constant 0.000000e+00 : f32
    %279 = vector.broadcast %cst_183 : f32 to vector<15x128xf32>
    %280 = arith.maximumf %278, %279 : vector<15x128xf32>
    %cst_184 = arith.constant dense<0.000000e+00> : vector<15x128xf32>
    %281 = tpu.matmul %280, %274, %cst_184 {dimension_numbers = #tpu.dot_dimension_numbers<[1], [0], [0], [1], [0, 0, 1, 1], [], []>} : vector<15x128xf32>, vector<128x128xf32>, vector<15x128xf32> -> vector<15x128xf32>
    %282 = vector.broadcast %275 : vector<1x128xf32> to vector<15x128xf32>
    %283 = arith.addf %281, %282 : vector<15x128xf32>
    %284 = arith.addf %283, %15 : vector<15x128xf32>
    %cst_185 = arith.constant dense<0xFF800000> : vector<15xf32>
    %285 = vector.multi_reduction <maximumf>, %284, %cst_185 [1] : vector<15x128xf32> to vector<15xf32>
    %286 = vector.shape_cast %285 : vector<15xf32> to vector<15x1xf32>
    %287 = vector.broadcast %286 : vector<15x1xf32> to vector<15x128xf32>
    %288 = arith.cmpf oge, %284, %287 : vector<15x128xf32>
    %c128_i32_186 = arith.constant 128 : i32
    %289 = vector.broadcast %c128_i32_186 : i32 to vector<15x128xi32>
    %290 = arith.select %288, %5, %289 : vector<15x128xi1>, vector<15x128xi32>
    %cst_187 = arith.constant dense<2147483647> : vector<15xi32>
    %291 = vector.multi_reduction <minsi>, %290, %cst_187 [1] : vector<15x128xi32> to vector<15xi32>
    %292 = vector.shape_cast %291 : vector<15xi32> to vector<15x1xi32>
    %293 = arith.cmpi eq, %292, %3 : vector<15x1xi32>
    %294 = arith.extui %293 : vector<15x1xi1> to vector<15x1xi32>
    %295 = arith.sitofp %294 : vector<15x1xi32> to vector<15x1xf32>
    %c0_188 = arith.constant 0 : index
    %c3 = arith.constant 3 : index
    %296 = vector.load %arg8[%c0_188, %c3] : memref<15x4xf32, #tpu.memory_space<vmem>>, vector<15x1xf32>
    tpu.vector_store %arg8[%c0_188, %c3], %295 {strides = array<i32>} : memref<15x4xf32, #tpu.memory_space<vmem>>, vector<15x1xf32>,
    %c0_189 = arith.constant 0 : index
    %c0_190 = arith.constant 0 : index
    %297 = vector.load %arg9[%c0_189, %c0_190] : memref<1x1xf32, #tpu.memory_space<vmem>>, vector<1x1xf32>
    tpu.vector_store %arg9[%c0_189, %c0_190], %241 {strides = array<i32>} : memref<1x1xf32, #tpu.memory_space<vmem>>, vector<1x1xf32>,
    return
  }
}

</mosaic_0001>

<llo_original>
// kernel: run.1
$region0: #{run.1}
  #allocation0 [shape = 'u32[]', space=smem, size = 0x4, offset = 0x4, fixed_abs, tag = 'smem constant byte address 0x4 - core index']
  #allocation1 [shape = 'u32[144,128]{1,0:T(1,128)}', space=vmem, size = 0x12000, scoped, tag = 'internal scratch']
  #allocation2 [shape = 'f32[256,128]{1,0:T(8,128)}', space=vmem, size = 0x20000, scoped, tag = 'scratch operand']
  #allocation3 [shape = 'f32[1,128]{1,0:T(1,128)}', space=vmem, size = 0x200, scoped, tag = 'scratch operand']
  #allocation4 [shape = 'f32[128,128]{1,0:T(8,128)}', space=vmem, size = 0x10000, scoped, tag = 'scratch operand']
  #allocation5 [shape = 'f32[1,128]{1,0:T(1,128)}', space=vmem, size = 0x200, scoped, tag = 'scratch operand']
  %s0 = inlined_call_operand.hbm [shape: f32[5,256], index: 0, kind: input, shape index: {}]
  %s1 = inlined_call_operand.vmem [shape: s32[5,1], index: 1, kind: input, shape index: {}]
  %s2 = inlined_call_operand.vmem [shape: f32[15,256], index: 2, kind: input, shape index: {}]
  %s3 = inlined_call_operand.vmem [shape: s32[15,1], index: 3, kind: input, shape index: {}]
  %s4 = inlined_call_operand.hbm [shape: f32[256,128], index: 4, kind: input, shape index: {}]
  %s5 = inlined_call_operand.vmem [shape: f32[1,128], index: 5, kind: input, shape index: {}]
  %s6 = inlined_call_operand.hbm [shape: f32[128,128], index: 6, kind: input, shape index: {}]
  %s7 = inlined_call_operand.vmem [shape: f32[1,128], index: 7, kind: input, shape index: {}]
  %s8 = inlined_call_operand.vmem [shape: f32[15,4], index: 8, kind: output, shape index: {0}]
  %s9 = inlined_call_operand.hbm [shape: f32[1,1], index: 9, kind: output, shape index: {1}]
  %10 = xla_tuple %s8, %s9
  %s11 = sld [smem:[#allocation0]]
  $region62: #{run.1} parent=0
    _
  %s13 = ssub.s32 1, %s11
  %s14 = scalar_select 0, %s13, %s11
  $region1: #{run.1} parent=0
    #allocation6 [shape = 'u8[8192]{0}', space=vmem, size = 0x2000, scoped, tag = 'input window, operand 0, single buffered']
    #allocation7 [shape = 's32[1]{0}', space=sflag, size = 0x4, scoped, tag = 'scoped memory for run.1']
    #allocation8 [shape = 's32[1]{0}', space=sflag, size = 0x4, scoped, tag = 'scoped memory for run.1']
    #allocation9 [shape = 'u8[131072]{0}', space=vmem, size = 0x20000, scoped, tag = 'input window, operand 4, single buffered']
    #allocation10 [shape = 's32[1]{0}', space=sflag, size = 0x4, scoped, tag = 'scoped memory for run.1']
    #allocation11 [shape = 'u8[65536]{0}', space=vmem, size = 0x10000, scoped, tag = 'input window, operand 6, single buffered']
    #allocation12 [shape = 'u8[512]{0}', space=vmem, size = 0x400, scoped, tag = 'output window, operand 1, single buffered']
    %15 = vsyncpa [#allocation7], 0
    %16 = vsyncpa [#allocation10], 0
    %17 = vsyncpa [#allocation8], 0
    // Predicated region
    $region2: #{run.1} parent=1 // pred_check
      _
    $region3: #{run.1} parent=1 // pred_check_branch
      %19 = sbr.rel (0) target = $region5
    $region4: #{run.1} parent=1 // pred_region
      %s21 = ssub.s32 256, 256
      %22 = vsyncadd [#allocation7], %s21
      %s24 = sshll.u32 [#allocation6], 4
      %s25 = int_to_ptr.vmem [resolvable:$true] %s24
      %27 = dma.hbm_to_vmem [thread:$0]  %s0, 256, %s25, [#allocation7]
    $region5: #{run.1} parent=1 // pred_fallthru
      _
    // Predicated region
    $region6: #{run.1} parent=1 // pred_check
      _
    $region7: #{run.1} parent=1 // pred_check_branch
      %29 = sbr.rel (0) target = $region9
    $region8: #{run.1} parent=1 // pred_region
      _
    $region9: #{run.1} parent=1 // pred_fallthru
      _
    // Predicated region
    $region10: #{run.1} parent=1 // pred_check
      _
    $region11: #{run.1} parent=1 // pred_check_branch
      %31 = sbr.rel (0) target = $region13
    $region12: #{run.1} parent=1 // pred_region
      _
    $region13: #{run.1} parent=1 // pred_fallthru
      _
    // Predicated region
    $region14: #{run.1} parent=1 // pred_check
      _
    $region15: #{run.1} parent=1 // pred_check_branch
      %33 = sbr.rel (0) target = $region17
    $region16: #{run.1} parent=1 // pred_region
      _
    $region17: #{run.1} parent=1 // pred_fallthru
      _
    // Predicated region
    $region18: #{run.1} parent=1 // pred_check
      _
    $region19: #{run.1} parent=1 // pred_check_branch
      %35 = sbr.rel (0) target = $region21
    $region20: #{run.1} parent=1 // pred_region
      %s37 = ssub.s32 4096, 4096
      %38 = vsyncadd [#allocation10], %s37
      %s39 = sshll.u32 [#allocation9], 4
      %s40 = int_to_ptr.vmem [resolvable:$true] %s39
      %45 = dma.hbm_to_vmem [thread:$0]  %s4, 4096, %s40, [#allocation10], 128, 128, 8
    $region21: #{run.1} parent=1 // pred_fallthru
      _
    // Predicated region
    $region22: #{run.1} parent=1 // pred_check
      _
    $region23: #{run.1} parent=1 // pred_check_branch
      %47 = sbr.rel (0) target = $region25
    $region24: #{run.1} parent=1 // pred_region
      _
    $region25: #{run.1} parent=1 // pred_fallthru
      _
    // Predicated region
    $region26: #{run.1} parent=1 // pred_check
      _
    $region27: #{run.1} parent=1 // pred_check_branch
      %49 = sbr.rel (0) target = $region29
    $region28: #{run.1} parent=1 // pred_region
      %s51 = ssub.s32 2048, 2048
      %52 = vsyncadd [#allocation10], %s51
      %s53 = sshll.u32 [#allocation11], 4
      %s54 = int_to_ptr.vmem [resolvable:$true] %s53
      %59 = dma.hbm_to_vmem [thread:$0]  %s6, 2048, %s54, [#allocation10], 128, 128, 8
    $region29: #{run.1} parent=1 // pred_fallthru
      _
    // Predicated region
    $region30: #{run.1} parent=1 // pred_check
      _
    $region31: #{run.1} parent=1 // pred_check_branch
      %61 = sbr.rel (0) target = $region33
    $region32: #{run.1} parent=1 // pred_region
      _
    $region33: #{run.1} parent=1 // pred_fallthru
      _
    // Predicated region
    $region34: #{run.1} parent=1 // pred_check
      _
    $region35: #{run.1} parent=1 // pred_check_branch
      %63 = sbr.rel (0) target = $region37
    $region36: #{run.1} parent=1 // pred_region
      %64 = dma.done [#allocation7], 256
    $region37: #{run.1} parent=1 // pred_fallthru
      _
    // Predicated region
    $region38: #{run.1} parent=1 // pred_check
      _
    $region39: #{run.1} parent=1 // pred_check_branch
      %66 = sbr.rel (0) target = $region41
    $region40: #{run.1} parent=1 // pred_region
      %67 = dma.done [#allocation10], 4096
    $region41: #{run.1} parent=1 // pred_fallthru
      _
    // Predicated region
    $region42: #{run.1} parent=1 // pred_check
      _
    $region43: #{run.1} parent=1 // pred_check_branch
      %69 = sbr.rel (0) target = $region45
    $region44: #{run.1} parent=1 // pred_region
      %70 = dma.done [#allocation10], 2048
    $region45: #{run.1} parent=1 // pred_fallthru
      _
    %v71 = vld [vmem:[#allocation6] sm:$0x1f]
    %v72 = vld [vmem:[#allocation6 + $0x8] sm:$0x1f]
    %v73 = vld [vmem:[%s2] sm:$0xff]
    %v74 = vld [vmem:[%s2 + $0x8] sm:$0xff]
    %v75 = vld [vmem:[%s2 + $0x10] sm:$0x7f]
    %v76 = vld [vmem:[%s2 + $0x18] sm:$0x7f]
    %v77 = vld [vmem:[%s1] sm:$0x1f]
    %v78 = vld [vmem:[%s3] sm:$0xff]
    %v79 = vld [vmem:[%s3 + $0x8] sm:$0x7f]
    %v80 = vlaneseq
    %v81 = vand.u32 %v80, 127
    %vm82 = vcmp.lt.s32.totalorder %v81, 5
    %v83 = vsel %vm82, 0.0, -1e+09
    %84 = vset.pattern.permute.xlu0 0
    %85 = vperm.xlu0 %84, %v77
    %v86 = vpop.permute.xlu0 %85
    %vm87 = vcmp.eq.s32.totalorder %v81, %v86
    %v88 = vsel %vm87, 1, 0
    %v89 = vcvt.s32.f32 %v88
    %v90 = vld [vmem:[#allocation9] sm:$0xff]
    %v91 = vld [vmem:[#allocation9 + $0x8] sm:$0xff]
    %v92 = vld [vmem:[#allocation9 + $0x10] sm:$0xff]
    %v93 = vld [vmem:[#allocation9 + $0x18] sm:$0xff]
    %v94 = vld [vmem:[#allocation9 + $0x20] sm:$0xff]
    %v95 = vld [vmem:[#allocation9 + $0x28] sm:$0xff]
    %v96 = vld [vmem:[#allocation9 + $0x30] sm:$0xff]
    %v97 = vld [vmem:[#allocation9 + $0x38] sm:$0xff]
    %v98 = vld [vmem:[#allocation9 + $0x40] sm:$0xff]
    %v99 = vld [vmem:[#allocation9 + $0x48] sm:$0xff]
    %v100 = vld [vmem:[#allocation9 + $0x50] sm:$0xff]
    %v101 = vld [vmem:[#allocation9 + $0x58] sm:$0xff]
    %v102 = vld [vmem:[#allocation9 + $0x60] sm:$0xff]
    %v103 = vld [vmem:[#allocation9 + $0x68] sm:$0xff]
    %v104 = vld [vmem:[#allocation9 + $0x70] sm:$0xff]
    %v105 = vld [vmem:[#allocation9 + $0x78] sm:$0xff]
    %v106 = vld [vmem:[#allocation9 + $0x80] sm:$0xff]
    %v107 = vld [vmem:[#allocation9 + $0x88] sm:$0xff]
    %v108 = vld [vmem:[#allocation9 + $0x90] sm:$0xff]
    %v109 = vld [vmem:[#allocation9 + $0x98] sm:$0xff]
    %v110 = vld [vmem:[#allocation9 + $0xa0] sm:$0xff]
    %v111 = vld [vmem:[#allocation9 + $0xa8] sm:$0xff]
    %v112 = vld [vmem:[#allocation9 + $0xb0] sm:$0xff]
    %v113 = vld [vmem:[#allocation9 + $0xb8] sm:$0xff]
    %v114 = vld [vmem:[#allocation9 + $0xc0] sm:$0xff]
    %v115 = vld [vmem:[#allocation9 + $0xc8] sm:$0xff]
    %v116 = vld [vmem:[#allocation9 + $0xd0] sm:$0xff]
    %v117 = vld [vmem:[#allocation9 + $0xd8] sm:$0xff]
    %v118 = vld [vmem:[#allocation9 + $0xe0] sm:$0xff]
    %v119 = vld [vmem:[#allocation9 + $0xe8] sm:$0xff]
    %v120 = vld [vmem:[#allocation9 + $0xf0] sm:$0xff]
    %v121 = vld [vmem:[#allocation9 + $0xf8] sm:$0xff]
    %122 = vst [vmem:[#allocation2] sm:$0xff] %v90
    %123 = vst [vmem:[#allocation2 + $0x8] sm:$0xff] %v91
    %124 = vst [vmem:[#allocation2 + $0x10] sm:$0xff] %v92
    %125 = vst [vmem:[#allocation2 + $0x18] sm:$0xff] %v93
    %126 = vst [vmem:[#allocation2 + $0x20] sm:$0xff] %v94
    %127 = vst [vmem:[#allocation2 + $0x28] sm:$0xff] %v95
    %128 = vst [vmem:[#allocation2 + $0x30] sm:$0xff] %v96
    %129 = vst [vmem:[#allocation2 + $0x38] sm:$0xff] %v97
    %130 = vst [vmem:[#allocation2 + $0x40] sm:$0xff] %v98
    %131 = vst [vmem:[#allocation2 + $0x48] sm:$0xff] %v99
    %132 = vst [vmem:[#allocation2 + $0x50] sm:$0xff] %v100
    %133 = vst [vmem:[#allocation2 + $0x58] sm:$0xff] %v101
    %134 = vst [vmem:[#allocation2 + $0x60] sm:$0xff] %v102
    %135 = vst [vmem:[#allocation2 + $0x68] sm:$0xff] %v103
    %136 = vst [vmem:[#allocation2 + $0x70] sm:$0xff] %v104
    %137 = vst [vmem:[#allocation2 + $0x78] sm:$0xff] %v105
    %138 = vst [vmem:[#allocation2 + $0x80] sm:$0xff] %v106
    %139 = vst [vmem:[#allocation2 + $0x88] sm:$0xff] %v107
    %140 = vst [vmem:[#allocation2 + $0x90] sm:$0xff] %v108
    %141 = vst [vmem:[#allocation2 + $0x98] sm:$0xff] %v109
    %142 = vst [vmem:[#allocation2 + $0xa0] sm:$0xff] %v110
    %143 = vst [vmem:[#allocation2 + $0xa8] sm:$0xff] %v111
    %144 = vst [vmem:[#allocation2 + $0xb0] sm:$0xff] %v112
    %145 = vst [vmem:[#allocation2 + $0xb8] sm:$0xff] %v113
    %146 = vst [vmem:[#allocation2 + $0xc0] sm:$0xff] %v114
    %147 = vst [vmem:[#allocation2 + $0xc8] sm:$0xff] %v115
    %148 = vst [vmem:[#allocation2 + $0xd0] sm:$0xff] %v116
    %149 = vst [vmem:[#allocation2 + $0xd8] sm:$0xff] %v117
    %150 = vst [vmem:[#allocation2 + $0xe0] sm:$0xff] %v118
    %151 = vst [vmem:[#allocation2 + $0xe8] sm:$0xff] %v119
    %152 = vst [vmem:[#allocation2 + $0xf0] sm:$0xff] %v120
    %153 = vst [vmem:[#allocation2 + $0xf8] sm:$0xff] %v121
    %v154 = vld [vmem:[%s5] sm:$0x1]
    %155 = vst [vmem:[#allocation3] sm:$0x1] %v154
    %v156 = vld [vmem:[#allocation11] sm:$0xff]
    %v157 = vld [vmem:[#allocation11 + $0x8] sm:$0xff]
    %v158 = vld [vmem:[#allocation11 + $0x10] sm:$0xff]
    %v159 = vld [vmem:[#allocation11 + $0x18] sm:$0xff]
    %v160 = vld [vmem:[#allocation11 + $0x20] sm:$0xff]
    %v161 = vld [vmem:[#allocation11 + $0x28] sm:$0xff]
    %v162 = vld [vmem:[#allocation11 + $0x30] sm:$0xff]
    %v163 = vld [vmem:[#allocation11 + $0x38] sm:$0xff]
    %v164 = vld [vmem:[#allocation11 + $0x40] sm:$0xff]
    %v165 = vld [vmem:[#allocation11 + $0x48] sm:$0xff]
    %v166 = vld [vmem:[#allocation11 + $0x50] sm:$0xff]
    %v167 = vld [vmem:[#allocation11 + $0x58] sm:$0xff]
    %v168 = vld [vmem:[#allocation11 + $0x60] sm:$0xff]
    %v169 = vld [vmem:[#allocation11 + $0x68] sm:$0xff]
    %v170 = vld [vmem:[#allocation11 + $0x70] sm:$0xff]
    %v171 = vld [vmem:[#allocation11 + $0x78] sm:$0xff]
    %172 = vst [vmem:[#allocation4] sm:$0xff] %v156
    %173 = vst [vmem:[#allocation4 + $0x8] sm:$0xff] %v157
    %174 = vst [vmem:[#allocation4 + $0x10] sm:$0xff] %v158
    %175 = vst [vmem:[#allocation4 + $0x18] sm:$0xff] %v159
    %176 = vst [vmem:[#allocation4 + $0x20] sm:$0xff] %v160
    %177 = vst [vmem:[#allocation4 + $0x28] sm:$0xff] %v161
    %178 = vst [vmem:[#allocation4 + $0x30] sm:$0xff] %v162
    %179 = vst [vmem:[#allocation4 + $0x38] sm:$0xff] %v163
    %180 = vst [vmem:[#allocation4 + $0x40] sm:$0xff] %v164
    %181 = vst [vmem:[#allocation4 + $0x48] sm:$0xff] %v165
    %182 = vst [vmem:[#allocation4 + $0x50] sm:$0xff] %v166
    %183 = vst [vmem:[#allocation4 + $0x58] sm:$0xff] %v167
    %184 = vst [vmem:[#allocation4 + $0x60] sm:$0xff] %v168
    %185 = vst [vmem:[#allocation4 + $0x68] sm:$0xff] %v169
    %186 = vst [vmem:[#allocation4 + $0x70] sm:$0xff] %v170
    %187 = vst [vmem:[#allocation4 + $0x78] sm:$0xff] %v171
    %v188 = vld [vmem:[%s7] sm:$0x1]
    %189 = vst [vmem:[#allocation5] sm:$0x1] %v188
    %v190 = vld [vmem:[#allocation2] sm:$0xff]
    %v191 = vld [vmem:[#allocation2 + $0x8] sm:$0xff]
    %v192 = vld [vmem:[#allocation2 + $0x10] sm:$0xff]
    %v193 = vld [vmem:[#allocation2 + $0x18] sm:$0xff]
    %v194 = vld [vmem:[#allocation2 + $0x20] sm:$0xff]
    %v195 = vld [vmem:[#allocation2 + $0x28] sm:$0xff]
    %v196 = vld [vmem:[#allocation2 + $0x30] sm:$0xff]
    %v197 = vld [vmem:[#allocation2 + $0x38] sm:$0xff]
    %v198 = vld [vmem:[#allocation2 + $0x40] sm:$0xff]
    %v199 = vld [vmem:[#allocation2 + $0x48] sm:$0xff]
    %v200 = vld [vmem:[#allocation2 + $0x50] sm:$0xff]
    %v201 = vld [vmem:[#allocation2 + $0x58] sm:$0xff]
    %v202 = vld [vmem:[#allocation2 + $0x60] sm:$0xff]
    %v203 = vld [vmem:[#allocation2 + $0x68] sm:$0xff]
    %v204 = vld [vmem:[#allocation2 + $0x70] sm:$0xff]
    %v205 = vld [vmem:[#allocation2 + $0x78] sm:$0xff]
    %v206 = vld [vmem:[#allocation2 + $0x80] sm:$0xff]
    %v207 = vld [vmem:[#allocation2 + $0x88] sm:$0xff]
    %v208 = vld [vmem:[#allocation2 + $0x90] sm:$0xff]
    %v209 = vld [vmem:[#allocation2 + $0x98] sm:$0xff]
    %v210 = vld [vmem:[#allocation2 + $0xa0] sm:$0xff]
    %v211 = vld [vmem:[#allocation2 + $0xa8] sm:$0xff]
    %v212 = vld [vmem:[#allocation2 + $0xb0] sm:$0xff]
    %v213 = vld [vmem:[#allocation2 + $0xb8] sm:$0xff]
    %v214 = vld [vmem:[#allocation2 + $0xc0] sm:$0xff]
    %v215 = vld [vmem:[#allocation2 + $0xc8] sm:$0xff]
    %v216 = vld [vmem:[#allocation2 + $0xd0] sm:$0xff]
    %v217 = vld [vmem:[#allocation2 + $0xd8] sm:$0xff]
    %v218 = vld [vmem:[#allocation2 + $0xe0] sm:$0xff]
    %v219 = vld [vmem:[#allocation2 + $0xe8] sm:$0xff]
    %v220 = vld [vmem:[#allocation2 + $0xf0] sm:$0xff]
    %v221 = vld [vmem:[#allocation2 + $0xf8] sm:$0xff]
    %v222 = vld [vmem:[#allocation3] sm:$0x1]
    %v223 = vld [vmem:[#allocation4] sm:$0xff]
    %v224 = vld [vmem:[#allocation4 + $0x8] sm:$0xff]
    %v225 = vld [vmem:[#allocation4 + $0x10] sm:$0xff]
    %v226 = vld [vmem:[#allocation4 + $0x18] sm:$0xff]
    %v227 = vld [vmem:[#allocation4 + $0x20] sm:$0xff]
    %v228 = vld [vmem:[#allocation4 + $0x28] sm:$0xff]
    %v229 = vld [vmem:[#allocation4 + $0x30] sm:$0xff]
    %v230 = vld [vmem:[#allocation4 + $0x38] sm:$0xff]
    %v231 = vld [vmem:[#allocation4 + $0x40] sm:$0xff]
    %v232 = vld [vmem:[#allocation4 + $0x48] sm:$0xff]
    %v233 = vld [vmem:[#allocation4 + $0x50] sm:$0xff]
    %v234 = vld [vmem:[#allocation4 + $0x58] sm:$0xff]
    %v235 = vld [vmem:[#allocation4 + $0x60] sm:$0xff]
    %v236 = vld [vmem:[#allocation4 + $0x68] sm:$0xff]
    %v237 = vld [vmem:[#allocation4 + $0x70] sm:$0xff]
    %v238 = vld [vmem:[#allocation4 + $0x78] sm:$0xff]
    %v239 = vld [vmem:[#allocation5] sm:$0x1]
    %v241 = vlaneseq
    %v242 = vshrl.u32 %v241, 7
    %v243 = vsub.s32 0, %v242
    %v244 = vrot.slane %v222, %v243
    %246 = vmatprep.subr.mxu0 0.0
    %247 = vmatpush1.msra.mxu0 %v190
    %248 = vmatprep.subr.mxu0 0.0
    %249 = vmatpush1.msra.mxu0 %v191
    %250 = vmatprep.subr.mxu0 0.0
    %251 = vmatpush1.msra.mxu0 %v192
    %252 = vmatprep.subr.mxu0 0.0
    %253 = vmatpush1.msra.mxu0 %v193
    %254 = vmatprep.subr.mxu0 0.0
    %255 = vmatpush1.msra.mxu0 %v194
    %256 = vmatprep.subr.mxu0 0.0
    %257 = vmatpush1.msra.mxu0 %v195
    %258 = vmatprep.subr.mxu0 0.0
    %259 = vmatpush1.msra.mxu0 %v196
    %260 = vmatprep.subr.mxu0 0.0
    %261 = vmatpush1.msra.mxu0 %v197
    %262 = vmatprep.subr.mxu0 0.0
    %263 = vmatpush1.msra.mxu0 %v198
    %264 = vmatprep.subr.mxu0 0.0
    %265 = vmatpush1.msra.mxu0 %v199
    %266 = vmatprep.subr.mxu0 0.0
    %267 = vmatpush1.msra.mxu0 %v200
    %268 = vmatprep.subr.mxu0 0.0
    %269 = vmatpush1.msra.mxu0 %v201
    %270 = vmatprep.subr.mxu0 0.0
    %271 = vmatpush1.msra.mxu0 %v202
    %272 = vmatprep.subr.mxu0 0.0
    %273 = vmatpush1.msra.mxu0 %v203
    %274 = vmatprep.subr.mxu0 0.0
    %275 = vmatpush1.msra.mxu0 %v204
    %276 = vmatprep.subr.mxu0 0.0
    %277 = vmatpush1.msra.mxu0 %v205
    %278 = vmatprep.subr.mxu0 0.0
    %279 = vmatpush1.msra.mxu0 %v206
    %280 = vmatprep.subr.mxu0 0.0
    %281 = vmatpush1.msra.mxu0 %v207
    %282 = vmatprep.subr.mxu0 0.0
    %283 = vmatpush1.msra.mxu0 %v208
    %284 = vmatprep.subr.mxu0 0.0
    %285 = vmatpush1.msra.mxu0 %v209
    %286 = vmatprep.subr.mxu0 0.0
    %287 = vmatpush1.msra.mxu0 %v210
    %288 = vmatprep.subr.mxu0 0.0
    %289 = vmatpush1.msra.mxu0 %v211
    %290 = vmatprep.subr.mxu0 0.0
    %291 = vmatpush1.msra.mxu0 %v212
    %292 = vmatprep.subr.mxu0 0.0
    %293 = vmatpush1.msra.mxu0 %v213
    %294 = vmatprep.subr.mxu0 0.0
    %295 = vmatpush1.msra.mxu0 %v214
    %296 = vmatprep.subr.mxu0 0.0
    %297 = vmatpush1.msra.mxu0 %v215
    %298 = vmatprep.subr.mxu0 0.0
    %299 = vmatpush1.msra.mxu0 %v216
    %300 = vmatprep.subr.mxu0 0.0
    %301 = vmatpush1.msra.mxu0 %v217
    %302 = vmatprep.subr.mxu0 0.0
    %303 = vmatpush1.msra.mxu0 %v218
    %304 = vmatprep.subr.mxu0 0.0
    %305 = vmatpush1.msra.mxu0 %v219
    %306 = vmatprep.subr.mxu0 0.0
    %307 = vmatpush1.msra.mxu0 %v220
    %308 = vmatprep.subr.mxu0 0.0
    %309 = vmatpush1.msra.mxu0 %v221
    %310 = vmatprep.mubr.f32.mxu0 %v74
    %311 = vmatmul.mubr.f32.gmra.mrb[0].mxu0 %v73
    %v312 = vpop.f32.mrb[0].mxu0
    %v313 = vadd.f32 %v244, %v312
    %v314 = vpop.f32.mrb[0].mxu0
    %315 = vmatprep.mubr.f32.mxu0 %v76
    %316 = vmatmul.mubr.f32.gmra.mrb[0].mxu0 %v75
    %v317 = vpop.f32.mrb[0].mxu0
    %v318 = vadd.f32 %v244, %v317
    %v319 = vpop.f32.mrb[0].mxu0
    %320 = vdwg.mxu0
    %v321 = vmax.f32 %v313, 0.0
    %v322 = vmax.f32 %v318, 0.0
    %v324 = vlaneseq
    %v325 = vshrl.u32 %v324, 7
    %v326 = vsub.s32 0, %v325
    %v327 = vrot.slane %v239, %v326
    %329 = vmatprep.subr.mxu0 0.0
    %330 = vmatpush1.msra.mxu0 %v223
    %331 = vmatprep.subr.mxu0 0.0
    %332 = vmatpush1.msra.mxu0 %v224
    %333 = vmatprep.subr.mxu0 0.0
    %334 = vmatpush1.msra.mxu0 %v225
    %335 = vmatprep.subr.mxu0 0.0
    %336 = vmatpush1.msra.mxu0 %v226
    %337 = vmatprep.subr.mxu0 0.0
    %338 = vmatpush1.msra.mxu0 %v227
    %339 = vmatprep.subr.mxu0 0.0
    %340 = vmatpush1.msra.mxu0 %v228
    %341 = vmatprep.subr.mxu0 0.0
    %342 = vmatpush1.msra.mxu0 %v229
    %343 = vmatprep.subr.mxu0 0.0
    %344 = vmatpush1.msra.mxu0 %v230
    %345 = vmatprep.subr.mxu0 0.0
    %346 = vmatpush1.msra.mxu0 %v231
    %347 = vmatprep.subr.mxu0 0.0
    %348 = vmatpush1.msra.mxu0 %v232
    %349 = vmatprep.subr.mxu0 0.0
    %350 = vmatpush1.msra.mxu0 %v233
    %351 = vmatprep.subr.mxu0 0.0
    %352 = vmatpush1.msra.mxu0 %v234
    %353 = vmatprep.subr.mxu0 0.0
    %354 = vmatpush1.msra.mxu0 %v235
    %355 = vmatprep.subr.mxu0 0.0
    %356 = vmatpush1.msra.mxu0 %v236
    %357 = vmatprep.subr.mxu0 0.0
    %358 = vmatpush1.msra.mxu0 %v237
    %359 = vmatprep.subr.mxu0 0.0
    %360 = vmatpush1.msra.mxu0 %v238
    %361 = vmatprep.subr.mxu0 0.0
    %362 = vmatpush1.msra.mxu0 0.0
    %363 = vmatprep.subr.mxu0 0.0
    %364 = vmatpush1.msra.mxu0 0.0
    %365 = vmatprep.subr.mxu0 0.0
    %366 = vmatpush1.msra.mxu0 0.0
    %367 = vmatprep.subr.mxu0 0.0
    %368 = vmatpush1.msra.mxu0 0.0
    %369 = vmatprep.subr.mxu0 0.0
    %370 = vmatpush1.msra.mxu0 0.0
    %371 = vmatprep.subr.mxu0 0.0
    %372 = vmatpush1.msra.mxu0 0.0
    %373 = vmatprep.subr.mxu0 0.0
    %374 = vmatpush1.msra.mxu0 0.0
    %375 = vmatprep.subr.mxu0 0.0
    %376 = vmatpush1.msra.mxu0 0.0
    %377 = vmatprep.subr.mxu0 0.0
    %378 = vmatpush1.msra.mxu0 0.0
    %379 = vmatprep.subr.mxu0 0.0
    %380 = vmatpush1.msra.mxu0 0.0
    %381 = vmatprep.subr.mxu0 0.0
    %382 = vmatpush1.msra.mxu0 0.0
    %383 = vmatprep.subr.mxu0 0.0
    %384 = vmatpush1.msra.mxu0 0.0
    %385 = vmatprep.subr.mxu0 0.0
    %386 = vmatpush1.msra.mxu0 0.0
    %387 = vmatprep.subr.mxu0 0.0
    %388 = vmatpush1.msra.mxu0 0.0
    %389 = vmatprep.subr.mxu0 0.0
    %390 = vmatpush1.msra.mxu0 0.0
    %391 = vmatprep.subr.mxu0 0.0
    %392 = vmatpush1.msra.mxu0 0.0
    %393 = vmatprep.mubr.f32.mxu0 0.0
    %394 = vmatmul.mubr.f32.gmra.mrb[0].mxu0 %v321
    %v395 = vpop.f32.mrb[0].mxu0
    %v396 = vadd.f32 %v327, %v395
    %v397 = vpop.f32.mrb[0].mxu0
    %398 = vmatprep.mubr.f32.mxu0 0.0
    %399 = vmatmul.mubr.f32.gmra.mrb[0].mxu0 %v322
    %v400 = vpop.f32.mrb[0].mxu0
    %v401 = vadd.f32 %v327, %v400
    %v402 = vpop.f32.mrb[0].mxu0
    %403 = vdwg.mxu0
    %v404 = vadd.f32 %v396, %v83
    %v405 = vadd.f32 %v401, %v83
    %406 = vmax.xlane.f32.xlu0 %v404
    %v407 = vpop.xlane.xlu0 %406
    %vm408 = vcmask 1046528
    %v409 = vsel %vm408, %v405, -inf
    %410 = vmax.xlane.f32.xlu0 %v409
    %v411 = vpop.xlane.xlu0 %410
    %vm412 = vcmp.ge.f32.partialorder %v404, %v407
    %vm413 = vcmp.ge.f32.partialorder %v405, %v411
    %v414 = vsel %vm412, %v81, 128
    %v415 = vsel %vm413, %v81, 128
    %v416 = vand.u32 %v414, 65535
    %v417 = vshra.s32 %v414, 16
    %v418 = vcvt.s32.f32 %v416
    %v419 = vcvt.s32.f32 %v417
    %420 = vmin.xlane.f32.xlu0 %v419
    %v421 = vpop.xlane.xlu0 %420
    %vm422 = vcmp.eq.f32.partialorder %v419, %v421
    %v423 = vsel %vm422, %v418, inf
    %424 = vmin.xlane.f32.xlu0 %v423
    %v425 = vpop.xlane.xlu0 %424
    %v426 = vcvt.f32.s32 %v425
    %v427 = vcvt.f32.s32 %v421
    %v428 = vshll.u32 %v427, 16
    %v429 = vadd.s32 %v428, %v426
    %v430 = vsel %vm408, %v415, 2147483647
    %v431 = vand.u32 %v430, 65535
    %v432 = vshra.s32 %v430, 16
    %v433 = vcvt.s32.f32 %v431
    %v434 = vcvt.s32.f32 %v432
    %435 = vmin.xlane.f32.xlu0 %v434
    %v436 = vpop.xlane.xlu0 %435
    %vm437 = vcmp.eq.f32.partialorder %v434, %v436
    %v438 = vsel %vm437, %v433, inf
    %439 = vmin.xlane.f32.xlu0 %v438
    %v440 = vpop.xlane.xlu0 %439
    %v441 = vcvt.f32.s32 %v440
    %v442 = vcvt.f32.s32 %v436
    %v443 = vshll.u32 %v442, 16
    %v444 = vadd.s32 %v443, %v441
    %vm445 = vcmp.eq.s32.totalorder %v429, %v78
    %vm446 = vcmp.eq.s32.totalorder %v444, %v79
    %v447 = vsel %vm445, 1, 0
    %v448 = vsel %vm446, 1, 0
    %v449 = vcvt.s32.f32 %v447
    %v450 = vcvt.s32.f32 %v448
    %vm451 = vcmask 7168
    %452 = vst.msk [vmem:[%s8] sm:$0xff] %vm451, %v449
    %vm453 = vcmask 6144
    %454 = vst.msk [vmem:[%s8 + $0x8] sm:$0x7f] %vm453, %v450
    %v455 = vld [vmem:[#allocation2] sm:$0xff]
    %v456 = vld [vmem:[#allocation2 + $0x8] sm:$0xff]
    %v457 = vld [vmem:[#allocation2 + $0x10] sm:$0xff]
    %v458 = vld [vmem:[#allocation2 + $0x18] sm:$0xff]
    %v459 = vld [vmem:[#allocation2 + $0x20] sm:$0xff]
    %v460 = vld [vmem:[#allocation2 + $0x28] sm:$0xff]
    %v461 = vld [vmem:[#allocation2 + $0x30] sm:$0xff]
    %v462 = vld [vmem:[#allocation2 + $0x38] sm:$0xff]
    %v463 = vld [vmem:[#allocation2 + $0x40] sm:$0xff]
    %v464 = vld [vmem:[#allocation2 + $0x48] sm:$0xff]
    %v465 = vld [vmem:[#allocation2 + $0x50] sm:$0xff]
    %v466 = vld [vmem:[#allocation2 + $0x58] sm:$0xff]
    %v467 = vld [vmem:[#allocation2 + $0x60] sm:$0xff]
    %v468 = vld [vmem:[#allocation2 + $0x68] sm:$0xff]
    %v469 = vld [vmem:[#allocation2 + $0x70] sm:$0xff]
    %v470 = vld [vmem:[#allocation2 + $0x78] sm:$0xff]
    %v471 = vld [vmem:[#allocation2 + $0x80] sm:$0xff]
    %v472 = vld [vmem:[#allocation2 + $0x88] sm:$0xff]
    %v473 = vld [vmem:[#allocation2 + $0x90] sm:$0xff]
    %v474 = vld [vmem:[#allocation2 + $0x98] sm:$0xff]
    %v475 = vld [vmem:[#allocation2 + $0xa0] sm:$0xff]
    %v476 = vld [vmem:[#allocation2 + $0xa8] sm:$0xff]
    %v477 = vld [vmem:[#allocation2 + $0xb0] sm:$0xff]
    %v478 = vld [vmem:[#allocation2 + $0xb8] sm:$0xff]
    %v479 = vld [vmem:[#allocation2 + $0xc0] sm:$0xff]
    %v480 = vld [vmem:[#allocation2 + $0xc8] sm:$0xff]
    %v481 = vld [vmem:[#allocation2 + $0xd0] sm:$0xff]
    %v482 = vld [vmem:[#allocation2 + $0xd8] sm:$0xff]
    %v483 = vld [vmem:[#allocation2 + $0xe0] sm:$0xff]
    %v484 = vld [vmem:[#allocation2 + $0xe8] sm:$0xff]
    %v485 = vld [vmem:[#allocation2 + $0xf0] sm:$0xff]
    %v486 = vld [vmem:[#allocation2 + $0xf8] sm:$0xff]
    %v487 = vld [vmem:[#allocation3] sm:$0x1]
    %v488 = vld [vmem:[#allocation4] sm:$0xff]
    %v489 = vld [vmem:[#allocation4 + $0x8] sm:$0xff]
    %v490 = vld [vmem:[#allocation4 + $0x10] sm:$0xff]
    %v491 = vld [vmem:[#allocation4 + $0x18] sm:$0xff]
    %v492 = vld [vmem:[#allocation4 + $0x20] sm:$0xff]
    %v493 = vld [vmem:[#allocation4 + $0x28] sm:$0xff]
    %v494 = vld [vmem:[#allocation4 + $0x30] sm:$0xff]
    %v495 = vld [vmem:[#allocation4 + $0x38] sm:$0xff]
    %v496 = vld [vmem:[#allocation4 + $0x40] sm:$0xff]
    %v497 = vld [vmem:[#allocation4 + $0x48] sm:$0xff]
    %v498 = vld [vmem:[#allocation4 + $0x50] sm:$0xff]
    %v499 = vld [vmem:[#allocation4 + $0x58] sm:$0xff]
    %v500 = vld [vmem:[#allocation4 + $0x60] sm:$0xff]
    %v501 = vld [vmem:[#allocation4 + $0x68] sm:$0xff]
    %v502 = vld [vmem:[#allocation4 + $0x70] sm:$0xff]
    %v503 = vld [vmem:[#allocation4 + $0x78] sm:$0xff]
    %v504 = vld [vmem:[#allocation5] sm:$0x1]
    %v506 = vlaneseq
    %v507 = vshrl.u32 %v506, 7
    %v508 = vsub.s32 0, %v507
    %v509 = vrot.slane %v487, %v508
    %511 = vmatprep.subr.mxu0 0.0
    %512 = vmatpush1.msra.mxu0 %v455
    %513 = vmatprep.subr.mxu0 0.0
    %514 = vmatpush1.msra.mxu0 %v456
    %515 = vmatprep.subr.mxu0 0.0
    %516 = vmatpush1.msra.mxu0 %v457
    %517 = vmatprep.subr.mxu0 0.0
    %518 = vmatpush1.msra.mxu0 %v458
    %519 = vmatprep.subr.mxu0 0.0
    %520 = vmatpush1.msra.mxu0 %v459
    %521 = vmatprep.subr.mxu0 0.0
    %522 = vmatpush1.msra.mxu0 %v460
    %523 = vmatprep.subr.mxu0 0.0
    %524 = vmatpush1.msra.mxu0 %v461
    %525 = vmatprep.subr.mxu0 0.0
    %526 = vmatpush1.msra.mxu0 %v462
    %527 = vmatprep.subr.mxu0 0.0
    %528 = vmatpush1.msra.mxu0 %v463
    %529 = vmatprep.subr.mxu0 0.0
    %530 = vmatpush1.msra.mxu0 %v464
    %531 = vmatprep.subr.mxu0 0.0
    %532 = vmatpush1.msra.mxu0 %v465
    %533 = vmatprep.subr.mxu0 0.0
    %534 = vmatpush1.msra.mxu0 %v466
    %535 = vmatprep.subr.mxu0 0.0
    %536 = vmatpush1.msra.mxu0 %v467
    %537 = vmatprep.subr.mxu0 0.0
    %538 = vmatpush1.msra.mxu0 %v468
    %539 = vmatprep.subr.mxu0 0.0
    %540 = vmatpush1.msra.mxu0 %v469
    %541 = vmatprep.subr.mxu0 0.0
    %542 = vmatpush1.msra.mxu0 %v470
    %543 = vmatprep.subr.mxu0 0.0
    %544 = vmatpush1.msra.mxu0 %v471
    %545 = vmatprep.subr.mxu0 0.0
    %546 = vmatpush1.msra.mxu0 %v472
    %547 = vmatprep.subr.mxu0 0.0
    %548 = vmatpush1.msra.mxu0 %v473
    %549 = vmatprep.subr.mxu0 0.0
    %550 = vmatpush1.msra.mxu0 %v474
    %551 = vmatprep.subr.mxu0 0.0
    %552 = vmatpush1.msra.mxu0 %v475
    %553 = vmatprep.subr.mxu0 0.0
    %554 = vmatpush1.msra.mxu0 %v476
    %555 = vmatprep.subr.mxu0 0.0
    %556 = vmatpush1.msra.mxu0 %v477
    %557 = vmatprep.subr.mxu0 0.0
    %558 = vmatpush1.msra.mxu0 %v478
    %559 = vmatprep.subr.mxu0 0.0
    %560 = vmatpush1.msra.mxu0 %v479
    %561 = vmatprep.subr.mxu0 0.0
    %562 = vmatpush1.msra.mxu0 %v480
    %563 = vmatprep.subr.mxu0 0.0
    %564 = vmatpush1.msra.mxu0 %v481
    %565 = vmatprep.subr.mxu0 0.0
    %566 = vmatpush1.msra.mxu0 %v482
    %567 = vmatprep.subr.mxu0 0.0
    %568 = vmatpush1.msra.mxu0 %v483
    %569 = vmatprep.subr.mxu0 0.0
    %570 = vmatpush1.msra.mxu0 %v484
    %571 = vmatprep.subr.mxu0 0.0
    %572 = vmatpush1.msra.mxu0 %v485
    %573 = vmatprep.subr.mxu0 0.0
    %574 = vmatpush1.msra.mxu0 %v486
    %575 = vmatprep.mubr.f32.mxu0 %v72
    %576 = vmatmul.mubr.f32.gmra.mrb[0].mxu0 %v71
    %v577 = vpop.f32.mrb[0].mxu0
    %v578 = vadd.f32 %v509, %v577
    %v579 = vpop.f32.mrb[0].mxu0
    %580 = vdwg.mxu0
    %v581 = vmax.f32 %v578, 0.0
    %v583 = vlaneseq
    %v584 = vshrl.u32 %v583, 7
    %v585 = vsub.s32 0, %v584
    %v586 = vrot.slane %v504, %v585
    %588 = vmatprep.subr.mxu0 0.0
    %589 = vmatpush1.msra.mxu0 %v488
    %590 = vmatprep.subr.mxu0 0.0
    %591 = vmatpush1.msra.mxu0 %v489
    %592 = vmatprep.subr.mxu0 0.0
    %593 = vmatpush1.msra.mxu0 %v490
    %594 = vmatprep.subr.mxu0 0.0
    %595 = vmatpush1.msra.mxu0 %v491
    %596 = vmatprep.subr.mxu0 0.0
    %597 = vmatpush1.msra.mxu0 %v492
    %598 = vmatprep.subr.mxu0 0.0
    %599 = vmatpush1.msra.mxu0 %v493
    %600 = vmatprep.subr.mxu0 0.0
    %601 = vmatpush1.msra.mxu0 %v494
    %602 = vmatprep.subr.mxu0 0.0
    %603 = vmatpush1.msra.mxu0 %v495
    %604 = vmatprep.subr.mxu0 0.0
    %605 = vmatpush1.msra.mxu0 %v496
    %606 = vmatprep.subr.mxu0 0.0
    %607 = vmatpush1.msra.mxu0 %v497
    %608 = vmatprep.subr.mxu0 0.0
    %609 = vmatpush1.msra.mxu0 %v498
    %610 = vmatprep.subr.mxu0 0.0
    %611 = vmatpush1.msra.mxu0 %v499
    %612 = vmatprep.subr.mxu0 0.0
    %613 = vmatpush1.msra.mxu0 %v500
    %614 = vmatprep.subr.mxu0 0.0
    %615 = vmatpush1.msra.mxu0 %v501
    %616 = vmatprep.subr.mxu0 0.0
    %617 = vmatpush1.msra.mxu0 %v502
    %618 = vmatprep.subr.mxu0 0.0
    %619 = vmatpush1.msra.mxu0 %v503
    %620 = vmatprep.subr.mxu0 0.0
    %621 = vmatpush1.msra.mxu0 0.0
    %622 = vmatprep.subr.mxu0 0.0
    %623 = vmatpush1.msra.mxu0 0.0
    %624 = vmatprep.subr.mxu0 0.0
    %625 = vmatpush1.msra.mxu0 0.0
    %626 = vmatprep.subr.mxu0 0.0
    %627 = vmatpush1.msra.mxu0 0.0
    %628 = vmatprep.subr.mxu0 0.0
    %629 = vmatpush1.msra.mxu0 0.0
    %630 = vmatprep.subr.mxu0 0.0
    %631 = vmatpush1.msra.mxu0 0.0
    %632 = vmatprep.subr.mxu0 0.0
    %633 = vmatpush1.msra.mxu0 0.0
    %634 = vmatprep.subr.mxu0 0.0
    %635 = vmatpush1.msra.mxu0 0.0
    %636 = vmatprep.subr.mxu0 0.0
    %637 = vmatpush1.msra.mxu0 0.0
    %638 = vmatprep.subr.mxu0 0.0
    %639 = vmatpush1.msra.mxu0 0.0
    %640 = vmatprep.subr.mxu0 0.0
    %641 = vmatpush1.msra.mxu0 0.0
    %642 = vmatprep.subr.mxu0 0.0
    %643 = vmatpush1.msra.mxu0 0.0
    %644 = vmatprep.subr.mxu0 0.0
    %645 = vmatpush1.msra.mxu0 0.0
    %646 = vmatprep.subr.mxu0 0.0
    %647 = vmatpush1.msra.mxu0 0.0
    %648 = vmatprep.subr.mxu0 0.0
    %649 = vmatpush1.msra.mxu0 0.0
    %650 = vmatprep.subr.mxu0 0.0
    %651 = vmatpush1.msra.mxu0 0.0
    %652 = vmatprep.mubr.f32.mxu0 0.0
    %653 = vmatmul.mubr.f32.gmra.mrb[0].mxu0 %v581
    %v654 = vpop.f32.mrb[0].mxu0
    %v655 = vadd.f32 %v586, %v654
    %v656 = vpop.f32.mrb[0].mxu0
    %657 = vdwg.mxu0
    %v658 = vadd.f32 %v655, %v83
    %vm659 = vcmask 1044480
    %v660 = vsel %vm659, %v658, -inf
    %661 = vmax.xlane.f32.xlu0 %v660
    %v662 = vpop.xlane.xlu0 %661
    %v663 = vsub.f32 %v658, %v662
    %v664 = vmul.f32 %v663, 1.442695
    %v665 = vpow.pop %v664
    %v666 = vsel %vm659, %v665, 0.0
    %667 = vadd.xlane.f32.xlu0 %v666
    %v668 = vpop.xlane.xlu0 %667
    %v669 = vrcp.pop %v668
    %v670 = vmul.f32 %v665, %v669
    %v671 = vsub.f32 %v670, %v89
    %v672 = vmul.f32 %v671, 0.2
    %673 = vxpose.xlu0.b32.start [1/16] %v581, 128
    %674 = vxpose.xlu0.b32.cont [2/16] 0.0, 128
    %675 = vxpose.xlu0.b32.cont [3/16] 0.0, 128
    %676 = vxpose.xlu0.b32.cont [4/16] 0.0, 128
    %677 = vxpose.xlu0.b32.cont [5/16] 0.0, 128
    %678 = vxpose.xlu0.b32.cont [6/16] 0.0, 128
    %679 = vxpose.xlu0.b32.cont [7/16] 0.0, 128
    %680 = vxpose.xlu0.b32.cont [8/16] 0.0, 128
    %681 = vxpose.xlu0.b32.cont [9/16] 0.0, 128
    %682 = vxpose.xlu0.b32.cont [10/16] 0.0, 128
    %683 = vxpose.xlu0.b32.cont [11/16] 0.0, 128
    %684 = vxpose.xlu0.b32.cont [12/16] 0.0, 128
    %685 = vxpose.xlu0.b32.cont [13/16] 0.0, 128
    %686 = vxpose.xlu0.b32.cont [14/16] 0.0, 128
    %687 = vxpose.xlu0.b32.cont [15/16] 0.0, 128
    %688 = vxpose.xlu0.b32.end [16/16] 0.0, 128
    %v689 = vpop.trf.xlu0
    %v690 = vpop.trf.xlu0
    %v691 = vpop.trf.xlu0
    %v692 = vpop.trf.xlu0
    %v693 = vpop.trf.xlu0
    %v694 = vpop.trf.xlu0
    %v695 = vpop.trf.xlu0
    %v696 = vpop.trf.xlu0
    %v697 = vpop.trf.xlu0
    %v698 = vpop.trf.xlu0
    %v699 = vpop.trf.xlu0
    %v700 = vpop.trf.xlu0
    %v701 = vpop.trf.xlu0
    %v702 = vpop.trf.xlu0
    %v703 = vpop.trf.xlu0
    %v704 = vpop.trf.xlu0
    %vm705 = vcmask 39936
    %v707 = vsel %vm705, %v689, 0
    %v710 = vsel %vm705, %v690, 0
    %v713 = vsel %vm705, %v691, 0
    %v716 = vsel %vm705, %v692, 0
    %v719 = vsel %vm705, %v693, 0
    %v722 = vsel %vm705, %v694, 0
    %v725 = vsel %vm705, %v695, 0
    %v728 = vsel %vm705, %v696, 0
    %v731 = vsel %vm705, %v697, 0
    %v734 = vsel %vm705, %v698, 0
    %v737 = vsel %vm705, %v699, 0
    %v740 = vsel %vm705, %v700, 0
    %v743 = vsel %vm705, %v701, 0
    %v746 = vsel %vm705, %v702, 0
    %v749 = vsel %vm705, %v703, 0
    %v752 = vsel %vm705, %v704, 0
    %v755 = vsel %vm659, %v672, 0
    %757 = vmatprep.subr.mxu0 0.0
    %758 = vmatpush1.msra.mxu0 %v755
    %759 = vmatprep.subr.mxu0 0.0
    %760 = vmatpush1.msra.mxu0 0.0
    %761 = vmatprep.subr.mxu0 0.0
    %762 = vmatpush1.msra.mxu0 0.0
    %763 = vmatprep.subr.mxu0 0.0
    %764 = vmatpush1.msra.mxu0 0.0
    %765 = vmatprep.subr.mxu0 0.0
    %766 = vmatpush1.msra.mxu0 0.0
    %767 = vmatprep.subr.mxu0 0.0
    %768 = vmatpush1.msra.mxu0 0.0
    %769 = vmatprep.subr.mxu0 0.0
    %770 = vmatpush1.msra.mxu0 0.0
    %771 = vmatprep.subr.mxu0 0.0
    %772 = vmatpush1.msra.mxu0 0.0
    %773 = vmatprep.subr.mxu0 0.0
    %774 = vmatpush1.msra.mxu0 0.0
    %775 = vmatprep.subr.mxu0 0.0
    %776 = vmatpush1.msra.mxu0 0.0
    %777 = vmatprep.subr.mxu0 0.0
    %778 = vmatpush1.msra.mxu0 0.0
    %779 = vmatprep.subr.mxu0 0.0
    %780 = vmatpush1.msra.mxu0 0.0
    %781 = vmatprep.subr.mxu0 0.0
    %782 = vmatpush1.msra.mxu0 0.0
    %783 = vmatprep.subr.mxu0 0.0
    %784 = vmatpush1.msra.mxu0 0.0
    %785 = vmatprep.subr.mxu0 0.0
    %786 = vmatpush1.msra.mxu0 0.0
    %787 = vmatprep.subr.mxu0 0.0
    %788 = vmatpush1.msra.mxu0 0.0
    %789 = vmatprep.subr.mxu0 0.0
    %790 = vmatpush1.msra.mxu0 0.0
    %791 = vmatprep.subr.mxu0 0.0
    %792 = vmatpush1.msra.mxu0 0.0
    %793 = vmatprep.subr.mxu0 0.0
    %794 = vmatpush1.msra.mxu0 0.0
    %795 = vmatprep.subr.mxu0 0.0
    %796 = vmatpush1.msra.mxu0 0.0
    %797 = vmatprep.subr.mxu0 0.0
    %798 = vmatpush1.msra.mxu0 0.0
    %799 = vmatprep.subr.mxu0 0.0
    %800 = vmatpush1.msra.mxu0 0.0
    %801 = vmatprep.subr.mxu0 0.0
    %802 = vmatpush1.msra.mxu0 0.0
    %803 = vmatprep.subr.mxu0 0.0
    %804 = vmatpush1.msra.mxu0 0.0
    %805 = vmatprep.subr.mxu0 0.0
    %806 = vmatpush1.msra.mxu0 0.0
    %807 = vmatprep.subr.mxu0 0.0
    %808 = vmatpush1.msra.mxu0 0.0
    %809 = vmatprep.subr.mxu0 0.0
    %810 = vmatpush1.msra.mxu0 0.0
    %811 = vmatprep.subr.mxu0 0.0
    %812 = vmatpush1.msra.mxu0 0.0
    %813 = vmatprep.subr.mxu0 0.0
    %814 = vmatpush1.msra.mxu0 0.0
    %815 = vmatprep.subr.mxu0 0.0
    %816 = vmatpush1.msra.mxu0 0.0
    %817 = vmatprep.subr.mxu0 0.0
    %818 = vmatpush1.msra.mxu0 0.0
    %819 = vmatprep.subr.mxu0 0.0
    %820 = vmatpush1.msra.mxu0 0.0
    %821 = vmatprep.mubr.f32.mxu0 0.0
    %822 = vmatmul.mubr.f32.gmra.mrb[0].mxu0 %v707
    %v823 = vpop.f32.mrb[0].mxu0
    %v824 = vadd.f32 0.0, %v823
    %v825 = vpop.f32.mrb[0].mxu0
    %826 = vmatprep.mubr.f32.mxu0 0.0
    %827 = vmatmul.mubr.f32.gmra.mrb[0].mxu0 %v710
    %v828 = vpop.f32.mrb[0].mxu0
    %v829 = vadd.f32 0.0, %v828
    %v830 = vpop.f32.mrb[0].mxu0
    %831 = vmatprep.mubr.f32.mxu0 0.0
    %832 = vmatmul.mubr.f32.gmra.mrb[0].mxu0 %v713
    %v833 = vpop.f32.mrb[0].mxu0
    %v834 = vadd.f32 0.0, %v833
    %v835 = vpop.f32.mrb[0].mxu0
    %836 = vmatprep.mubr.f32.mxu0 0.0
    %837 = vmatmul.mubr.f32.gmra.mrb[0].mxu0 %v716
    %v838 = vpop.f32.mrb[0].mxu0
    %v839 = vadd.f32 0.0, %v838
    %v840 = vpop.f32.mrb[0].mxu0
    %841 = vmatprep.mubr.f32.mxu0 0.0
    %842 = vmatmul.mubr.f32.gmra.mrb[0].mxu0 %v719
    %v843 = vpop.f32.mrb[0].mxu0
    %v844 = vadd.f32 0.0, %v843
    %v845 = vpop.f32.mrb[0].mxu0
    %846 = vmatprep.mubr.f32.mxu0 0.0
    %847 = vmatmul.mubr.f32.gmra.mrb[0].mxu0 %v722
    %v848 = vpop.f32.mrb[0].mxu0
    %v849 = vadd.f32 0.0, %v848
    %v850 = vpop.f32.mrb[0].mxu0
    %851 = vmatprep.mubr.f32.mxu0 0.0
    %852 = vmatmul.mubr.f32.gmra.mrb[0].mxu0 %v725
    %v853 = vpop.f32.mrb[0].mxu0
    %v854 = vadd.f32 0.0, %v853
    %v855 = vpop.f32.mrb[0].mxu0
    %856 = vmatprep.mubr.f32.mxu0 0.0
    %857 = vmatmul.mubr.f32.gmra.mrb[0].mxu0 %v728
    %v858 = vpop.f32.mrb[0].mxu0
    %v859 = vadd.f32 0.0, %v858
    %v860 = vpop.f32.mrb[0].mxu0
    %861 = vmatprep.mubr.f32.mxu0 0.0
    %862 = vmatmul.mubr.f32.gmra.mrb[0].mxu0 %v731
    %v863 = vpop.f32.mrb[0].mxu0
    %v864 = vadd.f32 0.0, %v863
    %v865 = vpop.f32.mrb[0].mxu0
    %866 = vmatprep.mubr.f32.mxu0 0.0
    %867 = vmatmul.mubr.f32.gmra.mrb[0].mxu0 %v734
    %v868 = vpop.f32.mrb[0].mxu0
    %v869 = vadd.f32 0.0, %v868
    %v870 = vpop.f32.mrb[0].mxu0
    %871 = vmatprep.mubr.f32.mxu0 0.0
    %872 = vmatmul.mubr.f32.gmra.mrb[0].mxu0 %v737
    %v873 = vpop.f32.mrb[0].mxu0
    %v874 = vadd.f32 0.0, %v873
    %v875 = vpop.f32.mrb[0].mxu0
    %876 = vmatprep.mubr.f32.mxu0 0.0
    %877 = vmatmul.mubr.f32.gmra.mrb[0].mxu0 %v740
    %v878 = vpop.f32.mrb[0].mxu0
    %v879 = vadd.f32 0.0, %v878
    %v880 = vpop.f32.mrb[0].mxu0
    %881 = vmatprep.mubr.f32.mxu0 0.0
    %882 = vmatmul.mubr.f32.gmra.mrb[0].mxu0 %v743
    %v883 = vpop.f32.mrb[0].mxu0
    %v884 = vadd.f32 0.0, %v883
    %v885 = vpop.f32.mrb[0].mxu0
    %886 = vmatprep.mubr.f32.mxu0 0.0
    %887 = vmatmul.mubr.f32.gmra.mrb[0].mxu0 %v746
    %v888 = vpop.f32.mrb[0].mxu0
    %v889 = vadd.f32 0.0, %v888
    %v890 = vpop.f32.mrb[0].mxu0
    %891 = vmatprep.mubr.f32.mxu0 0.0
    %892 = vmatmul.mubr.f32.gmra.mrb[0].mxu0 %v749
    %v893 = vpop.f32.mrb[0].mxu0
    %v894 = vadd.f32 0.0, %v893
    %v895 = vpop.f32.mrb[0].mxu0
    %896 = vmatprep.mubr.f32.mxu0 0.0
    %897 = vmatmul.mubr.f32.gmra.mrb[0].mxu0 %v752
    %v898 = vpop.f32.mrb[0].mxu0
    %v899 = vadd.f32 0.0, %v898
    %v900 = vpop.f32.mrb[0].mxu0
    %901 = vdwg.mxu0
    %v902 = vsel %vm659, %v672, 0.0
    %v903 = vrot.slane %v902, 4
    %v904 = vadd.f32 %v902, %v903
    %v905 = vrot.slane %v904, 2
    %v906 = vadd.f32 %v904, %v905
    %v907 = vrot.slane %v906, 1
    %v908 = vadd.f32 %v906, %v907
    %909 = vmatprep.subr.mxu0 0.0
    %910 = vmatpush1.xpose.msra.mxu0 %v488
    %911 = vmatprep.subr.mxu0 0.0
    %912 = vmatpush1.xpose.msra.mxu0 %v489
    %913 = vmatprep.subr.mxu0 0.0
    %914 = vmatpush1.xpose.msra.mxu0 %v490
    %915 = vmatprep.subr.mxu0 0.0
    %916 = vmatpush1.xpose.msra.mxu0 %v491
    %917 = vmatprep.subr.mxu0 0.0
    %918 = vmatpush1.xpose.msra.mxu0 %v492
    %919 = vmatprep.subr.mxu0 0.0
    %920 = vmatpush1.xpose.msra.mxu0 %v493
    %921 = vmatprep.subr.mxu0 0.0
    %922 = vmatpush1.xpose.msra.mxu0 %v494
    %923 = vmatprep.subr.mxu0 0.0
    %924 = vmatpush1.xpose.msra.mxu0 %v495
    %925 = vmatprep.subr.mxu0 0.0
    %926 = vmatpush1.xpose.msra.mxu0 %v496
    %927 = vmatprep.subr.mxu0 0.0
    %928 = vmatpush1.xpose.msra.mxu0 %v497
    %929 = vmatprep.subr.mxu0 0.0
    %930 = vmatpush1.xpose.msra.mxu0 %v498
    %931 = vmatprep.subr.mxu0 0.0
    %932 = vmatpush1.xpose.msra.mxu0 %v499
    %933 = vmatprep.subr.mxu0 0.0
    %934 = vmatpush1.xpose.msra.mxu0 %v500
    %935 = vmatprep.subr.mxu0 0.0
    %936 = vmatpush1.xpose.msra.mxu0 %v501
    %937 = vmatprep.subr.mxu0 0.0
    %938 = vmatpush1.xpose.msra.mxu0 %v502
    %939 = vmatprep.subr.mxu0 0.0
    %940 = vmatpush1.xpose.msra.mxu0 %v503
    %941 = vmatprep.subr.mxu0 0.0
    %942 = vmatpush1.xpose.msra.mxu0 0.0
    %943 = vmatprep.subr.mxu0 0.0
    %944 = vmatpush1.xpose.msra.mxu0 0.0
    %945 = vmatprep.subr.mxu0 0.0
    %946 = vmatpush1.xpose.msra.mxu0 0.0
    %947 = vmatprep.subr.mxu0 0.0
    %948 = vmatpush1.xpose.msra.mxu0 0.0
    %949 = vmatprep.subr.mxu0 0.0
    %950 = vmatpush1.xpose.msra.mxu0 0.0
    %951 = vmatprep.subr.mxu0 0.0
    %952 = vmatpush1.xpose.msra.mxu0 0.0
    %953 = vmatprep.subr.mxu0 0.0
    %954 = vmatpush1.xpose.msra.mxu0 0.0
    %955 = vmatprep.subr.mxu0 0.0
    %956 = vmatpush1.xpose.msra.mxu0 0.0
    %957 = vmatprep.subr.mxu0 0.0
    %958 = vmatpush1.xpose.msra.mxu0 0.0
    %959 = vmatprep.subr.mxu0 0.0
    %960 = vmatpush1.xpose.msra.mxu0 0.0
    %961 = vmatprep.subr.mxu0 0.0
    %962 = vmatpush1.xpose.msra.mxu0 0.0
    %963 = vmatprep.subr.mxu0 0.0
    %964 = vmatpush1.xpose.msra.mxu0 0.0
    %965 = vmatprep.subr.mxu0 0.0
    %966 = vmatpush1.xpose.msra.mxu0 0.0
    %967 = vmatprep.subr.mxu0 0.0
    %968 = vmatpush1.xpose.msra.mxu0 0.0
    %969 = vmatprep.subr.mxu0 0.0
    %970 = vmatpush1.xpose.msra.mxu0 0.0
    %971 = vmatprep.subr.mxu0 0.0
    %972 = vmatpush1.xpose.msra.mxu0 0.0
    %973 = vmatprep.mubr.f32.mxu0 0.0
    %974 = vmatmul.mubr.f32.gmra.mrb[0].mxu0 %v672
    %v975 = vpop.f32.mrb[0].mxu0
    %v976 = vadd.f32 0.0, %v975
    %v977 = vpop.f32.mrb[0].mxu0
    %978 = vdwg.mxu0
    %vm979 = vcmp.gt.f32.partialorder %v578, 0.0
    %v980 = vsel %vm979, %v976, 0.0
    %981 = vxpose.xlu0.b32.start [1/16] %v71, 128
    %982 = vxpose.xlu0.b32.cont [2/16] 0.0, 128
    %983 = vxpose.xlu0.b32.cont [3/16] 0.0, 128
    %984 = vxpose.xlu0.b32.cont [4/16] 0.0, 128
    %985 = vxpose.xlu0.b32.cont [5/16] 0.0, 128
    %986 = vxpose.xlu0.b32.cont [6/16] 0.0, 128
    %987 = vxpose.xlu0.b32.cont [7/16] 0.0, 128
    %988 = vxpose.xlu0.b32.cont [8/16] 0.0, 128
    %989 = vxpose.xlu0.b32.cont [9/16] 0.0, 128
    %990 = vxpose.xlu0.b32.cont [10/16] 0.0, 128
    %991 = vxpose.xlu0.b32.cont [11/16] 0.0, 128
    %992 = vxpose.xlu0.b32.cont [12/16] 0.0, 128
    %993 = vxpose.xlu0.b32.cont [13/16] 0.0, 128
    %994 = vxpose.xlu0.b32.cont [14/16] 0.0, 128
    %995 = vxpose.xlu0.b32.cont [15/16] 0.0, 128
    %996 = vxpose.xlu0.b32.end [16/16] 0.0, 128
    %v997 = vpop.trf.xlu0
    %v998 = vpop.trf.xlu0
    %v999 = vpop.trf.xlu0
    %v1000 = vpop.trf.xlu0
    %v1001 = vpop.trf.xlu0
    %v1002 = vpop.trf.xlu0
    %v1003 = vpop.trf.xlu0
    %v1004 = vpop.trf.xlu0
    %v1005 = vpop.trf.xlu0
    %v1006 = vpop.trf.xlu0
    %v1007 = vpop.trf.xlu0
    %v1008 = vpop.trf.xlu0
    %v1009 = vpop.trf.xlu0
    %v1010 = vpop.trf.xlu0
    %v1011 = vpop.trf.xlu0
    %v1012 = vpop.trf.xlu0
    %1013 = vxpose.xlu0.b32.start [1/16] %v72, 128
    %1014 = vxpose.xlu0.b32.cont [2/16] 0.0, 128
    %1015 = vxpose.xlu0.b32.cont [3/16] 0.0, 128
    %1016 = vxpose.xlu0.b32.cont [4/16] 0.0, 128
    %1017 = vxpose.xlu0.b32.cont [5/16] 0.0, 128
    %1018 = vxpose.xlu0.b32.cont [6/16] 0.0, 128
    %1019 = vxpose.xlu0.b32.cont [7/16] 0.0, 128
    %1020 = vxpose.xlu0.b32.cont [8/16] 0.0, 128
    %1021 = vxpose.xlu0.b32.cont [9/16] 0.0, 128
    %1022 = vxpose.xlu0.b32.cont [10/16] 0.0, 128
    %1023 = vxpose.xlu0.b32.cont [11/16] 0.0, 128
    %1024 = vxpose.xlu0.b32.cont [12/16] 0.0, 128
    %1025 = vxpose.xlu0.b32.cont [13/16] 0.0, 128
    %1026 = vxpose.xlu0.b32.cont [14/16] 0.0, 128
    %1027 = vxpose.xlu0.b32.cont [15/16] 0.0, 128
    %1028 = vxpose.xlu0.b32.end [16/16] 0.0, 128
    %v1029 = vpop.trf.xlu0
    %v1030 = vpop.trf.xlu0
    %v1031 = vpop.trf.xlu0
    %v1032 = vpop.trf.xlu0
    %v1033 = vpop.trf.xlu0
    %v1034 = vpop.trf.xlu0
    %v1035 = vpop.trf.xlu0
    %v1036 = vpop.trf.xlu0
    %v1037 = vpop.trf.xlu0
    %v1038 = vpop.trf.xlu0
    %v1039 = vpop.trf.xlu0
    %v1040 = vpop.trf.xlu0
    %v1041 = vpop.trf.xlu0
    %v1042 = vpop.trf.xlu0
    %v1043 = vpop.trf.xlu0
    %v1044 = vpop.trf.xlu0
    %v1046 = vsel %vm705, %v997, 0
    %v1049 = vsel %vm705, %v998, 0
    %v1052 = vsel %vm705, %v999, 0
    %v1055 = vsel %vm705, %v1000, 0
    %v1058 = vsel %vm705, %v1001, 0
    %v1061 = vsel %vm705, %v1002, 0
    %v1064 = vsel %vm705, %v1003, 0
    %v1067 = vsel %vm705, %v1004, 0
    %v1070 = vsel %vm705, %v1005, 0
    %v1073 = vsel %vm705, %v1006, 0
    %v1076 = vsel %vm705, %v1007, 0
    %v1079 = vsel %vm705, %v1008, 0
    %v1082 = vsel %vm705, %v1009, 0
    %v1085 = vsel %vm705, %v1010, 0
    %v1088 = vsel %vm705, %v1011, 0
    %v1091 = vsel %vm705, %v1012, 0
    %v1094 = vsel %vm705, %v1029, 0
    %v1097 = vsel %vm705, %v1030, 0
    %v1100 = vsel %vm705, %v1031, 0
    %v1103 = vsel %vm705, %v1032, 0
    %v1106 = vsel %vm705, %v1033, 0
    %v1109 = vsel %vm705, %v1034, 0
    %v1112 = vsel %vm705, %v1035, 0
    %v1115 = vsel %vm705, %v1036, 0
    %v1118 = vsel %vm705, %v1037, 0
    %v1121 = vsel %vm705, %v1038, 0
    %v1124 = vsel %vm705, %v1039, 0
    %v1127 = vsel %vm705, %v1040, 0
    %v1130 = vsel %vm705, %v1041, 0
    %v1133 = vsel %vm705, %v1042, 0
    %v1136 = vsel %vm705, %v1043, 0
    %v1139 = vsel %vm705, %v1044, 0
    %v1142 = vsel %vm659, %v980, 0
    %1144 = vmatprep.subr.mxu0 0.0
    %1145 = vmatpush1.msra.mxu0 %v1142
    %1146 = vmatprep.subr.mxu0 0.0
    %1147 = vmatpush1.msra.mxu0 0.0
    %1148 = vmatprep.subr.mxu0 0.0
    %1149 = vmatpush1.msra.mxu0 0.0
    %1150 = vmatprep.subr.mxu0 0.0
    %1151 = vmatpush1.msra.mxu0 0.0
    %1152 = vmatprep.subr.mxu0 0.0
    %1153 = vmatpush1.msra.mxu0 0.0
    %1154 = vmatprep.subr.mxu0 0.0
    %1155 = vmatpush1.msra.mxu0 0.0
    %1156 = vmatprep.subr.mxu0 0.0
    %1157 = vmatpush1.msra.mxu0 0.0
    %1158 = vmatprep.subr.mxu0 0.0
    %1159 = vmatpush1.msra.mxu0 0.0
    %1160 = vmatprep.subr.mxu0 0.0
    %1161 = vmatpush1.msra.mxu0 0.0
    %1162 = vmatprep.subr.mxu0 0.0
    %1163 = vmatpush1.msra.mxu0 0.0
    %1164 = vmatprep.subr.mxu0 0.0
    %1165 = vmatpush1.msra.mxu0 0.0
    %1166 = vmatprep.subr.mxu0 0.0
    %1167 = vmatpush1.msra.mxu0 0.0
    %1168 = vmatprep.subr.mxu0 0.0
    %1169 = vmatpush1.msra.mxu0 0.0
    %1170 = vmatprep.subr.mxu0 0.0
    %1171 = vmatpush1.msra.mxu0 0.0
    %1172 = vmatprep.subr.mxu0 0.0
    %1173 = vmatpush1.msra.mxu0 0.0
    %1174 = vmatprep.subr.mxu0 0.0
    %1175 = vmatpush1.msra.mxu0 0.0
    %1176 = vmatprep.subr.mxu0 0.0
    %1177 = vmatpush1.msra.mxu0 0.0
    %1178 = vmatprep.subr.mxu0 0.0
    %1179 = vmatpush1.msra.mxu0 0.0
    %1180 = vmatprep.subr.mxu0 0.0
    %1181 = vmatpush1.msra.mxu0 0.0
    %1182 = vmatprep.subr.mxu0 0.0
    %1183 = vmatpush1.msra.mxu0 0.0
    %1184 = vmatprep.subr.mxu0 0.0
    %1185 = vmatpush1.msra.mxu0 0.0
    %1186 = vmatprep.subr.mxu0 0.0
    %1187 = vmatpush1.msra.mxu0 0.0
    %1188 = vmatprep.subr.mxu0 0.0
    %1189 = vmatpush1.msra.mxu0 0.0
    %1190 = vmatprep.subr.mxu0 0.0
    %1191 = vmatpush1.msra.mxu0 0.0
    %1192 = vmatprep.subr.mxu0 0.0
    %1193 = vmatpush1.msra.mxu0 0.0
    %1194 = vmatprep.subr.mxu0 0.0
    %1195 = vmatpush1.msra.mxu0 0.0
    %1196 = vmatprep.subr.mxu0 0.0
    %1197 = vmatpush1.msra.mxu0 0.0
    %1198 = vmatprep.subr.mxu0 0.0
    %1199 = vmatpush1.msra.mxu0 0.0
    %1200 = vmatprep.subr.mxu0 0.0
    %1201 = vmatpush1.msra.mxu0 0.0
    %1202 = vmatprep.subr.mxu0 0.0
    %1203 = vmatpush1.msra.mxu0 0.0
    %1204 = vmatprep.subr.mxu0 0.0
    %1205 = vmatpush1.msra.mxu0 0.0
    %1206 = vmatprep.subr.mxu0 0.0
    %1207 = vmatpush1.msra.mxu0 0.0
    %1208 = vmatprep.mubr.f32.mxu0 0.0
    %1209 = vmatmul.mubr.f32.gmra.mrb[0].mxu0 %v1046
    %v1210 = vpop.f32.mrb[0].mxu0
    %v1211 = vadd.f32 0.0, %v1210
    %v1212 = vpop.f32.mrb[0].mxu0
    %1213 = vmatprep.mubr.f32.mxu0 0.0
    %1214 = vmatmul.mubr.f32.gmra.mrb[0].mxu0 %v1049
    %v1215 = vpop.f32.mrb[0].mxu0
    %v1216 = vadd.f32 0.0, %v1215
    %v1217 = vpop.f32.mrb[0].mxu0
    %1218 = vmatprep.mubr.f32.mxu0 0.0
    %1219 = vmatmul.mubr.f32.gmra.mrb[0].mxu0 %v1052
    %v1220 = vpop.f32.mrb[0].mxu0
    %v1221 = vadd.f32 0.0, %v1220
    %v1222 = vpop.f32.mrb[0].mxu0
    %1223 = vmatprep.mubr.f32.mxu0 0.0
    %1224 = vmatmul.mubr.f32.gmra.mrb[0].mxu0 %v1055
    %v1225 = vpop.f32.mrb[0].mxu0
    %v1226 = vadd.f32 0.0, %v1225
    %v1227 = vpop.f32.mrb[0].mxu0
    %1228 = vmatprep.mubr.f32.mxu0 0.0
    %1229 = vmatmul.mubr.f32.gmra.mrb[0].mxu0 %v1058
    %v1230 = vpop.f32.mrb[0].mxu0
    %v1231 = vadd.f32 0.0, %v1230
    %v1232 = vpop.f32.mrb[0].mxu0
    %1233 = vmatprep.mubr.f32.mxu0 0.0
    %1234 = vmatmul.mubr.f32.gmra.mrb[0].mxu0 %v1061
    %v1235 = vpop.f32.mrb[0].mxu0
    %v1236 = vadd.f32 0.0, %v1235
    %v1237 = vpop.f32.mrb[0].mxu0
    %1238 = vmatprep.mubr.f32.mxu0 0.0
    %1239 = vmatmul.mubr.f32.gmra.mrb[0].mxu0 %v1064
    %v1240 = vpop.f32.mrb[0].mxu0
    %v1241 = vadd.f32 0.0, %v1240
    %v1242 = vpop.f32.mrb[0].mxu0
    %1243 = vmatprep.mubr.f32.mxu0 0.0
    %1244 = vmatmul.mubr.f32.gmra.mrb[0].mxu0 %v1067
    %v1245 = vpop.f32.mrb[0].mxu0
    %v1246 = vadd.f32 0.0, %v1245
    %v1247 = vpop.f32.mrb[0].mxu0
    %1248 = vmatprep.mubr.f32.mxu0 0.0
    %1249 = vmatmul.mubr.f32.gmra.mrb[0].mxu0 %v1070
    %v1250 = vpop.f32.mrb[0].mxu0
    %v1251 = vadd.f32 0.0, %v1250
    %v1252 = vpop.f32.mrb[0].mxu0
    %1253 = vmatprep.mubr.f32.mxu0 0.0
    %1254 = vmatmul.mubr.f32.gmra.mrb[0].mxu0 %v1073
    %v1255 = vpop.f32.mrb[0].mxu0
    %v1256 = vadd.f32 0.0, %v1255
    %v1257 = vpop.f32.mrb[0].mxu0
    %1258 = vmatprep.mubr.f32.mxu0 0.0
    %1259 = vmatmul.mubr.f32.gmra.mrb[0].mxu0 %v1076
    %v1260 = vpop.f32.mrb[0].mxu0
    %v1261 = vadd.f32 0.0, %v1260
    %v1262 = vpop.f32.mrb[0].mxu0
    %1263 = vmatprep.mubr.f32.mxu0 0.0
    %1264 = vmatmul.mubr.f32.gmra.mrb[0].mxu0 %v1079
    %v1265 = vpop.f32.mrb[0].mxu0
    %v1266 = vadd.f32 0.0, %v1265
    %v1267 = vpop.f32.mrb[0].mxu0
    %1268 = vmatprep.mubr.f32.mxu0 0.0
    %1269 = vmatmul.mubr.f32.gmra.mrb[0].mxu0 %v1082
    %v1270 = vpop.f32.mrb[0].mxu0
    %v1271 = vadd.f32 0.0, %v1270
    %v1272 = vpop.f32.mrb[0].mxu0
    %1273 = vmatprep.mubr.f32.mxu0 0.0
    %1274 = vmatmul.mubr.f32.gmra.mrb[0].mxu0 %v1085
    %v1275 = vpop.f32.mrb[0].mxu0
    %v1276 = vadd.f32 0.0, %v1275
    %v1277 = vpop.f32.mrb[0].mxu0
    %1278 = vmatprep.mubr.f32.mxu0 0.0
    %1279 = vmatmul.mubr.f32.gmra.mrb[0].mxu0 %v1088
    %v1280 = vpop.f32.mrb[0].mxu0
    %v1281 = vadd.f32 0.0, %v1280
    %v1282 = vpop.f32.mrb[0].mxu0
    %1283 = vmatprep.mubr.f32.mxu0 0.0
    %1284 = vmatmul.mubr.f32.gmra.mrb[0].mxu0 %v1091
    %v1285 = vpop.f32.mrb[0].mxu0
    %v1286 = vadd.f32 0.0, %v1285
    %v1287 = vpop.f32.mrb[0].mxu0
    %1288 = vmatprep.mubr.f32.mxu0 0.0
    %1289 = vmatmul.mubr.f32.gmra.mrb[0].mxu0 %v1094
    %v1290 = vpop.f32.mrb[0].mxu0
    %v1291 = vadd.f32 0.0, %v1290
    %v1292 = vpop.f32.mrb[0].mxu0
    %1293 = vmatprep.mubr.f32.mxu0 0.0
    %1294 = vmatmul.mubr.f32.gmra.mrb[0].mxu0 %v1097
    %v1295 = vpop.f32.mrb[0].mxu0
    %v1296 = vadd.f32 0.0, %v1295
    %v1297 = vpop.f32.mrb[0].mxu0
    %1298 = vmatprep.mubr.f32.mxu0 0.0
    %1299 = vmatmul.mubr.f32.gmra.mrb[0].mxu0 %v1100
    %v1300 = vpop.f32.mrb[0].mxu0
    %v1301 = vadd.f32 0.0, %v1300
    %v1302 = vpop.f32.mrb[0].mxu0
    %1303 = vmatprep.mubr.f32.mxu0 0.0
    %1304 = vmatmul.mubr.f32.gmra.mrb[0].mxu0 %v1103
    %v1305 = vpop.f32.mrb[0].mxu0
    %v1306 = vadd.f32 0.0, %v1305
    %v1307 = vpop.f32.mrb[0].mxu0
    %1308 = vmatprep.mubr.f32.mxu0 0.0
    %1309 = vmatmul.mubr.f32.gmra.mrb[0].mxu0 %v1106
    %v1310 = vpop.f32.mrb[0].mxu0
    %v1311 = vadd.f32 0.0, %v1310
    %v1312 = vpop.f32.mrb[0].mxu0
    %1313 = vmatprep.mubr.f32.mxu0 0.0
    %1314 = vmatmul.mubr.f32.gmra.mrb[0].mxu0 %v1109
    %v1315 = vpop.f32.mrb[0].mxu0
    %v1316 = vadd.f32 0.0, %v1315
    %v1317 = vpop.f32.mrb[0].mxu0
    %1318 = vmatprep.mubr.f32.mxu0 0.0
    %1319 = vmatmul.mubr.f32.gmra.mrb[0].mxu0 %v1112
    %v1320 = vpop.f32.mrb[0].mxu0
    %v1321 = vadd.f32 0.0, %v1320
    %v1322 = vpop.f32.mrb[0].mxu0
    %1323 = vmatprep.mubr.f32.mxu0 0.0
    %1324 = vmatmul.mubr.f32.gmra.mrb[0].mxu0 %v1115
    %v1325 = vpop.f32.mrb[0].mxu0
    %v1326 = vadd.f32 0.0, %v1325
    %v1327 = vpop.f32.mrb[0].mxu0
    %1328 = vmatprep.mubr.f32.mxu0 0.0
    %1329 = vmatmul.mubr.f32.gmra.mrb[0].mxu0 %v1118
    %v1330 = vpop.f32.mrb[0].mxu0
    %v1331 = vadd.f32 0.0, %v1330
    %v1332 = vpop.f32.mrb[0].mxu0
    %1333 = vmatprep.mubr.f32.mxu0 0.0
    %1334 = vmatmul.mubr.f32.gmra.mrb[0].mxu0 %v1121
    %v1335 = vpop.f32.mrb[0].mxu0
    %v1336 = vadd.f32 0.0, %v1335
    %v1337 = vpop.f32.mrb[0].mxu0
    %1338 = vmatprep.mubr.f32.mxu0 0.0
    %1339 = vmatmul.mubr.f32.gmra.mrb[0].mxu0 %v1124
    %v1340 = vpop.f32.mrb[0].mxu0
    %v1341 = vadd.f32 0.0, %v1340
    %v1342 = vpop.f32.mrb[0].mxu0
    %1343 = vmatprep.mubr.f32.mxu0 0.0
    %1344 = vmatmul.mubr.f32.gmra.mrb[0].mxu0 %v1127
    %v1345 = vpop.f32.mrb[0].mxu0
    %v1346 = vadd.f32 0.0, %v1345
    %v1347 = vpop.f32.mrb[0].mxu0
    %1348 = vmatprep.mubr.f32.mxu0 0.0
    %1349 = vmatmul.mubr.f32.gmra.mrb[0].mxu0 %v1130
    %v1350 = vpop.f32.mrb[0].mxu0
    %v1351 = vadd.f32 0.0, %v1350
    %v1352 = vpop.f32.mrb[0].mxu0
    %1353 = vmatprep.mubr.f32.mxu0 0.0
    %1354 = vmatmul.mubr.f32.gmra.mrb[0].mxu0 %v1133
    %v1355 = vpop.f32.mrb[0].mxu0
    %v1356 = vadd.f32 0.0, %v1355
    %v1357 = vpop.f32.mrb[0].mxu0
    %1358 = vmatprep.mubr.f32.mxu0 0.0
    %1359 = vmatmul.mubr.f32.gmra.mrb[0].mxu0 %v1136
    %v1360 = vpop.f32.mrb[0].mxu0
    %v1361 = vadd.f32 0.0, %v1360
    %v1362 = vpop.f32.mrb[0].mxu0
    %1363 = vmatprep.mubr.f32.mxu0 0.0
    %1364 = vmatmul.mubr.f32.gmra.mrb[0].mxu0 %v1139
    %v1365 = vpop.f32.mrb[0].mxu0
    %v1366 = vadd.f32 0.0, %v1365
    %v1367 = vpop.f32.mrb[0].mxu0
    %1368 = vdwg.mxu0
    %v1369 = vsel %vm659, %v980, 0.0
    %v1370 = vrot.slane %v1369, 4
    %v1371 = vadd.f32 %v1369, %v1370
    %v1372 = vrot.slane %v1371, 2
    %v1373 = vadd.f32 %v1371, %v1372
    %v1374 = vrot.slane %v1373, 1
    %v1375 = vadd.f32 %v1373, %v1374
    %v1376 = vmul.f32 %v1211, 0.4
    %v1377 = vmul.f32 %v1216, 0.4
    %v1378 = vmul.f32 %v1221, 0.4
    %v1379 = vmul.f32 %v1226, 0.4
    %v1380 = vmul.f32 %v1231, 0.4
    %v1381 = vmul.f32 %v1236, 0.4
    %v1382 = vmul.f32 %v1241, 0.4
    %v1383 = vmul.f32 %v1246, 0.4
    %v1384 = vmul.f32 %v1251, 0.4
    %v1385 = vmul.f32 %v1256, 0.4
    %v1386 = vmul.f32 %v1261, 0.4
    %v1387 = vmul.f32 %v1266, 0.4
    %v1388 = vmul.f32 %v1271, 0.4
    %v1389 = vmul.f32 %v1276, 0.4
    %v1390 = vmul.f32 %v1281, 0.4
    %v1391 = vmul.f32 %v1286, 0.4
    %v1392 = vmul.f32 %v1291, 0.4
    %v1393 = vmul.f32 %v1296, 0.4
    %v1394 = vmul.f32 %v1301, 0.4
    %v1395 = vmul.f32 %v1306, 0.4
    %v1396 = vmul.f32 %v1311, 0.4
    %v1397 = vmul.f32 %v1316, 0.4
    %v1398 = vmul.f32 %v1321, 0.4
    %v1399 = vmul.f32 %v1326, 0.4
    %v1400 = vmul.f32 %v1331, 0.4
    %v1401 = vmul.f32 %v1336, 0.4
    %v1402 = vmul.f32 %v1341, 0.4
    %v1403 = vmul.f32 %v1346, 0.4
    %v1404 = vmul.f32 %v1351, 0.4
    %v1405 = vmul.f32 %v1356, 0.4
    %v1406 = vmul.f32 %v1361, 0.4
    %v1407 = vmul.f32 %v1366, 0.4
    %v1408 = vsub.f32 %v455, %v1376
    %v1409 = vsub.f32 %v456, %v1377
    %v1410 = vsub.f32 %v457, %v1378
    %v1411 = vsub.f32 %v458, %v1379
    %v1412 = vsub.f32 %v459, %v1380
    %v1413 = vsub.f32 %v460, %v1381
    %v1414 = vsub.f32 %v461, %v1382
    %v1415 = vsub.f32 %v462, %v1383
    %v1416 = vsub.f32 %v463, %v1384
    %v1417 = vsub.f32 %v464, %v1385
    %v1418 = vsub.f32 %v465, %v1386
    %v1419 = vsub.f32 %v466, %v1387
    %v1420 = vsub.f32 %v467, %v1388
    %v1421 = vsub.f32 %v468, %v1389
    %v1422 = vsub.f32 %v469, %v1390
    %v1423 = vsub.f32 %v470, %v1391
    %v1424 = vsub.f32 %v471, %v1392
    %v1425 = vsub.f32 %v472, %v1393
    %v1426 = vsub.f32 %v473, %v1394
    %v1427 = vsub.f32 %v474, %v1395
    %v1428 = vsub.f32 %v475, %v1396
    %v1429 = vsub.f32 %v476, %v1397
    %v1430 = vsub.f32 %v477, %v1398
    %v1431 = vsub.f32 %v478, %v1399
    %v1432 = vsub.f32 %v479, %v1400
    %v1433 = vsub.f32 %v480, %v1401
    %v1434 = vsub.f32 %v481, %v1402
    %v1435 = vsub.f32 %v482, %v1403
    %v1436 = vsub.f32 %v483, %v1404
    %v1437 = vsub.f32 %v484, %v1405
    %v1438 = vsub.f32 %v485, %v1406
    %v1439 = vsub.f32 %v486, %v1407
    %1440 = vst [vmem:[#allocation2] sm:$0xff] %v1408
    %1441 = vst [vmem:[#allocation2 + $0x8] sm:$0xff] %v1409
    %1442 = vst [vmem:[#allocation2 + $0x10] sm:$0xff] %v1410
    %1443 = vst [vmem:[#allocation2 + $0x18] sm:$0xff] %v1411
    %1444 = vst [vmem:[#allocation2 + $0x20] sm:$0xff] %v1412
    %1445 = vst [vmem:[#allocation2 + $0x28] sm:$0xff] %v1413
    %1446 = vst [vmem:[#allocation2 + $0x30] sm:$0xff] %v1414
    %1447 = vst [vmem:[#allocation2 + $0x38] sm:$0xff] %v1415
    %1448 = vst [vmem:[#allocation2 + $0x40] sm:$0xff] %v1416
    %1449 = vst [vmem:[#allocation2 + $0x48] sm:$0xff] %v1417
    %1450 = vst [vmem:[#allocation2 + $0x50] sm:$0xff] %v1418
    %1451 = vst [vmem:[#allocation2 + $0x58] sm:$0xff] %v1419
    %1452 = vst [vmem:[#allocation2 + $0x60] sm:$0xff] %v1420
    %1453 = vst [vmem:[#allocation2 + $0x68] sm:$0xff] %v1421
    %1454 = vst [vmem:[#allocation2 + $0x70] sm:$0xff] %v1422
    %1455 = vst [vmem:[#allocation2 + $0x78] sm:$0xff] %v1423
    %1456 = vst [vmem:[#allocation2 + $0x80] sm:$0xff] %v1424
    %1457 = vst [vmem:[#allocation2 + $0x88] sm:$0xff] %v1425
    %1458 = vst [vmem:[#allocation2 + $0x90] sm:$0xff] %v1426
    %1459 = vst [vmem:[#allocation2 + $0x98] sm:$0xff] %v1427
    %1460 = vst [vmem:[#allocation2 + $0xa0] sm:$0xff] %v1428
    %1461 = vst [vmem:[#allocation2 + $0xa8] sm:$0xff] %v1429
    %1462 = vst [vmem:[#allocation2 + $0xb0] sm:$0xff] %v1430
    %1463 = vst [vmem:[#allocation2 + $0xb8] sm:$0xff] %v1431
    %1464 = vst [vmem:[#allocation2 + $0xc0] sm:$0xff] %v1432
    %1465 = vst [vmem:[#allocation2 + $0xc8] sm:$0xff] %v1433
    %1466 = vst [vmem:[#allocation2 + $0xd0] sm:$0xff] %v1434
    %1467 = vst [vmem:[#allocation2 + $0xd8] sm:$0xff] %v1435
    %1468 = vst [vmem:[#allocation2 + $0xe0] sm:$0xff] %v1436
    %1469 = vst [vmem:[#allocation2 + $0xe8] sm:$0xff] %v1437
    %1470 = vst [vmem:[#allocation2 + $0xf0] sm:$0xff] %v1438
    %1471 = vst [vmem:[#allocation2 + $0xf8] sm:$0xff] %v1439
    %v1472 = vmul.f32 %v1375, 0.4
    %v1473 = vsub.f32 %v487, %v1472
    %1474 = vst [vmem:[#allocation3] sm:$0x1] %v1473
    %v1475 = vmul.f32 %v824, 0.4
    %v1476 = vmul.f32 %v829, 0.4
    %v1477 = vmul.f32 %v834, 0.4
    %v1478 = vmul.f32 %v839, 0.4
    %v1479 = vmul.f32 %v844, 0.4
    %v1480 = vmul.f32 %v849, 0.4
    %v1481 = vmul.f32 %v854, 0.4
    %v1482 = vmul.f32 %v859, 0.4
    %v1483 = vmul.f32 %v864, 0.4
    %v1484 = vmul.f32 %v869, 0.4
    %v1485 = vmul.f32 %v874, 0.4
    %v1486 = vmul.f32 %v879, 0.4
    %v1487 = vmul.f32 %v884, 0.4
    %v1488 = vmul.f32 %v889, 0.4
    %v1489 = vmul.f32 %v894, 0.4
    %v1490 = vmul.f32 %v899, 0.4
    %v1491 = vsub.f32 %v488, %v1475
    %v1492 = vsub.f32 %v489, %v1476
    %v1493 = vsub.f32 %v490, %v1477
    %v1494 = vsub.f32 %v491, %v1478
    %v1495 = vsub.f32 %v492, %v1479
    %v1496 = vsub.f32 %v493, %v1480
    %v1497 = vsub.f32 %v494, %v1481
    %v1498 = vsub.f32 %v495, %v1482
    %v1499 = vsub.f32 %v496, %v1483
    %v1500 = vsub.f32 %v497, %v1484
    %v1501 = vsub.f32 %v498, %v1485
    %v1502 = vsub.f32 %v499, %v1486
    %v1503 = vsub.f32 %v500, %v1487
    %v1504 = vsub.f32 %v501, %v1488
    %v1505 = vsub.f32 %v502, %v1489
    %v1506 = vsub.f32 %v503, %v1490
    %1507 = vst [vmem:[#allocation4] sm:$0xff] %v1491
    %1508 = vst [vmem:[#allocation4 + $0x8] sm:$0xff] %v1492
    %1509 = vst [vmem:[#allocation4 + $0x10] sm:$0xff] %v1493
    %1510 = vst [vmem:[#allocation4 + $0x18] sm:$0xff] %v1494
    %1511 = vst [vmem:[#allocation4 + $0x20] sm:$0xff] %v1495
    %1512 = vst [vmem:[#allocation4 + $0x28] sm:$0xff] %v1496
    %1513 = vst [vmem:[#allocation4 + $0x30] sm:$0xff] %v1497
    %1514 = vst [vmem:[#allocation4 + $0x38] sm:$0xff] %v1498
    %1515 = vst [vmem:[#allocation4 + $0x40] sm:$0xff] %v1499
    %1516 = vst [vmem:[#allocation4 + $0x48] sm:$0xff] %v1500
    %1517 = vst [vmem:[#allocation4 + $0x50] sm:$0xff] %v1501
    %1518 = vst [vmem:[#allocation4 + $0x58] sm:$0xff] %v1502
    %1519 = vst [vmem:[#allocation4 + $0x60] sm:$0xff] %v1503
    %1520 = vst [vmem:[#allocation4 + $0x68] sm:$0xff] %v1504
    %1521 = vst [vmem:[#allocation4 + $0x70] sm:$0xff] %v1505
    %1522 = vst [vmem:[#allocation4 + $0x78] sm:$0xff] %v1506
    %v1523 = vmul.f32 %v908, 0.4
    %v1524 = vsub.f32 %v504, %v1523
    %1525 = vst [vmem:[#allocation5] sm:$0x1] %v1524
    %v1526 = vld [vmem:[#allocation2] sm:$0xff]
    %v1527 = vld [vmem:[#allocation2 + $0x8] sm:$0xff]
    %v1528 = vld [vmem:[#allocation2 + $0x10] sm:$0xff]
    %v1529 = vld [vmem:[#allocation2 + $0x18] sm:$0xff]
    %v1530 = vld [vmem:[#allocation2 + $0x20] sm:$0xff]
    %v1531 = vld [vmem:[#allocation2 + $0x28] sm:$0xff]
    %v1532 = vld [vmem:[#allocation2 + $0x30] sm:$0xff]
    %v1533 = vld [vmem:[#allocation2 + $0x38] sm:$0xff]
    %v1534 = vld [vmem:[#allocation2 + $0x40] sm:$0xff]
    %v1535 = vld [vmem:[#allocation2 + $0x48] sm:$0xff]
    %v1536 = vld [vmem:[#allocation2 + $0x50] sm:$0xff]
    %v1537 = vld [vmem:[#allocation2 + $0x58] sm:$0xff]
    %v1538 = vld [vmem:[#allocation2 + $0x60] sm:$0xff]
    %v1539 = vld [vmem:[#allocation2 + $0x68] sm:$0xff]
    %v1540 = vld [vmem:[#allocation2 + $0x70] sm:$0xff]
    %v1541 = vld [vmem:[#allocation2 + $0x78] sm:$0xff]
    %v1542 = vld [vmem:[#allocation2 + $0x80] sm:$0xff]
    %v1543 = vld [vmem:[#allocation2 + $0x88] sm:$0xff]
    %v1544 = vld [vmem:[#allocation2 + $0x90] sm:$0xff]
    %v1545 = vld [vmem:[#allocation2 + $0x98] sm:$0xff]
    %v1546 = vld [vmem:[#allocation2 + $0xa0] sm:$0xff]
    %v1547 = vld [vmem:[#allocation2 + $0xa8] sm:$0xff]
    %v1548 = vld [vmem:[#allocation2 + $0xb0] sm:$0xff]
    %v1549 = vld [vmem:[#allocation2 + $0xb8] sm:$0xff]
    %v1550 = vld [vmem:[#allocation2 + $0xc0] sm:$0xff]
    %v1551 = vld [vmem:[#allocation2 + $0xc8] sm:$0xff]
    %v1552 = vld [vmem:[#allocation2 + $0xd0] sm:$0xff]
    %v1553 = vld [vmem:[#allocation2 + $0xd8] sm:$0xff]
    %v1554 = vld [vmem:[#allocation2 + $0xe0] sm:$0xff]
    %v1555 = vld [vmem:[#allocation2 + $0xe8] sm:$0xff]
    %v1556 = vld [vmem:[#allocation2 + $0xf0] sm:$0xff]
    %v1557 = vld [vmem:[#allocation2 + $0xf8] sm:$0xff]
    %v1558 = vld [vmem:[#allocation3] sm:$0x1]
    %v1559 = vld [vmem:[#allocation4] sm:$0xff]
    %v1560 = vld [vmem:[#allocation4 + $0x8] sm:$0xff]
    %v1561 = vld [vmem:[#allocation4 + $0x10] sm:$0xff]
    %v1562 = vld [vmem:[#allocation4 + $0x18] sm:$0xff]
    %v1563 = vld [vmem:[#allocation4 + $0x20] sm:$0xff]
    %v1564 = vld [vmem:[#allocation4 + $0x28] sm:$0xff]
    %v1565 = vld [vmem:[#allocation4 + $0x30] sm:$0xff]
    %v1566 = vld [vmem:[#allocation4 + $0x38] sm:$0xff]
    %v1567 = vld [vmem:[#allocation4 + $0x40] sm:$0xff]
    %v1568 = vld [vmem:[#allocation4 + $0x48] sm:$0xff]
    %v1569 = vld [vmem:[#allocation4 + $0x50] sm:$0xff]
    %v1570 = vld [vmem:[#allocation4 + $0x58] sm:$0xff]
    %v1571 = vld [vmem:[#allocation4 + $0x60] sm:$0xff]
    %v1572 = vld [vmem:[#allocation4 + $0x68] sm:$0xff]
    %v1573 = vld [vmem:[#allocation4 + $0x70] sm:$0xff]
    %v1574 = vld [vmem:[#allocation4 + $0x78] sm:$0xff]
    %v1575 = vld [vmem:[#allocation5] sm:$0x1]
    %v1577 = vlaneseq
    %v1578 = vshrl.u32 %v1577, 7
    %v1579 = vsub.s32 0, %v1578
    %v1580 = vrot.slane %v1558, %v1579
    %1582 = vmatprep.subr.mxu0 0.0
    %1583 = vmatpush1.msra.mxu0 %v1526
    %1584 = vmatprep.subr.mxu0 0.0
    %1585 = vmatpush1.msra.mxu0 %v1527
    %1586 = vmatprep.subr.mxu0 0.0
    %1587 = vmatpush1.msra.mxu0 %v1528
    %1588 = vmatprep.subr.mxu0 0.0
    %1589 = vmatpush1.msra.mxu0 %v1529
    %1590 = vmatprep.subr.mxu0 0.0
    %1591 = vmatpush1.msra.mxu0 %v1530
    %1592 = vmatprep.subr.mxu0 0.0
    %1593 = vmatpush1.msra.mxu0 %v1531
    %1594 = vmatprep.subr.mxu0 0.0
    %1595 = vmatpush1.msra.mxu0 %v1532
    %1596 = vmatprep.subr.mxu0 0.0
    %1597 = vmatpush1.msra.mxu0 %v1533
    %1598 = vmatprep.subr.mxu0 0.0
    %1599 = vmatpush1.msra.mxu0 %v1534
    %1600 = vmatprep.subr.mxu0 0.0
    %1601 = vmatpush1.msra.mxu0 %v1535
    %1602 = vmatprep.subr.mxu0 0.0
    %1603 = vmatpush1.msra.mxu0 %v1536
    %1604 = vmatprep.subr.mxu0 0.0
    %1605 = vmatpush1.msra.mxu0 %v1537
    %1606 = vmatprep.subr.mxu0 0.0
    %1607 = vmatpush1.msra.mxu0 %v1538
    %1608 = vmatprep.subr.mxu0 0.0
    %1609 = vmatpush1.msra.mxu0 %v1539
    %1610 = vmatprep.subr.mxu0 0.0
    %1611 = vmatpush1.msra.mxu0 %v1540
    %1612 = vmatprep.subr.mxu0 0.0
    %1613 = vmatpush1.msra.mxu0 %v1541
    %1614 = vmatprep.subr.mxu0 0.0
    %1615 = vmatpush1.msra.mxu0 %v1542
    %1616 = vmatprep.subr.mxu0 0.0
    %1617 = vmatpush1.msra.mxu0 %v1543
    %1618 = vmatprep.subr.mxu0 0.0
    %1619 = vmatpush1.msra.mxu0 %v1544
    %1620 = vmatprep.subr.mxu0 0.0
    %1621 = vmatpush1.msra.mxu0 %v1545
    %1622 = vmatprep.subr.mxu0 0.0
    %1623 = vmatpush1.msra.mxu0 %v1546
    %1624 = vmatprep.subr.mxu0 0.0
    %1625 = vmatpush1.msra.mxu0 %v1547
    %1626 = vmatprep.subr.mxu0 0.0
    %1627 = vmatpush1.msra.mxu0 %v1548
    %1628 = vmatprep.subr.mxu0 0.0
    %1629 = vmatpush1.msra.mxu0 %v1549
    %1630 = vmatprep.subr.mxu0 0.0
    %1631 = vmatpush1.msra.mxu0 %v1550
    %1632 = vmatprep.subr.mxu0 0.0
    %1633 = vmatpush1.msra.mxu0 %v1551
    %1634 = vmatprep.subr.mxu0 0.0
    %1635 = vmatpush1.msra.mxu0 %v1552
    %1636 = vmatprep.subr.mxu0 0.0
    %1637 = vmatpush1.msra.mxu0 %v1553
    %1638 = vmatprep.subr.mxu0 0.0
    %1639 = vmatpush1.msra.mxu0 %v1554
    %1640 = vmatprep.subr.mxu0 0.0
    %1641 = vmatpush1.msra.mxu0 %v1555
    %1642 = vmatprep.subr.mxu0 0.0
    %1643 = vmatpush1.msra.mxu0 %v1556
    %1644 = vmatprep.subr.mxu0 0.0
    %1645 = vmatpush1.msra.mxu0 %v1557
    %1646 = vmatprep.mubr.f32.mxu0 %v74
    %1647 = vmatmul.mubr.f32.gmra.mrb[0].mxu0 %v73
    %v1648 = vpop.f32.mrb[0].mxu0
    %v1649 = vadd.f32 %v1580, %v1648
    %v1650 = vpop.f32.mrb[0].mxu0
    %1651 = vmatprep.mubr.f32.mxu0 %v76
    %1652 = vmatmul.mubr.f32.gmra.mrb[0].mxu0 %v75
    %v1653 = vpop.f32.mrb[0].mxu0
    %v1654 = vadd.f32 %v1580, %v1653
    %v1655 = vpop.f32.mrb[0].mxu0
    %1656 = vdwg.mxu0
    %v1657 = vmax.f32 %v1649, 0.0
    %v1658 = vmax.f32 %v1654, 0.0
    %v1660 = vlaneseq
    %v1661 = vshrl.u32 %v1660, 7
    %v1662 = vsub.s32 0, %v1661
    %v1663 = vrot.slane %v1575, %v1662
    %1665 = vmatprep.subr.mxu0 0.0
    %1666 = vmatpush1.msra.mxu0 %v1559
    %1667 = vmatprep.subr.mxu0 0.0
    %1668 = vmatpush1.msra.mxu0 %v1560
    %1669 = vmatprep.subr.mxu0 0.0
    %1670 = vmatpush1.msra.mxu0 %v1561
    %1671 = vmatprep.subr.mxu0 0.0
    %1672 = vmatpush1.msra.mxu0 %v1562
    %1673 = vmatprep.subr.mxu0 0.0
    %1674 = vmatpush1.msra.mxu0 %v1563
    %1675 = vmatprep.subr.mxu0 0.0
    %1676 = vmatpush1.msra.mxu0 %v1564
    %1677 = vmatprep.subr.mxu0 0.0
    %1678 = vmatpush1.msra.mxu0 %v1565
    %1679 = vmatprep.subr.mxu0 0.0
    %1680 = vmatpush1.msra.mxu0 %v1566
    %1681 = vmatprep.subr.mxu0 0.0
    %1682 = vmatpush1.msra.mxu0 %v1567
    %1683 = vmatprep.subr.mxu0 0.0
    %1684 = vmatpush1.msra.mxu0 %v1568
    %1685 = vmatprep.subr.mxu0 0.0
    %1686 = vmatpush1.msra.mxu0 %v1569
    %1687 = vmatprep.subr.mxu0 0.0
    %1688 = vmatpush1.msra.mxu0 %v1570
    %1689 = vmatprep.subr.mxu0 0.0
    %1690 = vmatpush1.msra.mxu0 %v1571
    %1691 = vmatprep.subr.mxu0 0.0
    %1692 = vmatpush1.msra.mxu0 %v1572
    %1693 = vmatprep.subr.mxu0 0.0
    %1694 = vmatpush1.msra.mxu0 %v1573
    %1695 = vmatprep.subr.mxu0 0.0
    %1696 = vmatpush1.msra.mxu0 %v1574
    %1697 = vmatprep.subr.mxu0 0.0
    %1698 = vmatpush1.msra.mxu0 0.0
    %1699 = vmatprep.subr.mxu0 0.0
    %1700 = vmatpush1.msra.mxu0 0.0
    %1701 = vmatprep.subr.mxu0 0.0
    %1702 = vmatpush1.msra.mxu0 0.0
    %1703 = vmatprep.subr.mxu0 0.0
    %1704 = vmatpush1.msra.mxu0 0.0
    %1705 = vmatprep.subr.mxu0 0.0
    %1706 = vmatpush1.msra.mxu0 0.0
    %1707 = vmatprep.subr.mxu0 0.0
    %1708 = vmatpush1.msra.mxu0 0.0
    %1709 = vmatprep.subr.mxu0 0.0
    %1710 = vmatpush1.msra.mxu0 0.0
    %1711 = vmatprep.subr.mxu0 0.0
    %1712 = vmatpush1.msra.mxu0 0.0
    %1713 = vmatprep.subr.mxu0 0.0
    %1714 = vmatpush1.msra.mxu0 0.0
    %1715 = vmatprep.subr.mxu0 0.0
    %1716 = vmatpush1.msra.mxu0 0.0
    %1717 = vmatprep.subr.mxu0 0.0
    %1718 = vmatpush1.msra.mxu0 0.0
    %1719 = vmatprep.subr.mxu0 0.0
    %1720 = vmatpush1.msra.mxu0 0.0
    %1721 = vmatprep.subr.mxu0 0.0
    %1722 = vmatpush1.msra.mxu0 0.0
    %1723 = vmatprep.subr.mxu0 0.0
    %1724 = vmatpush1.msra.mxu0 0.0
    %1725 = vmatprep.subr.mxu0 0.0
    %1726 = vmatpush1.msra.mxu0 0.0
    %1727 = vmatprep.subr.mxu0 0.0
    %1728 = vmatpush1.msra.mxu0 0.0
    %1729 = vmatprep.mubr.f32.mxu0 0.0
    %1730 = vmatmul.mubr.f32.gmra.mrb[0].mxu0 %v1657
    %v1731 = vpop.f32.mrb[0].mxu0
    %v1732 = vadd.f32 %v1663, %v1731
    %v1733 = vpop.f32.mrb[0].mxu0
    %1734 = vmatprep.mubr.f32.mxu0 0.0
    %1735 = vmatmul.mubr.f32.gmra.mrb[0].mxu0 %v1658
    %v1736 = vpop.f32.mrb[0].mxu0
    %v1737 = vadd.f32 %v1663, %v1736
    %v1738 = vpop.f32.mrb[0].mxu0
    %1739 = vdwg.mxu0
    %v1740 = vadd.f32 %v1732, %v83
    %v1741 = vadd.f32 %v1737, %v83
    %1742 = vmax.xlane.f32.xlu0 %v1740
    %v1743 = vpop.xlane.xlu0 %1742
    %v1744 = vsel %vm408, %v1741, -inf
    %1745 = vmax.xlane.f32.xlu0 %v1744
    %v1746 = vpop.xlane.xlu0 %1745
    %vm1747 = vcmp.ge.f32.partialorder %v1740, %v1743
    %vm1748 = vcmp.ge.f32.partialorder %v1741, %v1746
    %v1749 = vsel %vm1747, %v81, 128
    %v1750 = vsel %vm1748, %v81, 128
    %v1751 = vand.u32 %v1749, 65535
    %v1752 = vshra.s32 %v1749, 16
    %v1753 = vcvt.s32.f32 %v1751
    %v1754 = vcvt.s32.f32 %v1752
    %1755 = vmin.xlane.f32.xlu0 %v1754
    %v1756 = vpop.xlane.xlu0 %1755
    %vm1757 = vcmp.eq.f32.partialorder %v1754, %v1756
    %v1758 = vsel %vm1757, %v1753, inf
    %1759 = vmin.xlane.f32.xlu0 %v1758
    %v1760 = vpop.xlane.xlu0 %1759
    %v1761 = vcvt.f32.s32 %v1760
    %v1762 = vcvt.f32.s32 %v1756
    %v1763 = vshll.u32 %v1762, 16
    %v1764 = vadd.s32 %v1763, %v1761
    %v1765 = vsel %vm408, %v1750, 2147483647
    %v1766 = vand.u32 %v1765, 65535
    %v1767 = vshra.s32 %v1765, 16
    %v1768 = vcvt.s32.f32 %v1766
    %v1769 = vcvt.s32.f32 %v1767
    %1770 = vmin.xlane.f32.xlu0 %v1769
    %v1771 = vpop.xlane.xlu0 %1770
    %vm1772 = vcmp.eq.f32.partialorder %v1769, %v1771
    %v1773 = vsel %vm1772, %v1768, inf
    %1774 = vmin.xlane.f32.xlu0 %v1773
    %v1775 = vpop.xlane.xlu0 %1774
    %v1776 = vcvt.f32.s32 %v1775
    %v1777 = vcvt.f32.s32 %v1771
    %v1778 = vshll.u32 %v1777, 16
    %v1779 = vadd.s32 %v1778, %v1776
    %vm1780 = vcmp.eq.s32.totalorder %v1764, %v78
    %vm1781 = vcmp.eq.s32.totalorder %v1779, %v79
    %v1782 = vsel %vm1780, 1, 0
    %v1783 = vsel %vm1781, 1, 0
    %v1784 = vcvt.s32.f32 %v1782
    %v1785 = vcvt.s32.f32 %v1783
    %1788 = vrot.lane.b32.xlu0 %v1784, 1
    %v1789 = vpop.permute.xlu0 %1788
    %1790 = vrot.lane.b32.xlu0 %v1785, 1
    %v1791 = vpop.permute.xlu0 %1790
    %vm1794 = vcmask 15368
    %1795 = vst.msk [vmem:[%s8] sm:$0xff] %vm1794, %v1789
    %vm1796 = vcmask 14344
    %1797 = vst.msk [vmem:[%s8 + $0x8] sm:$0x7f] %vm1796, %v1791
    %v1798 = vld [vmem:[#allocation2] sm:$0xff]
    %v1799 = vld [vmem:[#allocation2 + $0x8] sm:$0xff]
    %v1800 = vld [vmem:[#allocation2 + $0x10] sm:$0xff]
    %v1801 = vld [vmem:[#allocation2 + $0x18] sm:$0xff]
    %v1802 = vld [vmem:[#allocation2 + $0x20] sm:$0xff]
    %v1803 = vld [vmem:[#allocation2 + $0x28] sm:$0xff]
    %v1804 = vld [vmem:[#allocation2 + $0x30] sm:$0xff]
    %v1805 = vld [vmem:[#allocation2 + $0x38] sm:$0xff]
    %v1806 = vld [vmem:[#allocation2 + $0x40] sm:$0xff]
    %v1807 = vld [vmem:[#allocation2 + $0x48] sm:$0xff]
    %v1808 = vld [vmem:[#allocation2 + $0x50] sm:$0xff]
    %v1809 = vld [vmem:[#allocation2 + $0x58] sm:$0xff]
    %v1810 = vld [vmem:[#allocation2 + $0x60] sm:$0xff]
    %v1811 = vld [vmem:[#allocation2 + $0x68] sm:$0xff]
    %v1812 = vld [vmem:[#allocation2 + $0x70] sm:$0xff]
    %v1813 = vld [vmem:[#allocation2 + $0x78] sm:$0xff]
    %v1814 = vld [vmem:[#allocation2 + $0x80] sm:$0xff]
    %v1815 = vld [vmem:[#allocation2 + $0x88] sm:$0xff]
    %v1816 = vld [vmem:[#allocation2 + $0x90] sm:$0xff]
    %v1817 = vld [vmem:[#allocation2 + $0x98] sm:$0xff]
    %v1818 = vld [vmem:[#allocation2 + $0xa0] sm:$0xff]
    %v1819 = vld [vmem:[#allocation2 + $0xa8] sm:$0xff]
    %v1820 = vld [vmem:[#allocation2 + $0xb0] sm:$0xff]
    %v1821 = vld [vmem:[#allocation2 + $0xb8] sm:$0xff]
    %v1822 = vld [vmem:[#allocation2 + $0xc0] sm:$0xff]
    %v1823 = vld [vmem:[#allocation2 + $0xc8] sm:$0xff]
    %v1824 = vld [vmem:[#allocation2 + $0xd0] sm:$0xff]
    %v1825 = vld [vmem:[#allocation2 + $0xd8] sm:$0xff]
    %v1826 = vld [vmem:[#allocation2 + $0xe0] sm:$0xff]
    %v1827 = vld [vmem:[#allocation2 + $0xe8] sm:$0xff]
    %v1828 = vld [vmem:[#allocation2 + $0xf0] sm:$0xff]
    %v1829 = vld [vmem:[#allocation2 + $0xf8] sm:$0xff]
    %v1830 = vld [vmem:[#allocation3] sm:$0x1]
    %v1831 = vld [vmem:[#allocation4] sm:$0xff]
    %v1832 = vld [vmem:[#allocation4 + $0x8] sm:$0xff]
    %v1833 = vld [vmem:[#allocation4 + $0x10] sm:$0xff]
    %v1834 = vld [vmem:[#allocation4 + $0x18] sm:$0xff]
    %v1835 = vld [vmem:[#allocation4 + $0x20] sm:$0xff]
    %v1836 = vld [vmem:[#allocation4 + $0x28] sm:$0xff]
    %v1837 = vld [vmem:[#allocation4 + $0x30] sm:$0xff]
    %v1838 = vld [vmem:[#allocation4 + $0x38] sm:$0xff]
    %v1839 = vld [vmem:[#allocation4 + $0x40] sm:$0xff]
    %v1840 = vld [vmem:[#allocation4 + $0x48] sm:$0xff]
    %v1841 = vld [vmem:[#allocation4 + $0x50] sm:$0xff]
    %v1842 = vld [vmem:[#allocation4 + $0x58] sm:$0xff]
    %v1843 = vld [vmem:[#allocation4 + $0x60] sm:$0xff]
    %v1844 = vld [vmem:[#allocation4 + $0x68] sm:$0xff]
    %v1845 = vld [vmem:[#allocation4 + $0x70] sm:$0xff]
    %v1846 = vld [vmem:[#allocation4 + $0x78] sm:$0xff]
    %v1847 = vld [vmem:[#allocation5] sm:$0x1]
    %v1849 = vlaneseq
    %v1850 = vshrl.u32 %v1849, 7
    %v1851 = vsub.s32 0, %v1850
    %v1852 = vrot.slane %v1830, %v1851
    %1854 = vmatprep.subr.mxu0 0.0
    %1855 = vmatpush1.msra.mxu0 %v1798
    %1856 = vmatprep.subr.mxu0 0.0
    %1857 = vmatpush1.msra.mxu0 %v1799
    %1858 = vmatprep.subr.mxu0 0.0
    %1859 = vmatpush1.msra.mxu0 %v1800
    %1860 = vmatprep.subr.mxu0 0.0
    %1861 = vmatpush1.msra.mxu0 %v1801
    %1862 = vmatprep.subr.mxu0 0.0
    %1863 = vmatpush1.msra.mxu0 %v1802
    %1864 = vmatprep.subr.mxu0 0.0
    %1865 = vmatpush1.msra.mxu0 %v1803
    %1866 = vmatprep.subr.mxu0 0.0
    %1867 = vmatpush1.msra.mxu0 %v1804
    %1868 = vmatprep.subr.mxu0 0.0
    %1869 = vmatpush1.msra.mxu0 %v1805
    %1870 = vmatprep.subr.mxu0 0.0
    %1871 = vmatpush1.msra.mxu0 %v1806
    %1872 = vmatprep.subr.mxu0 0.0
    %1873 = vmatpush1.msra.mxu0 %v1807
    %1874 = vmatprep.subr.mxu0 0.0
    %1875 = vmatpush1.msra.mxu0 %v1808
    %1876 = vmatprep.subr.mxu0 0.0
    %1877 = vmatpush1.msra.mxu0 %v1809
    %1878 = vmatprep.subr.mxu0 0.0
    %1879 = vmatpush1.msra.mxu0 %v1810
    %1880 = vmatprep.subr.mxu0 0.0
    %1881 = vmatpush1.msra.mxu0 %v1811
    %1882 = vmatprep.subr.mxu0 0.0
    %1883 = vmatpush1.msra.mxu0 %v1812
    %1884 = vmatprep.subr.mxu0 0.0
    %1885 = vmatpush1.msra.mxu0 %v1813
    %1886 = vmatprep.subr.mxu0 0.0
    %1887 = vmatpush1.msra.mxu0 %v1814
    %1888 = vmatprep.subr.mxu0 0.0
    %1889 = vmatpush1.msra.mxu0 %v1815
    %1890 = vmatprep.subr.mxu0 0.0
    %1891 = vmatpush1.msra.mxu0 %v1816
    %1892 = vmatprep.subr.mxu0 0.0
    %1893 = vmatpush1.msra.mxu0 %v1817
    %1894 = vmatprep.subr.mxu0 0.0
    %1895 = vmatpush1.msra.mxu0 %v1818
    %1896 = vmatprep.subr.mxu0 0.0
    %1897 = vmatpush1.msra.mxu0 %v1819
    %1898 = vmatprep.subr.mxu0 0.0
    %1899 = vmatpush1.msra.mxu0 %v1820
    %1900 = vmatprep.subr.mxu0 0.0
    %1901 = vmatpush1.msra.mxu0 %v1821
    %1902 = vmatprep.subr.mxu0 0.0
    %1903 = vmatpush1.msra.mxu0 %v1822
    %1904 = vmatprep.subr.mxu0 0.0
    %1905 = vmatpush1.msra.mxu0 %v1823
    %1906 = vmatprep.subr.mxu0 0.0
    %1907 = vmatpush1.msra.mxu0 %v1824
    %1908 = vmatprep.subr.mxu0 0.0
    %1909 = vmatpush1.msra.mxu0 %v1825
    %1910 = vmatprep.subr.mxu0 0.0
    %1911 = vmatpush1.msra.mxu0 %v1826
    %1912 = vmatprep.subr.mxu0 0.0
    %1913 = vmatpush1.msra.mxu0 %v1827
    %1914 = vmatprep.subr.mxu0 0.0
    %1915 = vmatpush1.msra.mxu0 %v1828
    %1916 = vmatprep.subr.mxu0 0.0
    %1917 = vmatpush1.msra.mxu0 %v1829
    %1918 = vmatprep.mubr.f32.mxu0 %v72
    %1919 = vmatmul.mubr.f32.gmra.mrb[0].mxu0 %v71
    %v1920 = vpop.f32.mrb[0].mxu0
    %v1921 = vadd.f32 %v1852, %v1920
    %v1922 = vpop.f32.mrb[0].mxu0
    %1923 = vdwg.mxu0
    %v1924 = vmax.f32 %v1921, 0.0
    %v1926 = vlaneseq
    %v1927 = vshrl.u32 %v1926, 7
    %v1928 = vsub.s32 0, %v1927
    %v1929 = vrot.slane %v1847, %v1928
    %1931 = vmatprep.subr.mxu0 0.0
    %1932 = vmatpush1.msra.mxu0 %v1831
    %1933 = vmatprep.subr.mxu0 0.0
    %1934 = vmatpush1.msra.mxu0 %v1832
    %1935 = vmatprep.subr.mxu0 0.0
    %1936 = vmatpush1.msra.mxu0 %v1833
    %1937 = vmatprep.subr.mxu0 0.0
    %1938 = vmatpush1.msra.mxu0 %v1834
    %1939 = vmatprep.subr.mxu0 0.0
    %1940 = vmatpush1.msra.mxu0 %v1835
    %1941 = vmatprep.subr.mxu0 0.0
    %1942 = vmatpush1.msra.mxu0 %v1836
    %1943 = vmatprep.subr.mxu0 0.0
    %1944 = vmatpush1.msra.mxu0 %v1837
    %1945 = vmatprep.subr.mxu0 0.0
    %1946 = vmatpush1.msra.mxu0 %v1838
    %1947 = vmatprep.subr.mxu0 0.0
    %1948 = vmatpush1.msra.mxu0 %v1839
    %1949 = vmatprep.subr.mxu0 0.0
    %1950 = vmatpush1.msra.mxu0 %v1840
    %1951 = vmatprep.subr.mxu0 0.0
    %1952 = vmatpush1.msra.mxu0 %v1841
    %1953 = vmatprep.subr.mxu0 0.0
    %1954 = vmatpush1.msra.mxu0 %v1842
    %1955 = vmatprep.subr.mxu0 0.0
    %1956 = vmatpush1.msra.mxu0 %v1843
    %1957 = vmatprep.subr.mxu0 0.0
    %1958 = vmatpush1.msra.mxu0 %v1844
    %1959 = vmatprep.subr.mxu0 0.0
    %1960 = vmatpush1.msra.mxu0 %v1845
    %1961 = vmatprep.subr.mxu0 0.0
    %1962 = vmatpush1.msra.mxu0 %v1846
    %1963 = vmatprep.subr.mxu0 0.0
    %1964 = vmatpush1.msra.mxu0 0.0
    %1965 = vmatprep.subr.mxu0 0.0
    %1966 = vmatpush1.msra.mxu0 0.0
    %1967 = vmatprep.subr.mxu0 0.0
    %1968 = vmatpush1.msra.mxu0 0.0
    %1969 = vmatprep.subr.mxu0 0.0
    %1970 = vmatpush1.msra.mxu0 0.0
    %1971 = vmatprep.subr.mxu0 0.0
    %1972 = vmatpush1.msra.mxu0 0.0
    %1973 = vmatprep.subr.mxu0 0.0
    %1974 = vmatpush1.msra.mxu0 0.0
    %1975 = vmatprep.subr.mxu0 0.0
    %1976 = vmatpush1.msra.mxu0 0.0
    %1977 = vmatprep.subr.mxu0 0.0
    %1978 = vmatpush1.msra.mxu0 0.0
    %1979 = vmatprep.subr.mxu0 0.0
    %1980 = vmatpush1.msra.mxu0 0.0
    %1981 = vmatprep.subr.mxu0 0.0
    %1982 = vmatpush1.msra.mxu0 0.0
    %1983 = vmatprep.subr.mxu0 0.0
    %1984 = vmatpush1.msra.mxu0 0.0
    %1985 = vmatprep.subr.mxu0 0.0
    %1986 = vmatpush1.msra.mxu0 0.0
    %1987 = vmatprep.subr.mxu0 0.0
    %1988 = vmatpush1.msra.mxu0 0.0
    %1989 = vmatprep.subr.mxu0 0.0
    %1990 = vmatpush1.msra.mxu0 0.0
    %1991 = vmatprep.subr.mxu0 0.0
    %1992 = vmatpush1.msra.mxu0 0.0
    %1993 = vmatprep.subr.mxu0 0.0
    %1994 = vmatpush1.msra.mxu0 0.0
    %1995 = vmatprep.mubr.f32.mxu0 0.0
    %1996 = vmatmul.mubr.f32.gmra.mrb[0].mxu0 %v1924
    %v1997 = vpop.f32.mrb[0].mxu0
    %v1998 = vadd.f32 %v1929, %v1997
    %v1999 = vpop.f32.mrb[0].mxu0
    %2000 = vdwg.mxu0
    %v2001 = vadd.f32 %v1998, %v83
    %v2002 = vsel %vm659, %v2001, -inf
    %2003 = vmax.xlane.f32.xlu0 %v2002
    %v2004 = vpop.xlane.xlu0 %2003
    %v2005 = vsub.f32 %v2001, %v2004
    %v2006 = vmul.f32 %v2005, 1.442695
    %v2007 = vpow.pop %v2006
    %v2008 = vsel %vm659, %v2007, 0.0
    %2009 = vadd.xlane.f32.xlu0 %v2008
    %v2010 = vpop.xlane.xlu0 %2009
    %v2011 = vrcp.pop %v2010
    %v2012 = vmul.f32 %v2007, %v2011
    %v2013 = vsub.f32 %v2012, %v89
    %v2014 = vmul.f32 %v2013, 0.2
    %2015 = vxpose.xlu0.b32.start [1/16] %v1924, 128
    %2016 = vxpose.xlu0.b32.cont [2/16] 0.0, 128
    %2017 = vxpose.xlu0.b32.cont [3/16] 0.0, 128
    %2018 = vxpose.xlu0.b32.cont [4/16] 0.0, 128
    %2019 = vxpose.xlu0.b32.cont [5/16] 0.0, 128
    %2020 = vxpose.xlu0.b32.cont [6/16] 0.0, 128
    %2021 = vxpose.xlu0.b32.cont [7/16] 0.0, 128
    %2022 = vxpose.xlu0.b32.cont [8/16] 0.0, 128
    %2023 = vxpose.xlu0.b32.cont [9/16] 0.0, 128
    %2024 = vxpose.xlu0.b32.cont [10/16] 0.0, 128
    %2025 = vxpose.xlu0.b32.cont [11/16] 0.0, 128
    %2026 = vxpose.xlu0.b32.cont [12/16] 0.0, 128
    %2027 = vxpose.xlu0.b32.cont [13/16] 0.0, 128
    %2028 = vxpose.xlu0.b32.cont [14/16] 0.0, 128
    %2029 = vxpose.xlu0.b32.cont [15/16] 0.0, 128
    %2030 = vxpose.xlu0.b32.end [16/16] 0.0, 128
    %v2031 = vpop.trf.xlu0
    %v2032 = vpop.trf.xlu0
    %v2033 = vpop.trf.xlu0
    %v2034 = vpop.trf.xlu0
    %v2035 = vpop.trf.xlu0
    %v2036 = vpop.trf.xlu0
    %v2037 = vpop.trf.xlu0
    %v2038 = vpop.trf.xlu0
    %v2039 = vpop.trf.xlu0
    %v2040 = vpop.trf.xlu0
    %v2041 = vpop.trf.xlu0
    %v2042 = vpop.trf.xlu0
    %v2043 = vpop.trf.xlu0
    %v2044 = vpop.trf.xlu0
    %v2045 = vpop.trf.xlu0
    %v2046 = vpop.trf.xlu0
    %v2048 = vsel %vm705, %v2031, 0
    %v2051 = vsel %vm705, %v2032, 0
    %v2054 = vsel %vm705, %v2033, 0
    %v2057 = vsel %vm705, %v2034, 0
    %v2060 = vsel %vm705, %v2035, 0
    %v2063 = vsel %vm705, %v2036, 0
    %v2066 = vsel %vm705, %v2037, 0
    %v2069 = vsel %vm705, %v2038, 0
    %v2072 = vsel %vm705, %v2039, 0
    %v2075 = vsel %vm705, %v2040, 0
    %v2078 = vsel %vm705, %v2041, 0
    %v2081 = vsel %vm705, %v2042, 0
    %v2084 = vsel %vm705, %v2043, 0
    %v2087 = vsel %vm705, %v2044, 0
    %v2090 = vsel %vm705, %v2045, 0
    %v2093 = vsel %vm705, %v2046, 0
    %v2096 = vsel %vm659, %v2014, 0
    %2098 = vmatprep.subr.mxu0 0.0
    %2099 = vmatpush1.msra.mxu0 %v2096
    %2100 = vmatprep.subr.mxu0 0.0
    %2101 = vmatpush1.msra.mxu0 0.0
    %2102 = vmatprep.subr.mxu0 0.0
    %2103 = vmatpush1.msra.mxu0 0.0
    %2104 = vmatprep.subr.mxu0 0.0
    %2105 = vmatpush1.msra.mxu0 0.0
    %2106 = vmatprep.subr.mxu0 0.0
    %2107 = vmatpush1.msra.mxu0 0.0
    %2108 = vmatprep.subr.mxu0 0.0
    %2109 = vmatpush1.msra.mxu0 0.0
    %2110 = vmatprep.subr.mxu0 0.0
    %2111 = vmatpush1.msra.mxu0 0.0
    %2112 = vmatprep.subr.mxu0 0.0
    %2113 = vmatpush1.msra.mxu0 0.0
    %2114 = vmatprep.subr.mxu0 0.0
    %2115 = vmatpush1.msra.mxu0 0.0
    %2116 = vmatprep.subr.mxu0 0.0
    %2117 = vmatpush1.msra.mxu0 0.0
    %2118 = vmatprep.subr.mxu0 0.0
    %2119 = vmatpush1.msra.mxu0 0.0
    %2120 = vmatprep.subr.mxu0 0.0
    %2121 = vmatpush1.msra.mxu0 0.0
    %2122 = vmatprep.subr.mxu0 0.0
    %2123 = vmatpush1.msra.mxu0 0.0
    %2124 = vmatprep.subr.mxu0 0.0
    %2125 = vmatpush1.msra.mxu0 0.0
    %2126 = vmatprep.subr.mxu0 0.0
    %2127 = vmatpush1.msra.mxu0 0.0
    %2128 = vmatprep.subr.mxu0 0.0
    %2129 = vmatpush1.msra.mxu0 0.0
    %2130 = vmatprep.subr.mxu0 0.0
    %2131 = vmatpush1.msra.mxu0 0.0
    %2132 = vmatprep.subr.mxu0 0.0
    %2133 = vmatpush1.msra.mxu0 0.0
    %2134 = vmatprep.subr.mxu0 0.0
    %2135 = vmatpush1.msra.mxu0 0.0
    %2136 = vmatprep.subr.mxu0 0.0
    %2137 = vmatpush1.msra.mxu0 0.0
    %2138 = vmatprep.subr.mxu0 0.0
    %2139 = vmatpush1.msra.mxu0 0.0
    %2140 = vmatprep.subr.mxu0 0.0
    %2141 = vmatpush1.msra.mxu0 0.0
    %2142 = vmatprep.subr.mxu0 0.0
    %2143 = vmatpush1.msra.mxu0 0.0
    %2144 = vmatprep.subr.mxu0 0.0
    %2145 = vmatpush1.msra.mxu0 0.0
    %2146 = vmatprep.subr.mxu0 0.0
    %2147 = vmatpush1.msra.mxu0 0.0
    %2148 = vmatprep.subr.mxu0 0.0
    %2149 = vmatpush1.msra.mxu0 0.0
    %2150 = vmatprep.subr.mxu0 0.0
    %2151 = vmatpush1.msra.mxu0 0.0
    %2152 = vmatprep.subr.mxu0 0.0
    %2153 = vmatpush1.msra.mxu0 0.0
    %2154 = vmatprep.subr.mxu0 0.0
    %2155 = vmatpush1.msra.mxu0 0.0
    %2156 = vmatprep.subr.mxu0 0.0
    %2157 = vmatpush1.msra.mxu0 0.0
    %2158 = vmatprep.subr.mxu0 0.0
    %2159 = vmatpush1.msra.mxu0 0.0
    %2160 = vmatprep.subr.mxu0 0.0
    %2161 = vmatpush1.msra.mxu0 0.0
    %2162 = vmatprep.mubr.f32.mxu0 0.0
    %2163 = vmatmul.mubr.f32.gmra.mrb[0].mxu0 %v2048
    %v2164 = vpop.f32.mrb[0].mxu0
    %v2165 = vadd.f32 0.0, %v2164
    %v2166 = vpop.f32.mrb[0].mxu0
    %2167 = vmatprep.mubr.f32.mxu0 0.0
    %2168 = vmatmul.mubr.f32.gmra.mrb[0].mxu0 %v2051
    %v2169 = vpop.f32.mrb[0].mxu0
    %v2170 = vadd.f32 0.0, %v2169
    %v2171 = vpop.f32.mrb[0].mxu0
    %2172 = vmatprep.mubr.f32.mxu0 0.0
    %2173 = vmatmul.mubr.f32.gmra.mrb[0].mxu0 %v2054
    %v2174 = vpop.f32.mrb[0].mxu0
    %v2175 = vadd.f32 0.0, %v2174
    %v2176 = vpop.f32.mrb[0].mxu0
    %2177 = vmatprep.mubr.f32.mxu0 0.0
    %2178 = vmatmul.mubr.f32.gmra.mrb[0].mxu0 %v2057
    %v2179 = vpop.f32.mrb[0].mxu0
    %v2180 = vadd.f32 0.0, %v2179
    %v2181 = vpop.f32.mrb[0].mxu0
    %2182 = vmatprep.mubr.f32.mxu0 0.0
    %2183 = vmatmul.mubr.f32.gmra.mrb[0].mxu0 %v2060
    %v2184 = vpop.f32.mrb[0].mxu0
    %v2185 = vadd.f32 0.0, %v2184
    %v2186 = vpop.f32.mrb[0].mxu0
    %2187 = vmatprep.mubr.f32.mxu0 0.0
    %2188 = vmatmul.mubr.f32.gmra.mrb[0].mxu0 %v2063
    %v2189 = vpop.f32.mrb[0].mxu0
    %v2190 = vadd.f32 0.0, %v2189
    %v2191 = vpop.f32.mrb[0].mxu0
    %2192 = vmatprep.mubr.f32.mxu0 0.0
    %2193 = vmatmul.mubr.f32.gmra.mrb[0].mxu0 %v2066
    %v2194 = vpop.f32.mrb[0].mxu0
    %v2195 = vadd.f32 0.0, %v2194
    %v2196 = vpop.f32.mrb[0].mxu0
    %2197 = vmatprep.mubr.f32.mxu0 0.0
    %2198 = vmatmul.mubr.f32.gmra.mrb[0].mxu0 %v2069
    %v2199 = vpop.f32.mrb[0].mxu0
    %v2200 = vadd.f32 0.0, %v2199
    %v2201 = vpop.f32.mrb[0].mxu0
    %2202 = vmatprep.mubr.f32.mxu0 0.0
    %2203 = vmatmul.mubr.f32.gmra.mrb[0].mxu0 %v2072
    %v2204 = vpop.f32.mrb[0].mxu0
    %v2205 = vadd.f32 0.0, %v2204
    %v2206 = vpop.f32.mrb[0].mxu0
    %2207 = vmatprep.mubr.f32.mxu0 0.0
    %2208 = vmatmul.mubr.f32.gmra.mrb[0].mxu0 %v2075
    %v2209 = vpop.f32.mrb[0].mxu0
    %v2210 = vadd.f32 0.0, %v2209
    %v2211 = vpop.f32.mrb[0].mxu0
    %2212 = vmatprep.mubr.f32.mxu0 0.0
    %2213 = vmatmul.mubr.f32.gmra.mrb[0].mxu0 %v2078
    %v2214 = vpop.f32.mrb[0].mxu0
    %v2215 = vadd.f32 0.0, %v2214
    %v2216 = vpop.f32.mrb[0].mxu0
    %2217 = vmatprep.mubr.f32.mxu0 0.0
    %2218 = vmatmul.mubr.f32.gmra.mrb[0].mxu0 %v2081
    %v2219 = vpop.f32.mrb[0].mxu0
    %v2220 = vadd.f32 0.0, %v2219
    %v2221 = vpop.f32.mrb[0].mxu0
    %2222 = vmatprep.mubr.f32.mxu0 0.0
    %2223 = vmatmul.mubr.f32.gmra.mrb[0].mxu0 %v2084
    %v2224 = vpop.f32.mrb[0].mxu0
    %v2225 = vadd.f32 0.0, %v2224
    %v2226 = vpop.f32.mrb[0].mxu0
    %2227 = vmatprep.mubr.f32.mxu0 0.0
    %2228 = vmatmul.mubr.f32.gmra.mrb[0].mxu0 %v2087
    %v2229 = vpop.f32.mrb[0].mxu0
    %v2230 = vadd.f32 0.0, %v2229
    %v2231 = vpop.f32.mrb[0].mxu0
    %2232 = vmatprep.mubr.f32.mxu0 0.0
    %2233 = vmatmul.mubr.f32.gmra.mrb[0].mxu0 %v2090
    %v2234 = vpop.f32.mrb[0].mxu0
    %v2235 = vadd.f32 0.0, %v2234
    %v2236 = vpop.f32.mrb[0].mxu0
    %2237 = vmatprep.mubr.f32.mxu0 0.0
    %2238 = vmatmul.mubr.f32.gmra.mrb[0].mxu0 %v2093
    %v2239 = vpop.f32.mrb[0].mxu0
    %v2240 = vadd.f32 0.0, %v2239
    %v2241 = vpop.f32.mrb[0].mxu0
    %2242 = vdwg.mxu0
    %v2243 = vsel %vm659, %v2014, 0.0
    %v2244 = vrot.slane %v2243, 4
    %v2245 = vadd.f32 %v2243, %v2244
    %v2246 = vrot.slane %v2245, 2
    %v2247 = vadd.f32 %v2245, %v2246
    %v2248 = vrot.slane %v2247, 1
    %v2249 = vadd.f32 %v2247, %v2248
    %2250 = vmatprep.subr.mxu0 0.0
    %2251 = vmatpush1.xpose.msra.mxu0 %v1831
    %2252 = vmatprep.subr.mxu0 0.0
    %2253 = vmatpush1.xpose.msra.mxu0 %v1832
    %2254 = vmatprep.subr.mxu0 0.0
    %2255 = vmatpush1.xpose.msra.mxu0 %v1833
    %2256 = vmatprep.subr.mxu0 0.0
    %2257 = vmatpush1.xpose.msra.mxu0 %v1834
    %2258 = vmatprep.subr.mxu0 0.0
    %2259 = vmatpush1.xpose.msra.mxu0 %v1835
    %2260 = vmatprep.subr.mxu0 0.0
    %2261 = vmatpush1.xpose.msra.mxu0 %v1836
    %2262 = vmatprep.subr.mxu0 0.0
    %2263 = vmatpush1.xpose.msra.mxu0 %v1837
    %2264 = vmatprep.subr.mxu0 0.0
    %2265 = vmatpush1.xpose.msra.mxu0 %v1838
    %2266 = vmatprep.subr.mxu0 0.0
    %2267 = vmatpush1.xpose.msra.mxu0 %v1839
    %2268 = vmatprep.subr.mxu0 0.0
    %2269 = vmatpush1.xpose.msra.mxu0 %v1840
    %2270 = vmatprep.subr.mxu0 0.0
    %2271 = vmatpush1.xpose.msra.mxu0 %v1841
    %2272 = vmatprep.subr.mxu0 0.0
    %2273 = vmatpush1.xpose.msra.mxu0 %v1842
    %2274 = vmatprep.subr.mxu0 0.0
    %2275 = vmatpush1.xpose.msra.mxu0 %v1843
    %2276 = vmatprep.subr.mxu0 0.0
    %2277 = vmatpush1.xpose.msra.mxu0 %v1844
    %2278 = vmatprep.subr.mxu0 0.0
    %2279 = vmatpush1.xpose.msra.mxu0 %v1845
    %2280 = vmatprep.subr.mxu0 0.0
    %2281 = vmatpush1.xpose.msra.mxu0 %v1846
    %2282 = vmatprep.subr.mxu0 0.0
    %2283 = vmatpush1.xpose.msra.mxu0 0.0
    %2284 = vmatprep.subr.mxu0 0.0
    %2285 = vmatpush1.xpose.msra.mxu0 0.0
    %2286 = vmatprep.subr.mxu0 0.0
    %2287 = vmatpush1.xpose.msra.mxu0 0.0
    %2288 = vmatprep.subr.mxu0 0.0
    %2289 = vmatpush1.xpose.msra.mxu0 0.0
    %2290 = vmatprep.subr.mxu0 0.0
    %2291 = vmatpush1.xpose.msra.mxu0 0.0
    %2292 = vmatprep.subr.mxu0 0.0
    %2293 = vmatpush1.xpose.msra.mxu0 0.0
    %2294 = vmatprep.subr.mxu0 0.0
    %2295 = vmatpush1.xpose.msra.mxu0 0.0
    %2296 = vmatprep.subr.mxu0 0.0
    %2297 = vmatpush1.xpose.msra.mxu0 0.0
    %2298 = vmatprep.subr.mxu0 0.0
    %2299 = vmatpush1.xpose.msra.mxu0 0.0
    %2300 = vmatprep.subr.mxu0 0.0
    %2301 = vmatpush1.xpose.msra.mxu0 0.0
    %2302 = vmatprep.subr.mxu0 0.0
    %2303 = vmatpush1.xpose.msra.mxu0 0.0
    %2304 = vmatprep.subr.mxu0 0.0
    %2305 = vmatpush1.xpose.msra.mxu0 0.0
    %2306 = vmatprep.subr.mxu0 0.0
    %2307 = vmatpush1.xpose.msra.mxu0 0.0
    %2308 = vmatprep.subr.mxu0 0.0
    %2309 = vmatpush1.xpose.msra.mxu0 0.0
    %2310 = vmatprep.subr.mxu0 0.0
    %2311 = vmatpush1.xpose.msra.mxu0 0.0
    %2312 = vmatprep.subr.mxu0 0.0
    %2313 = vmatpush1.xpose.msra.mxu0 0.0
    %2314 = vmatprep.mubr.f32.mxu0 0.0
    %2315 = vmatmul.mubr.f32.gmra.mrb[0].mxu0 %v2014
    %v2316 = vpop.f32.mrb[0].mxu0
    %v2317 = vadd.f32 0.0, %v2316
    %v2318 = vpop.f32.mrb[0].mxu0
    %2319 = vdwg.mxu0
    %vm2320 = vcmp.gt.f32.partialorder %v1921, 0.0
    %v2321 = vsel %vm2320, %v2317, 0.0
    %v2323 = vsel %vm659, %v2321, 0
    %2325 = vmatprep.subr.mxu0 0.0
    %2326 = vmatpush1.msra.mxu0 %v2323
    %2327 = vmatprep.subr.mxu0 0.0
    %2328 = vmatpush1.msra.mxu0 0.0
    %2329 = vmatprep.subr.mxu0 0.0
    %2330 = vmatpush1.msra.mxu0 0.0
    %2331 = vmatprep.subr.mxu0 0.0
    %2332 = vmatpush1.msra.mxu0 0.0
    %2333 = vmatprep.subr.mxu0 0.0
    %2334 = vmatpush1.msra.mxu0 0.0
    %2335 = vmatprep.subr.mxu0 0.0
    %2336 = vmatpush1.msra.mxu0 0.0
    %2337 = vmatprep.subr.mxu0 0.0
    %2338 = vmatpush1.msra.mxu0 0.0
    %2339 = vmatprep.subr.mxu0 0.0
    %2340 = vmatpush1.msra.mxu0 0.0
    %2341 = vmatprep.subr.mxu0 0.0
    %2342 = vmatpush1.msra.mxu0 0.0
    %2343 = vmatprep.subr.mxu0 0.0
    %2344 = vmatpush1.msra.mxu0 0.0
    %2345 = vmatprep.subr.mxu0 0.0
    %2346 = vmatpush1.msra.mxu0 0.0
    %2347 = vmatprep.subr.mxu0 0.0
    %2348 = vmatpush1.msra.mxu0 0.0
    %2349 = vmatprep.subr.mxu0 0.0
    %2350 = vmatpush1.msra.mxu0 0.0
    %2351 = vmatprep.subr.mxu0 0.0
    %2352 = vmatpush1.msra.mxu0 0.0
    %2353 = vmatprep.subr.mxu0 0.0
    %2354 = vmatpush1.msra.mxu0 0.0
    %2355 = vmatprep.subr.mxu0 0.0
    %2356 = vmatpush1.msra.mxu0 0.0
    %2357 = vmatprep.subr.mxu0 0.0
    %2358 = vmatpush1.msra.mxu0 0.0
    %2359 = vmatprep.subr.mxu0 0.0
    %2360 = vmatpush1.msra.mxu0 0.0
    %2361 = vmatprep.subr.mxu0 0.0
    %2362 = vmatpush1.msra.mxu0 0.0
    %2363 = vmatprep.subr.mxu0 0.0
    %2364 = vmatpush1.msra.mxu0 0.0
    %2365 = vmatprep.subr.mxu0 0.0
    %2366 = vmatpush1.msra.mxu0 0.0
    %2367 = vmatprep.subr.mxu0 0.0
    %2368 = vmatpush1.msra.mxu0 0.0
    %2369 = vmatprep.subr.mxu0 0.0
    %2370 = vmatpush1.msra.mxu0 0.0
    %2371 = vmatprep.subr.mxu0 0.0
    %2372 = vmatpush1.msra.mxu0 0.0
    %2373 = vmatprep.subr.mxu0 0.0
    %2374 = vmatpush1.msra.mxu0 0.0
    %2375 = vmatprep.subr.mxu0 0.0
    %2376 = vmatpush1.msra.mxu0 0.0
    %2377 = vmatprep.subr.mxu0 0.0
    %2378 = vmatpush1.msra.mxu0 0.0
    %2379 = vmatprep.subr.mxu0 0.0
    %2380 = vmatpush1.msra.mxu0 0.0
    %2381 = vmatprep.subr.mxu0 0.0
    %2382 = vmatpush1.msra.mxu0 0.0
    %2383 = vmatprep.subr.mxu0 0.0
    %2384 = vmatpush1.msra.mxu0 0.0
    %2385 = vmatprep.subr.mxu0 0.0
    %2386 = vmatpush1.msra.mxu0 0.0
    %2387 = vmatprep.subr.mxu0 0.0
    %2388 = vmatpush1.msra.mxu0 0.0
    %2389 = vmatprep.mubr.f32.mxu0 0.0
    %2390 = vmatmul.mubr.f32.gmra.mrb[0].mxu0 %v1046
    %v2391 = vpop.f32.mrb[0].mxu0
    %v2392 = vadd.f32 0.0, %v2391
    %v2393 = vpop.f32.mrb[0].mxu0
    %2394 = vmatprep.mubr.f32.mxu0 0.0
    %2395 = vmatmul.mubr.f32.gmra.mrb[0].mxu0 %v1049
    %v2396 = vpop.f32.mrb[0].mxu0
    %v2397 = vadd.f32 0.0, %v2396
    %v2398 = vpop.f32.mrb[0].mxu0
    %2399 = vmatprep.mubr.f32.mxu0 0.0
    %2400 = vmatmul.mubr.f32.gmra.mrb[0].mxu0 %v1052
    %v2401 = vpop.f32.mrb[0].mxu0
    %v2402 = vadd.f32 0.0, %v2401
    %v2403 = vpop.f32.mrb[0].mxu0
    %2404 = vmatprep.mubr.f32.mxu0 0.0
    %2405 = vmatmul.mubr.f32.gmra.mrb[0].mxu0 %v1055
    %v2406 = vpop.f32.mrb[0].mxu0
    %v2407 = vadd.f32 0.0, %v2406
    %v2408 = vpop.f32.mrb[0].mxu0
    %2409 = vmatprep.mubr.f32.mxu0 0.0
    %2410 = vmatmul.mubr.f32.gmra.mrb[0].mxu0 %v1058
    %v2411 = vpop.f32.mrb[0].mxu0
    %v2412 = vadd.f32 0.0, %v2411
    %v2413 = vpop.f32.mrb[0].mxu0
    %2414 = vmatprep.mubr.f32.mxu0 0.0
    %2415 = vmatmul.mubr.f32.gmra.mrb[0].mxu0 %v1061
    %v2416 = vpop.f32.mrb[0].mxu0
    %v2417 = vadd.f32 0.0, %v2416
    %v2418 = vpop.f32.mrb[0].mxu0
    %2419 = vmatprep.mubr.f32.mxu0 0.0
    %2420 = vmatmul.mubr.f32.gmra.mrb[0].mxu0 %v1064
    %v2421 = vpop.f32.mrb[0].mxu0
    %v2422 = vadd.f32 0.0, %v2421
    %v2423 = vpop.f32.mrb[0].mxu0
    %2424 = vmatprep.mubr.f32.mxu0 0.0
    %2425 = vmatmul.mubr.f32.gmra.mrb[0].mxu0 %v1067
    %v2426 = vpop.f32.mrb[0].mxu0
    %v2427 = vadd.f32 0.0, %v2426
    %v2428 = vpop.f32.mrb[0].mxu0
    %2429 = vmatprep.mubr.f32.mxu0 0.0
    %2430 = vmatmul.mubr.f32.gmra.mrb[0].mxu0 %v1070
    %v2431 = vpop.f32.mrb[0].mxu0
    %v2432 = vadd.f32 0.0, %v2431
    %v2433 = vpop.f32.mrb[0].mxu0
    %2434 = vmatprep.mubr.f32.mxu0 0.0
    %2435 = vmatmul.mubr.f32.gmra.mrb[0].mxu0 %v1073
    %v2436 = vpop.f32.mrb[0].mxu0
    %v2437 = vadd.f32 0.0, %v2436
    %v2438 = vpop.f32.mrb[0].mxu0
    %2439 = vmatprep.mubr.f32.mxu0 0.0
    %2440 = vmatmul.mubr.f32.gmra.mrb[0].mxu0 %v1076
    %v2441 = vpop.f32.mrb[0].mxu0
    %v2442 = vadd.f32 0.0, %v2441
    %v2443 = vpop.f32.mrb[0].mxu0
    %2444 = vmatprep.mubr.f32.mxu0 0.0
    %2445 = vmatmul.mubr.f32.gmra.mrb[0].mxu0 %v1079
    %v2446 = vpop.f32.mrb[0].mxu0
    %v2447 = vadd.f32 0.0, %v2446
    %v2448 = vpop.f32.mrb[0].mxu0
    %2449 = vmatprep.mubr.f32.mxu0 0.0
    %2450 = vmatmul.mubr.f32.gmra.mrb[0].mxu0 %v1082
    %v2451 = vpop.f32.mrb[0].mxu0
    %v2452 = vadd.f32 0.0, %v2451
    %v2453 = vpop.f32.mrb[0].mxu0
    %2454 = vmatprep.mubr.f32.mxu0 0.0
    %2455 = vmatmul.mubr.f32.gmra.mrb[0].mxu0 %v1085
    %v2456 = vpop.f32.mrb[0].mxu0
    %v2457 = vadd.f32 0.0, %v2456
    %v2458 = vpop.f32.mrb[0].mxu0
    %2459 = vmatprep.mubr.f32.mxu0 0.0
    %2460 = vmatmul.mubr.f32.gmra.mrb[0].mxu0 %v1088
    %v2461 = vpop.f32.mrb[0].mxu0
    %v2462 = vadd.f32 0.0, %v2461
    %v2463 = vpop.f32.mrb[0].mxu0
    %2464 = vmatprep.mubr.f32.mxu0 0.0
    %2465 = vmatmul.mubr.f32.gmra.mrb[0].mxu0 %v1091
    %v2466 = vpop.f32.mrb[0].mxu0
    %v2467 = vadd.f32 0.0, %v2466
    %v2468 = vpop.f32.mrb[0].mxu0
    %2469 = vmatprep.mubr.f32.mxu0 0.0
    %2470 = vmatmul.mubr.f32.gmra.mrb[0].mxu0 %v1094
    %v2471 = vpop.f32.mrb[0].mxu0
    %v2472 = vadd.f32 0.0, %v2471
    %v2473 = vpop.f32.mrb[0].mxu0
    %2474 = vmatprep.mubr.f32.mxu0 0.0
    %2475 = vmatmul.mubr.f32.gmra.mrb[0].mxu0 %v1097
    %v2476 = vpop.f32.mrb[0].mxu0
    %v2477 = vadd.f32 0.0, %v2476
    %v2478 = vpop.f32.mrb[0].mxu0
    %2479 = vmatprep.mubr.f32.mxu0 0.0
    %2480 = vmatmul.mubr.f32.gmra.mrb[0].mxu0 %v1100
    %v2481 = vpop.f32.mrb[0].mxu0
    %v2482 = vadd.f32 0.0, %v2481
    %v2483 = vpop.f32.mrb[0].mxu0
    %2484 = vmatprep.mubr.f32.mxu0 0.0
    %2485 = vmatmul.mubr.f32.gmra.mrb[0].mxu0 %v1103
    %v2486 = vpop.f32.mrb[0].mxu0
    %v2487 = vadd.f32 0.0, %v2486
    %v2488 = vpop.f32.mrb[0].mxu0
    %2489 = vmatprep.mubr.f32.mxu0 0.0
    %2490 = vmatmul.mubr.f32.gmra.mrb[0].mxu0 %v1106
    %v2491 = vpop.f32.mrb[0].mxu0
    %v2492 = vadd.f32 0.0, %v2491
    %v2493 = vpop.f32.mrb[0].mxu0
    %2494 = vmatprep.mubr.f32.mxu0 0.0
    %2495 = vmatmul.mubr.f32.gmra.mrb[0].mxu0 %v1109
    %v2496 = vpop.f32.mrb[0].mxu0
    %v2497 = vadd.f32 0.0, %v2496
    %v2498 = vpop.f32.mrb[0].mxu0
    %2499 = vmatprep.mubr.f32.mxu0 0.0
    %2500 = vmatmul.mubr.f32.gmra.mrb[0].mxu0 %v1112
    %v2501 = vpop.f32.mrb[0].mxu0
    %v2502 = vadd.f32 0.0, %v2501
    %v2503 = vpop.f32.mrb[0].mxu0
    %2504 = vmatprep.mubr.f32.mxu0 0.0
    %2505 = vmatmul.mubr.f32.gmra.mrb[0].mxu0 %v1115
    %v2506 = vpop.f32.mrb[0].mxu0
    %v2507 = vadd.f32 0.0, %v2506
    %v2508 = vpop.f32.mrb[0].mxu0
    %2509 = vmatprep.mubr.f32.mxu0 0.0
    %2510 = vmatmul.mubr.f32.gmra.mrb[0].mxu0 %v1118
    %v2511 = vpop.f32.mrb[0].mxu0
    %v2512 = vadd.f32 0.0, %v2511
    %v2513 = vpop.f32.mrb[0].mxu0
    %2514 = vmatprep.mubr.f32.mxu0 0.0
    %2515 = vmatmul.mubr.f32.gmra.mrb[0].mxu0 %v1121
    %v2516 = vpop.f32.mrb[0].mxu0
    %v2517 = vadd.f32 0.0, %v2516
    %v2518 = vpop.f32.mrb[0].mxu0
    %2519 = vmatprep.mubr.f32.mxu0 0.0
    %2520 = vmatmul.mubr.f32.gmra.mrb[0].mxu0 %v1124
    %v2521 = vpop.f32.mrb[0].mxu0
    %v2522 = vadd.f32 0.0, %v2521
    %v2523 = vpop.f32.mrb[0].mxu0
    %2524 = vmatprep.mubr.f32.mxu0 0.0
    %2525 = vmatmul.mubr.f32.gmra.mrb[0].mxu0 %v1127
    %v2526 = vpop.f32.mrb[0].mxu0
    %v2527 = vadd.f32 0.0, %v2526
    %v2528 = vpop.f32.mrb[0].mxu0
    %2529 = vmatprep.mubr.f32.mxu0 0.0
    %2530 = vmatmul.mubr.f32.gmra.mrb[0].mxu0 %v1130
    %v2531 = vpop.f32.mrb[0].mxu0
    %v2532 = vadd.f32 0.0, %v2531
    %v2533 = vpop.f32.mrb[0].mxu0
    %2534 = vmatprep.mubr.f32.mxu0 0.0
    %2535 = vmatmul.mubr.f32.gmra.mrb[0].mxu0 %v1133
    %v2536 = vpop.f32.mrb[0].mxu0
    %v2537 = vadd.f32 0.0, %v2536
    %v2538 = vpop.f32.mrb[0].mxu0
    %2539 = vmatprep.mubr.f32.mxu0 0.0
    %2540 = vmatmul.mubr.f32.gmra.mrb[0].mxu0 %v1136
    %v2541 = vpop.f32.mrb[0].mxu0
    %v2542 = vadd.f32 0.0, %v2541
    %v2543 = vpop.f32.mrb[0].mxu0
    %2544 = vmatprep.mubr.f32.mxu0 0.0
    %2545 = vmatmul.mubr.f32.gmra.mrb[0].mxu0 %v1139
    %v2546 = vpop.f32.mrb[0].mxu0
    %v2547 = vadd.f32 0.0, %v2546
    %v2548 = vpop.f32.mrb[0].mxu0
    %2549 = vdwg.mxu0
    %v2550 = vsel %vm659, %v2321, 0.0
    %v2551 = vrot.slane %v2550, 4
    %v2552 = vadd.f32 %v2550, %v2551
    %v2553 = vrot.slane %v2552, 2
    %v2554 = vadd.f32 %v2552, %v2553
    %v2555 = vrot.slane %v2554, 1
    %v2556 = vadd.f32 %v2554, %v2555
    %v2557 = vmul.f32 %v2392, 0.4
    %v2558 = vmul.f32 %v2397, 0.4
    %v2559 = vmul.f32 %v2402, 0.4
    %v2560 = vmul.f32 %v2407, 0.4
    %v2561 = vmul.f32 %v2412, 0.4
    %v2562 = vmul.f32 %v2417, 0.4
    %v2563 = vmul.f32 %v2422, 0.4
    %v2564 = vmul.f32 %v2427, 0.4
    %v2565 = vmul.f32 %v2432, 0.4
    %v2566 = vmul.f32 %v2437, 0.4
    %v2567 = vmul.f32 %v2442, 0.4
    %v2568 = vmul.f32 %v2447, 0.4
    %v2569 = vmul.f32 %v2452, 0.4
    %v2570 = vmul.f32 %v2457, 0.4
    %v2571 = vmul.f32 %v2462, 0.4
    %v2572 = vmul.f32 %v2467, 0.4
    %v2573 = vmul.f32 %v2472, 0.4
    %v2574 = vmul.f32 %v2477, 0.4
    %v2575 = vmul.f32 %v2482, 0.4
    %v2576 = vmul.f32 %v2487, 0.4
    %v2577 = vmul.f32 %v2492, 0.4
    %v2578 = vmul.f32 %v2497, 0.4
    %v2579 = vmul.f32 %v2502, 0.4
    %v2580 = vmul.f32 %v2507, 0.4
    %v2581 = vmul.f32 %v2512, 0.4
    %v2582 = vmul.f32 %v2517, 0.4
    %v2583 = vmul.f32 %v2522, 0.4
    %v2584 = vmul.f32 %v2527, 0.4
    %v2585 = vmul.f32 %v2532, 0.4
    %v2586 = vmul.f32 %v2537, 0.4
    %v2587 = vmul.f32 %v2542, 0.4
    %v2588 = vmul.f32 %v2547, 0.4
    %v2589 = vsub.f32 %v1798, %v2557
    %v2590 = vsub.f32 %v1799, %v2558
    %v2591 = vsub.f32 %v1800, %v2559
    %v2592 = vsub.f32 %v1801, %v2560
    %v2593 = vsub.f32 %v1802, %v2561
    %v2594 = vsub.f32 %v1803, %v2562
    %v2595 = vsub.f32 %v1804, %v2563
    %v2596 = vsub.f32 %v1805, %v2564
    %v2597 = vsub.f32 %v1806, %v2565
    %v2598 = vsub.f32 %v1807, %v2566
    %v2599 = vsub.f32 %v1808, %v2567
    %v2600 = vsub.f32 %v1809, %v2568
    %v2601 = vsub.f32 %v1810, %v2569
    %v2602 = vsub.f32 %v1811, %v2570
    %v2603 = vsub.f32 %v1812, %v2571
    %v2604 = vsub.f32 %v1813, %v2572
    %v2605 = vsub.f32 %v1814, %v2573
    %v2606 = vsub.f32 %v1815, %v2574
    %v2607 = vsub.f32 %v1816, %v2575
    %v2608 = vsub.f32 %v1817, %v2576
    %v2609 = vsub.f32 %v1818, %v2577
    %v2610 = vsub.f32 %v1819, %v2578
    %v2611 = vsub.f32 %v1820, %v2579
    %v2612 = vsub.f32 %v1821, %v2580
    %v2613 = vsub.f32 %v1822, %v2581
    %v2614 = vsub.f32 %v1823, %v2582
    %v2615 = vsub.f32 %v1824, %v2583
    %v2616 = vsub.f32 %v1825, %v2584
    %v2617 = vsub.f32 %v1826, %v2585
    %v2618 = vsub.f32 %v1827, %v2586
    %v2619 = vsub.f32 %v1828, %v2587
    %v2620 = vsub.f32 %v1829, %v2588
    %2621 = vst [vmem:[#allocation2] sm:$0xff] %v2589
    %2622 = vst [vmem:[#allocation2 + $0x8] sm:$0xff] %v2590
    %2623 = vst [vmem:[#allocation2 + $0x10] sm:$0xff] %v2591
    %2624 = vst [vmem:[#allocation2 + $0x18] sm:$0xff] %v2592
    %2625 = vst [vmem:[#allocation2 + $0x20] sm:$0xff] %v2593
    %2626 = vst [vmem:[#allocation2 + $0x28] sm:$0xff] %v2594
    %2627 = vst [vmem:[#allocation2 + $0x30] sm:$0xff] %v2595
    %2628 = vst [vmem:[#allocation2 + $0x38] sm:$0xff] %v2596
    %2629 = vst [vmem:[#allocation2 + $0x40] sm:$0xff] %v2597
    %2630 = vst [vmem:[#allocation2 + $0x48] sm:$0xff] %v2598
    %2631 = vst [vmem:[#allocation2 + $0x50] sm:$0xff] %v2599
    %2632 = vst [vmem:[#allocation2 + $0x58] sm:$0xff] %v2600
    %2633 = vst [vmem:[#allocation2 + $0x60] sm:$0xff] %v2601
    %2634 = vst [vmem:[#allocation2 + $0x68] sm:$0xff] %v2602
    %2635 = vst [vmem:[#allocation2 + $0x70] sm:$0xff] %v2603
    %2636 = vst [vmem:[#allocation2 + $0x78] sm:$0xff] %v2604
    %2637 = vst [vmem:[#allocation2 + $0x80] sm:$0xff] %v2605
    %2638 = vst [vmem:[#allocation2 + $0x88] sm:$0xff] %v2606
    %2639 = vst [vmem:[#allocation2 + $0x90] sm:$0xff] %v2607
    %2640 = vst [vmem:[#allocation2 + $0x98] sm:$0xff] %v2608
    %2641 = vst [vmem:[#allocation2 + $0xa0] sm:$0xff] %v2609
    %2642 = vst [vmem:[#allocation2 + $0xa8] sm:$0xff] %v2610
    %2643 = vst [vmem:[#allocation2 + $0xb0] sm:$0xff] %v2611
    %2644 = vst [vmem:[#allocation2 + $0xb8] sm:$0xff] %v2612
    %2645 = vst [vmem:[#allocation2 + $0xc0] sm:$0xff] %v2613
    %2646 = vst [vmem:[#allocation2 + $0xc8] sm:$0xff] %v2614
    %2647 = vst [vmem:[#allocation2 + $0xd0] sm:$0xff] %v2615
    %2648 = vst [vmem:[#allocation2 + $0xd8] sm:$0xff] %v2616
    %2649 = vst [vmem:[#allocation2 + $0xe0] sm:$0xff] %v2617
    %2650 = vst [vmem:[#allocation2 + $0xe8] sm:$0xff] %v2618
    %2651 = vst [vmem:[#allocation2 + $0xf0] sm:$0xff] %v2619
    %2652 = vst [vmem:[#allocation2 + $0xf8] sm:$0xff] %v2620
    %v2653 = vmul.f32 %v2556, 0.4
    %v2654 = vsub.f32 %v1830, %v2653
    %2655 = vst [vmem:[#allocation3] sm:$0x1] %v2654
    %v2656 = vmul.f32 %v2165, 0.4
    %v2657 = vmul.f32 %v2170, 0.4
    %v2658 = vmul.f32 %v2175, 0.4
    %v2659 = vmul.f32 %v2180, 0.4
    %v2660 = vmul.f32 %v2185, 0.4
    %v2661 = vmul.f32 %v2190, 0.4
    %v2662 = vmul.f32 %v2195, 0.4
    %v2663 = vmul.f32 %v2200, 0.4
    %v2664 = vmul.f32 %v2205, 0.4
    %v2665 = vmul.f32 %v2210, 0.4
    %v2666 = vmul.f32 %v2215, 0.4
    %v2667 = vmul.f32 %v2220, 0.4
    %v2668 = vmul.f32 %v2225, 0.4
    %v2669 = vmul.f32 %v2230, 0.4
    %v2670 = vmul.f32 %v2235, 0.4
    %v2671 = vmul.f32 %v2240, 0.4
    %v2672 = vsub.f32 %v1831, %v2656
    %v2673 = vsub.f32 %v1832, %v2657
    %v2674 = vsub.f32 %v1833, %v2658
    %v2675 = vsub.f32 %v1834, %v2659
    %v2676 = vsub.f32 %v1835, %v2660
    %v2677 = vsub.f32 %v1836, %v2661
    %v2678 = vsub.f32 %v1837, %v2662
    %v2679 = vsub.f32 %v1838, %v2663
    %v2680 = vsub.f32 %v1839, %v2664
    %v2681 = vsub.f32 %v1840, %v2665
    %v2682 = vsub.f32 %v1841, %v2666
    %v2683 = vsub.f32 %v1842, %v2667
    %v2684 = vsub.f32 %v1843, %v2668
    %v2685 = vsub.f32 %v1844, %v2669
    %v2686 = vsub.f32 %v1845, %v2670
    %v2687 = vsub.f32 %v1846, %v2671
    %2688 = vst [vmem:[#allocation4] sm:$0xff] %v2672
    %2689 = vst [vmem:[#allocation4 + $0x8] sm:$0xff] %v2673
    %2690 = vst [vmem:[#allocation4 + $0x10] sm:$0xff] %v2674
    %2691 = vst [vmem:[#allocation4 + $0x18] sm:$0xff] %v2675
    %2692 = vst [vmem:[#allocation4 + $0x20] sm:$0xff] %v2676
    %2693 = vst [vmem:[#allocation4 + $0x28] sm:$0xff] %v2677
    %2694 = vst [vmem:[#allocation4 + $0x30] sm:$0xff] %v2678
    %2695 = vst [vmem:[#allocation4 + $0x38] sm:$0xff] %v2679
    %2696 = vst [vmem:[#allocation4 + $0x40] sm:$0xff] %v2680
    %2697 = vst [vmem:[#allocation4 + $0x48] sm:$0xff] %v2681
    %2698 = vst [vmem:[#allocation4 + $0x50] sm:$0xff] %v2682
    %2699 = vst [vmem:[#allocation4 + $0x58] sm:$0xff] %v2683
    %2700 = vst [vmem:[#allocation4 + $0x60] sm:$0xff] %v2684
    %2701 = vst [vmem:[#allocation4 + $0x68] sm:$0xff] %v2685
    %2702 = vst [vmem:[#allocation4 + $0x70] sm:$0xff] %v2686
    %2703 = vst [vmem:[#allocation4 + $0x78] sm:$0xff] %v2687
    %v2704 = vmul.f32 %v2249, 0.4
    %v2705 = vsub.f32 %v1847, %v2704
    %2706 = vst [vmem:[#allocation5] sm:$0x1] %v2705
    %v2707 = vld [vmem:[#allocation2] sm:$0xff]
    %v2708 = vld [vmem:[#allocation2 + $0x8] sm:$0xff]
    %v2709 = vld [vmem:[#allocation2 + $0x10] sm:$0xff]
    %v2710 = vld [vmem:[#allocation2 + $0x18] sm:$0xff]
    %v2711 = vld [vmem:[#allocation2 + $0x20] sm:$0xff]
    %v2712 = vld [vmem:[#allocation2 + $0x28] sm:$0xff]
    %v2713 = vld [vmem:[#allocation2 + $0x30] sm:$0xff]
    %v2714 = vld [vmem:[#allocation2 + $0x38] sm:$0xff]
    %v2715 = vld [vmem:[#allocation2 + $0x40] sm:$0xff]
    %v2716 = vld [vmem:[#allocation2 + $0x48] sm:$0xff]
    %v2717 = vld [vmem:[#allocation2 + $0x50] sm:$0xff]
    %v2718 = vld [vmem:[#allocation2 + $0x58] sm:$0xff]
    %v2719 = vld [vmem:[#allocation2 + $0x60] sm:$0xff]
    %v2720 = vld [vmem:[#allocation2 + $0x68] sm:$0xff]
    %v2721 = vld [vmem:[#allocation2 + $0x70] sm:$0xff]
    %v2722 = vld [vmem:[#allocation2 + $0x78] sm:$0xff]
    %v2723 = vld [vmem:[#allocation2 + $0x80] sm:$0xff]
    %v2724 = vld [vmem:[#allocation2 + $0x88] sm:$0xff]
    %v2725 = vld [vmem:[#allocation2 + $0x90] sm:$0xff]
    %v2726 = vld [vmem:[#allocation2 + $0x98] sm:$0xff]
    %v2727 = vld [vmem:[#allocation2 + $0xa0] sm:$0xff]
    %v2728 = vld [vmem:[#allocation2 + $0xa8] sm:$0xff]
    %v2729 = vld [vmem:[#allocation2 + $0xb0] sm:$0xff]
    %v2730 = vld [vmem:[#allocation2 + $0xb8] sm:$0xff]
    %v2731 = vld [vmem:[#allocation2 + $0xc0] sm:$0xff]
    %v2732 = vld [vmem:[#allocation2 + $0xc8] sm:$0xff]
    %v2733 = vld [vmem:[#allocation2 + $0xd0] sm:$0xff]
    %v2734 = vld [vmem:[#allocation2 + $0xd8] sm:$0xff]
    %v2735 = vld [vmem:[#allocation2 + $0xe0] sm:$0xff]
    %v2736 = vld [vmem:[#allocation2 + $0xe8] sm:$0xff]
    %v2737 = vld [vmem:[#allocation2 + $0xf0] sm:$0xff]
    %v2738 = vld [vmem:[#allocation2 + $0xf8] sm:$0xff]
    %v2739 = vld [vmem:[#allocation3] sm:$0x1]
    %v2740 = vld [vmem:[#allocation4] sm:$0xff]
    %v2741 = vld [vmem:[#allocation4 + $0x8] sm:$0xff]
    %v2742 = vld [vmem:[#allocation4 + $0x10] sm:$0xff]
    %v2743 = vld [vmem:[#allocation4 + $0x18] sm:$0xff]
    %v2744 = vld [vmem:[#allocation4 + $0x20] sm:$0xff]
    %v2745 = vld [vmem:[#allocation4 + $0x28] sm:$0xff]
    %v2746 = vld [vmem:[#allocation4 + $0x30] sm:$0xff]
    %v2747 = vld [vmem:[#allocation4 + $0x38] sm:$0xff]
    %v2748 = vld [vmem:[#allocation4 + $0x40] sm:$0xff]
    %v2749 = vld [vmem:[#allocation4 + $0x48] sm:$0xff]
    %v2750 = vld [vmem:[#allocation4 + $0x50] sm:$0xff]
    %v2751 = vld [vmem:[#allocation4 + $0x58] sm:$0xff]
    %v2752 = vld [vmem:[#allocation4 + $0x60] sm:$0xff]
    %v2753 = vld [vmem:[#allocation4 + $0x68] sm:$0xff]
    %v2754 = vld [vmem:[#allocation4 + $0x70] sm:$0xff]
    %v2755 = vld [vmem:[#allocation4 + $0x78] sm:$0xff]
    %v2756 = vld [vmem:[#allocation5] sm:$0x1]
    %v2758 = vlaneseq
    %v2759 = vshrl.u32 %v2758, 7
    %v2760 = vsub.s32 0, %v2759
    %v2761 = vrot.slane %v2739, %v2760
    %2763 = vmatprep.subr.mxu0 0.0
    %2764 = vmatpush1.msra.mxu0 %v2707
    %2765 = vmatprep.subr.mxu0 0.0
    %2766 = vmatpush1.msra.mxu0 %v2708
    %2767 = vmatprep.subr.mxu0 0.0
    %2768 = vmatpush1.msra.mxu0 %v2709
    %2769 = vmatprep.subr.mxu0 0.0
    %2770 = vmatpush1.msra.mxu0 %v2710
    %2771 = vmatprep.subr.mxu0 0.0
    %2772 = vmatpush1.msra.mxu0 %v2711
    %2773 = vmatprep.subr.mxu0 0.0
    %2774 = vmatpush1.msra.mxu0 %v2712
    %2775 = vmatprep.subr.mxu0 0.0
    %2776 = vmatpush1.msra.mxu0 %v2713
    %2777 = vmatprep.subr.mxu0 0.0
    %2778 = vmatpush1.msra.mxu0 %v2714
    %2779 = vmatprep.subr.mxu0 0.0
    %2780 = vmatpush1.msra.mxu0 %v2715
    %2781 = vmatprep.subr.mxu0 0.0
    %2782 = vmatpush1.msra.mxu0 %v2716
    %2783 = vmatprep.subr.mxu0 0.0
    %2784 = vmatpush1.msra.mxu0 %v2717
    %2785 = vmatprep.subr.mxu0 0.0
    %2786 = vmatpush1.msra.mxu0 %v2718
    %2787 = vmatprep.subr.mxu0 0.0
    %2788 = vmatpush1.msra.mxu0 %v2719
    %2789 = vmatprep.subr.mxu0 0.0
    %2790 = vmatpush1.msra.mxu0 %v2720
    %2791 = vmatprep.subr.mxu0 0.0
    %2792 = vmatpush1.msra.mxu0 %v2721
    %2793 = vmatprep.subr.mxu0 0.0
    %2794 = vmatpush1.msra.mxu0 %v2722
    %2795 = vmatprep.subr.mxu0 0.0
    %2796 = vmatpush1.msra.mxu0 %v2723
    %2797 = vmatprep.subr.mxu0 0.0
    %2798 = vmatpush1.msra.mxu0 %v2724
    %2799 = vmatprep.subr.mxu0 0.0
    %2800 = vmatpush1.msra.mxu0 %v2725
    %2801 = vmatprep.subr.mxu0 0.0
    %2802 = vmatpush1.msra.mxu0 %v2726
    %2803 = vmatprep.subr.mxu0 0.0
    %2804 = vmatpush1.msra.mxu0 %v2727
    %2805 = vmatprep.subr.mxu0 0.0
    %2806 = vmatpush1.msra.mxu0 %v2728
    %2807 = vmatprep.subr.mxu0 0.0
    %2808 = vmatpush1.msra.mxu0 %v2729
    %2809 = vmatprep.subr.mxu0 0.0
    %2810 = vmatpush1.msra.mxu0 %v2730
    %2811 = vmatprep.subr.mxu0 0.0
    %2812 = vmatpush1.msra.mxu0 %v2731
    %2813 = vmatprep.subr.mxu0 0.0
    %2814 = vmatpush1.msra.mxu0 %v2732
    %2815 = vmatprep.subr.mxu0 0.0
    %2816 = vmatpush1.msra.mxu0 %v2733
    %2817 = vmatprep.subr.mxu0 0.0
    %2818 = vmatpush1.msra.mxu0 %v2734
    %2819 = vmatprep.subr.mxu0 0.0
    %2820 = vmatpush1.msra.mxu0 %v2735
    %2821 = vmatprep.subr.mxu0 0.0
    %2822 = vmatpush1.msra.mxu0 %v2736
    %2823 = vmatprep.subr.mxu0 0.0
    %2824 = vmatpush1.msra.mxu0 %v2737
    %2825 = vmatprep.subr.mxu0 0.0
    %2826 = vmatpush1.msra.mxu0 %v2738
    %2827 = vmatprep.mubr.f32.mxu0 %v74
    %2828 = vmatmul.mubr.f32.gmra.mrb[0].mxu0 %v73
    %v2829 = vpop.f32.mrb[0].mxu0
    %v2830 = vadd.f32 %v2761, %v2829
    %v2831 = vpop.f32.mrb[0].mxu0
    %2832 = vmatprep.mubr.f32.mxu0 %v76
    %2833 = vmatmul.mubr.f32.gmra.mrb[0].mxu0 %v75
    %v2834 = vpop.f32.mrb[0].mxu0
    %v2835 = vadd.f32 %v2761, %v2834
    %v2836 = vpop.f32.mrb[0].mxu0
    %2837 = vdwg.mxu0
    %v2838 = vmax.f32 %v2830, 0.0
    %v2839 = vmax.f32 %v2835, 0.0
    %v2841 = vlaneseq
    %v2842 = vshrl.u32 %v2841, 7
    %v2843 = vsub.s32 0, %v2842
    %v2844 = vrot.slane %v2756, %v2843
    %2846 = vmatprep.subr.mxu0 0.0
    %2847 = vmatpush1.msra.mxu0 %v2740
    %2848 = vmatprep.subr.mxu0 0.0
    %2849 = vmatpush1.msra.mxu0 %v2741
    %2850 = vmatprep.subr.mxu0 0.0
    %2851 = vmatpush1.msra.mxu0 %v2742
    %2852 = vmatprep.subr.mxu0 0.0
    %2853 = vmatpush1.msra.mxu0 %v2743
    %2854 = vmatprep.subr.mxu0 0.0
    %2855 = vmatpush1.msra.mxu0 %v2744
    %2856 = vmatprep.subr.mxu0 0.0
    %2857 = vmatpush1.msra.mxu0 %v2745
    %2858 = vmatprep.subr.mxu0 0.0
    %2859 = vmatpush1.msra.mxu0 %v2746
    %2860 = vmatprep.subr.mxu0 0.0
    %2861 = vmatpush1.msra.mxu0 %v2747
    %2862 = vmatprep.subr.mxu0 0.0
    %2863 = vmatpush1.msra.mxu0 %v2748
    %2864 = vmatprep.subr.mxu0 0.0
    %2865 = vmatpush1.msra.mxu0 %v2749
    %2866 = vmatprep.subr.mxu0 0.0
    %2867 = vmatpush1.msra.mxu0 %v2750
    %2868 = vmatprep.subr.mxu0 0.0
    %2869 = vmatpush1.msra.mxu0 %v2751
    %2870 = vmatprep.subr.mxu0 0.0
    %2871 = vmatpush1.msra.mxu0 %v2752
    %2872 = vmatprep.subr.mxu0 0.0
    %2873 = vmatpush1.msra.mxu0 %v2753
    %2874 = vmatprep.subr.mxu0 0.0
    %2875 = vmatpush1.msra.mxu0 %v2754
    %2876 = vmatprep.subr.mxu0 0.0
    %2877 = vmatpush1.msra.mxu0 %v2755
    %2878 = vmatprep.subr.mxu0 0.0
    %2879 = vmatpush1.msra.mxu0 0.0
    %2880 = vmatprep.subr.mxu0 0.0
    %2881 = vmatpush1.msra.mxu0 0.0
    %2882 = vmatprep.subr.mxu0 0.0
    %2883 = vmatpush1.msra.mxu0 0.0
    %2884 = vmatprep.subr.mxu0 0.0
    %2885 = vmatpush1.msra.mxu0 0.0
    %2886 = vmatprep.subr.mxu0 0.0
    %2887 = vmatpush1.msra.mxu0 0.0
    %2888 = vmatprep.subr.mxu0 0.0
    %2889 = vmatpush1.msra.mxu0 0.0
    %2890 = vmatprep.subr.mxu0 0.0
    %2891 = vmatpush1.msra.mxu0 0.0
    %2892 = vmatprep.subr.mxu0 0.0
    %2893 = vmatpush1.msra.mxu0 0.0
    %2894 = vmatprep.subr.mxu0 0.0
    %2895 = vmatpush1.msra.mxu0 0.0
    %2896 = vmatprep.subr.mxu0 0.0
    %2897 = vmatpush1.msra.mxu0 0.0
    %2898 = vmatprep.subr.mxu0 0.0
    %2899 = vmatpush1.msra.mxu0 0.0
    %2900 = vmatprep.subr.mxu0 0.0
    %2901 = vmatpush1.msra.mxu0 0.0
    %2902 = vmatprep.subr.mxu0 0.0
    %2903 = vmatpush1.msra.mxu0 0.0
    %2904 = vmatprep.subr.mxu0 0.0
    %2905 = vmatpush1.msra.mxu0 0.0
    %2906 = vmatprep.subr.mxu0 0.0
    %2907 = vmatpush1.msra.mxu0 0.0
    %2908 = vmatprep.subr.mxu0 0.0
    %2909 = vmatpush1.msra.mxu0 0.0
    %2910 = vmatprep.mubr.f32.mxu0 0.0
    %2911 = vmatmul.mubr.f32.gmra.mrb[0].mxu0 %v2838
    %v2912 = vpop.f32.mrb[0].mxu0
    %v2913 = vadd.f32 %v2844, %v2912
    %v2914 = vpop.f32.mrb[0].mxu0
    %2915 = vmatprep.mubr.f32.mxu0 0.0
    %2916 = vmatmul.mubr.f32.gmra.mrb[0].mxu0 %v2839
    %v2917 = vpop.f32.mrb[0].mxu0
    %v2918 = vadd.f32 %v2844, %v2917
    %v2919 = vpop.f32.mrb[0].mxu0
    %2920 = vdwg.mxu0
    %v2921 = vadd.f32 %v2913, %v83
    %v2922 = vadd.f32 %v2918, %v83
    %2923 = vmax.xlane.f32.xlu0 %v2921
    %v2924 = vpop.xlane.xlu0 %2923
    %v2925 = vsel %vm408, %v2922, -inf
    %2926 = vmax.xlane.f32.xlu0 %v2925
    %v2927 = vpop.xlane.xlu0 %2926
    %vm2928 = vcmp.ge.f32.partialorder %v2921, %v2924
    %vm2929 = vcmp.ge.f32.partialorder %v2922, %v2927
    %v2930 = vsel %vm2928, %v81, 128
    %v2931 = vsel %vm2929, %v81, 128
    %v2932 = vand.u32 %v2930, 65535
    %v2933 = vshra.s32 %v2930, 16
    %v2934 = vcvt.s32.f32 %v2932
    %v2935 = vcvt.s32.f32 %v2933
    %2936 = vmin.xlane.f32.xlu0 %v2935
    %v2937 = vpop.xlane.xlu0 %2936
    %vm2938 = vcmp.eq.f32.partialorder %v2935, %v2937
    %v2939 = vsel %vm2938, %v2934, inf
    %2940 = vmin.xlane.f32.xlu0 %v2939
    %v2941 = vpop.xlane.xlu0 %2940
    %v2942 = vcvt.f32.s32 %v2941
    %v2943 = vcvt.f32.s32 %v2937
    %v2944 = vshll.u32 %v2943, 16
    %v2945 = vadd.s32 %v2944, %v2942
    %v2946 = vsel %vm408, %v2931, 2147483647
    %v2947 = vand.u32 %v2946, 65535
    %v2948 = vshra.s32 %v2946, 16
    %v2949 = vcvt.s32.f32 %v2947
    %v2950 = vcvt.s32.f32 %v2948
    %2951 = vmin.xlane.f32.xlu0 %v2950
    %v2952 = vpop.xlane.xlu0 %2951
    %vm2953 = vcmp.eq.f32.partialorder %v2950, %v2952
    %v2954 = vsel %vm2953, %v2949, inf
    %2955 = vmin.xlane.f32.xlu0 %v2954
    %v2956 = vpop.xlane.xlu0 %2955
    %v2957 = vcvt.f32.s32 %v2956
    %v2958 = vcvt.f32.s32 %v2952
    %v2959 = vshll.u32 %v2958, 16
    %v2960 = vadd.s32 %v2959, %v2957
    %vm2961 = vcmp.eq.s32.totalorder %v2945, %v78
    %vm2962 = vcmp.eq.s32.totalorder %v2960, %v79
    %v2963 = vsel %vm2961, 1, 0
    %v2964 = vsel %vm2962, 1, 0
    %v2965 = vcvt.s32.f32 %v2963
    %v2966 = vcvt.s32.f32 %v2964
    %2969 = vrot.lane.b32.xlu0 %v2965, 2
    %v2970 = vpop.permute.xlu0 %2969
    %2971 = vrot.lane.b32.xlu0 %v2966, 2
    %v2972 = vpop.permute.xlu0 %2971
    %vm2975 = vcmask 23568
    %2976 = vst.msk [vmem:[%s8] sm:$0xff] %vm2975, %v2970
    %vm2977 = vcmask 22544
    %2978 = vst.msk [vmem:[%s8 + $0x8] sm:$0x7f] %vm2977, %v2972
    %v2979 = vld [vmem:[#allocation2] sm:$0xff]
    %v2980 = vld [vmem:[#allocation2 + $0x8] sm:$0xff]
    %v2981 = vld [vmem:[#allocation2 + $0x10] sm:$0xff]
    %v2982 = vld [vmem:[#allocation2 + $0x18] sm:$0xff]
    %v2983 = vld [vmem:[#allocation2 + $0x20] sm:$0xff]
    %v2984 = vld [vmem:[#allocation2 + $0x28] sm:$0xff]
    %v2985 = vld [vmem:[#allocation2 + $0x30] sm:$0xff]
    %v2986 = vld [vmem:[#allocation2 + $0x38] sm:$0xff]
    %v2987 = vld [vmem:[#allocation2 + $0x40] sm:$0xff]
    %v2988 = vld [vmem:[#allocation2 + $0x48] sm:$0xff]
    %v2989 = vld [vmem:[#allocation2 + $0x50] sm:$0xff]
    %v2990 = vld [vmem:[#allocation2 + $0x58] sm:$0xff]
    %v2991 = vld [vmem:[#allocation2 + $0x60] sm:$0xff]
    %v2992 = vld [vmem:[#allocation2 + $0x68] sm:$0xff]
    %v2993 = vld [vmem:[#allocation2 + $0x70] sm:$0xff]
    %v2994 = vld [vmem:[#allocation2 + $0x78] sm:$0xff]
    %v2995 = vld [vmem:[#allocation2 + $0x80] sm:$0xff]
    %v2996 = vld [vmem:[#allocation2 + $0x88] sm:$0xff]
    %v2997 = vld [vmem:[#allocation2 + $0x90] sm:$0xff]
    %v2998 = vld [vmem:[#allocation2 + $0x98] sm:$0xff]
    %v2999 = vld [vmem:[#allocation2 + $0xa0] sm:$0xff]
    %v3000 = vld [vmem:[#allocation2 + $0xa8] sm:$0xff]
    %v3001 = vld [vmem:[#allocation2 + $0xb0] sm:$0xff]
    %v3002 = vld [vmem:[#allocation2 + $0xb8] sm:$0xff]
    %v3003 = vld [vmem:[#allocation2 + $0xc0] sm:$0xff]
    %v3004 = vld [vmem:[#allocation2 + $0xc8] sm:$0xff]
    %v3005 = vld [vmem:[#allocation2 + $0xd0] sm:$0xff]
    %v3006 = vld [vmem:[#allocation2 + $0xd8] sm:$0xff]
    %v3007 = vld [vmem:[#allocation2 + $0xe0] sm:$0xff]
    %v3008 = vld [vmem:[#allocation2 + $0xe8] sm:$0xff]
    %v3009 = vld [vmem:[#allocation2 + $0xf0] sm:$0xff]
    %v3010 = vld [vmem:[#allocation2 + $0xf8] sm:$0xff]
    %v3011 = vld [vmem:[#allocation3] sm:$0x1]
    %v3012 = vld [vmem:[#allocation4] sm:$0xff]
    %v3013 = vld [vmem:[#allocation4 + $0x8] sm:$0xff]
    %v3014 = vld [vmem:[#allocation4 + $0x10] sm:$0xff]
    %v3015 = vld [vmem:[#allocation4 + $0x18] sm:$0xff]
    %v3016 = vld [vmem:[#allocation4 + $0x20] sm:$0xff]
    %v3017 = vld [vmem:[#allocation4 + $0x28] sm:$0xff]
    %v3018 = vld [vmem:[#allocation4 + $0x30] sm:$0xff]
    %v3019 = vld [vmem:[#allocation4 + $0x38] sm:$0xff]
    %v3020 = vld [vmem:[#allocation4 + $0x40] sm:$0xff]
    %v3021 = vld [vmem:[#allocation4 + $0x48] sm:$0xff]
    %v3022 = vld [vmem:[#allocation4 + $0x50] sm:$0xff]
    %v3023 = vld [vmem:[#allocation4 + $0x58] sm:$0xff]
    %v3024 = vld [vmem:[#allocation4 + $0x60] sm:$0xff]
    %v3025 = vld [vmem:[#allocation4 + $0x68] sm:$0xff]
    %v3026 = vld [vmem:[#allocation4 + $0x70] sm:$0xff]
    %v3027 = vld [vmem:[#allocation4 + $0x78] sm:$0xff]
    %v3028 = vld [vmem:[#allocation5] sm:$0x1]
    %v3030 = vlaneseq
    %v3031 = vshrl.u32 %v3030, 7
    %v3032 = vsub.s32 0, %v3031
    %v3033 = vrot.slane %v3011, %v3032
    %3035 = vmatprep.subr.mxu0 0.0
    %3036 = vmatpush1.msra.mxu0 %v2979
    %3037 = vmatprep.subr.mxu0 0.0
    %3038 = vmatpush1.msra.mxu0 %v2980
    %3039 = vmatprep.subr.mxu0 0.0
    %3040 = vmatpush1.msra.mxu0 %v2981
    %3041 = vmatprep.subr.mxu0 0.0
    %3042 = vmatpush1.msra.mxu0 %v2982
    %3043 = vmatprep.subr.mxu0 0.0
    %3044 = vmatpush1.msra.mxu0 %v2983
    %3045 = vmatprep.subr.mxu0 0.0
    %3046 = vmatpush1.msra.mxu0 %v2984
    %3047 = vmatprep.subr.mxu0 0.0
    %3048 = vmatpush1.msra.mxu0 %v2985
    %3049 = vmatprep.subr.mxu0 0.0
    %3050 = vmatpush1.msra.mxu0 %v2986
    %3051 = vmatprep.subr.mxu0 0.0
    %3052 = vmatpush1.msra.mxu0 %v2987
    %3053 = vmatprep.subr.mxu0 0.0
    %3054 = vmatpush1.msra.mxu0 %v2988
    %3055 = vmatprep.subr.mxu0 0.0
    %3056 = vmatpush1.msra.mxu0 %v2989
    %3057 = vmatprep.subr.mxu0 0.0
    %3058 = vmatpush1.msra.mxu0 %v2990
    %3059 = vmatprep.subr.mxu0 0.0
    %3060 = vmatpush1.msra.mxu0 %v2991
    %3061 = vmatprep.subr.mxu0 0.0
    %3062 = vmatpush1.msra.mxu0 %v2992
    %3063 = vmatprep.subr.mxu0 0.0
    %3064 = vmatpush1.msra.mxu0 %v2993
    %3065 = vmatprep.subr.mxu0 0.0
    %3066 = vmatpush1.msra.mxu0 %v2994
    %3067 = vmatprep.subr.mxu0 0.0
    %3068 = vmatpush1.msra.mxu0 %v2995
    %3069 = vmatprep.subr.mxu0 0.0
    %3070 = vmatpush1.msra.mxu0 %v2996
    %3071 = vmatprep.subr.mxu0 0.0
    %3072 = vmatpush1.msra.mxu0 %v2997
    %3073 = vmatprep.subr.mxu0 0.0
    %3074 = vmatpush1.msra.mxu0 %v2998
    %3075 = vmatprep.subr.mxu0 0.0
    %3076 = vmatpush1.msra.mxu0 %v2999
    %3077 = vmatprep.subr.mxu0 0.0
    %3078 = vmatpush1.msra.mxu0 %v3000
    %3079 = vmatprep.subr.mxu0 0.0
    %3080 = vmatpush1.msra.mxu0 %v3001
    %3081 = vmatprep.subr.mxu0 0.0
    %3082 = vmatpush1.msra.mxu0 %v3002
    %3083 = vmatprep.subr.mxu0 0.0
    %3084 = vmatpush1.msra.mxu0 %v3003
    %3085 = vmatprep.subr.mxu0 0.0
    %3086 = vmatpush1.msra.mxu0 %v3004
    %3087 = vmatprep.subr.mxu0 0.0
    %3088 = vmatpush1.msra.mxu0 %v3005
    %3089 = vmatprep.subr.mxu0 0.0
    %3090 = vmatpush1.msra.mxu0 %v3006
    %3091 = vmatprep.subr.mxu0 0.0
    %3092 = vmatpush1.msra.mxu0 %v3007
    %3093 = vmatprep.subr.mxu0 0.0
    %3094 = vmatpush1.msra.mxu0 %v3008
    %3095 = vmatprep.subr.mxu0 0.0
    %3096 = vmatpush1.msra.mxu0 %v3009
    %3097 = vmatprep.subr.mxu0 0.0
    %3098 = vmatpush1.msra.mxu0 %v3010
    %3099 = vmatprep.mubr.f32.mxu0 %v72
    %3100 = vmatmul.mubr.f32.gmra.mrb[0].mxu0 %v71
    %v3101 = vpop.f32.mrb[0].mxu0
    %v3102 = vadd.f32 %v3033, %v3101
    %v3103 = vpop.f32.mrb[0].mxu0
    %3104 = vdwg.mxu0
    %v3105 = vmax.f32 %v3102, 0.0
    %v3107 = vlaneseq
    %v3108 = vshrl.u32 %v3107, 7
    %v3109 = vsub.s32 0, %v3108
    %v3110 = vrot.slane %v3028, %v3109
    %3112 = vmatprep.subr.mxu0 0.0
    %3113 = vmatpush1.msra.mxu0 %v3012
    %3114 = vmatprep.subr.mxu0 0.0
    %3115 = vmatpush1.msra.mxu0 %v3013
    %3116 = vmatprep.subr.mxu0 0.0
    %3117 = vmatpush1.msra.mxu0 %v3014
    %3118 = vmatprep.subr.mxu0 0.0
    %3119 = vmatpush1.msra.mxu0 %v3015
    %3120 = vmatprep.subr.mxu0 0.0
    %3121 = vmatpush1.msra.mxu0 %v3016
    %3122 = vmatprep.subr.mxu0 0.0
    %3123 = vmatpush1.msra.mxu0 %v3017
    %3124 = vmatprep.subr.mxu0 0.0
    %3125 = vmatpush1.msra.mxu0 %v3018
    %3126 = vmatprep.subr.mxu0 0.0
    %3127 = vmatpush1.msra.mxu0 %v3019
    %3128 = vmatprep.subr.mxu0 0.0
    %3129 = vmatpush1.msra.mxu0 %v3020
    %3130 = vmatprep.subr.mxu0 0.0
    %3131 = vmatpush1.msra.mxu0 %v3021
    %3132 = vmatprep.subr.mxu0 0.0
    %3133 = vmatpush1.msra.mxu0 %v3022
    %3134 = vmatprep.subr.mxu0 0.0
    %3135 = vmatpush1.msra.mxu0 %v3023
    %3136 = vmatprep.subr.mxu0 0.0
    %3137 = vmatpush1.msra.mxu0 %v3024
    %3138 = vmatprep.subr.mxu0 0.0
    %3139 = vmatpush1.msra.mxu0 %v3025
    %3140 = vmatprep.subr.mxu0 0.0
    %3141 = vmatpush1.msra.mxu0 %v3026
    %3142 = vmatprep.subr.mxu0 0.0
    %3143 = vmatpush1.msra.mxu0 %v3027
    %3144 = vmatprep.subr.mxu0 0.0
    %3145 = vmatpush1.msra.mxu0 0.0
    %3146 = vmatprep.subr.mxu0 0.0
    %3147 = vmatpush1.msra.mxu0 0.0
    %3148 = vmatprep.subr.mxu0 0.0
    %3149 = vmatpush1.msra.mxu0 0.0
    %3150 = vmatprep.subr.mxu0 0.0
    %3151 = vmatpush1.msra.mxu0 0.0
    %3152 = vmatprep.subr.mxu0 0.0
    %3153 = vmatpush1.msra.mxu0 0.0
    %3154 = vmatprep.subr.mxu0 0.0
    %3155 = vmatpush1.msra.mxu0 0.0
    %3156 = vmatprep.subr.mxu0 0.0
    %3157 = vmatpush1.msra.mxu0 0.0
    %3158 = vmatprep.subr.mxu0 0.0
    %3159 = vmatpush1.msra.mxu0 0.0
    %3160 = vmatprep.subr.mxu0 0.0
    %3161 = vmatpush1.msra.mxu0 0.0
    %3162 = vmatprep.subr.mxu0 0.0
    %3163 = vmatpush1.msra.mxu0 0.0
    %3164 = vmatprep.subr.mxu0 0.0
    %3165 = vmatpush1.msra.mxu0 0.0
    %3166 = vmatprep.subr.mxu0 0.0
    %3167 = vmatpush1.msra.mxu0 0.0
    %3168 = vmatprep.subr.mxu0 0.0
    %3169 = vmatpush1.msra.mxu0 0.0
    %3170 = vmatprep.subr.mxu0 0.0
    %3171 = vmatpush1.msra.mxu0 0.0
    %3172 = vmatprep.subr.mxu0 0.0
    %3173 = vmatpush1.msra.mxu0 0.0
    %3174 = vmatprep.subr.mxu0 0.0
    %3175 = vmatpush1.msra.mxu0 0.0
    %3176 = vmatprep.mubr.f32.mxu0 0.0
    %3177 = vmatmul.mubr.f32.gmra.mrb[0].mxu0 %v3105
    %v3178 = vpop.f32.mrb[0].mxu0
    %v3179 = vadd.f32 %v3110, %v3178
    %v3180 = vpop.f32.mrb[0].mxu0
    %3181 = vdwg.mxu0
    %v3182 = vadd.f32 %v3179, %v83
    %v3183 = vsel %vm659, %v3182, -inf
    %3184 = vmax.xlane.f32.xlu0 %v3183
    %v3185 = vpop.xlane.xlu0 %3184
    %v3186 = vsub.f32 %v3182, %v3185
    %v3187 = vmul.f32 %v3186, 1.442695
    %v3188 = vpow.pop %v3187
    %v3189 = vsel %vm659, %v3188, 0.0
    %3190 = vadd.xlane.f32.xlu0 %v3189
    %v3191 = vpop.xlane.xlu0 %3190
    %v3192 = vrcp.pop %v3191
    %v3193 = vmul.f32 %v3188, %v3192
    %v3194 = vlog2.pop %v3191
    %v3195 = vmul.f32 %v3194, 0.6931472
    %v3196 = vadd.f32 %v3185, %v3195
    %v3197 = vmul.f32 %v89, %v3182
    %v3198 = vsel %vm659, %v3197, 0.0
    %3199 = vadd.xlane.f32.xlu0 %v3198
    %v3200 = vpop.xlane.xlu0 %3199
    %v3201 = vsub.f32 %v3196, %v3200
    %vm3202 = vcmask 4096
    %v3203 = vsel %vm3202, %v3201, 0.0
    %3204 = vadd.xlane.f32.xlu0 %v3203
    %v3205 = vpop.xlane.xlu0 %3204
    %v3206 = vrot.slane %v3205, 4
    %v3207 = vadd.f32 %v3205, %v3206
    %v3208 = vrot.slane %v3207, 2
    %v3209 = vadd.f32 %v3207, %v3208
    %v3210 = vrot.slane %v3209, 1
    %v3211 = vadd.f32 %v3209, %v3210
    %s3212 = vtos %v3211
    %v3213 = vstv %s3212
    %v3214 = vrcp.pop 5.0
    %v3215 = vmul.f32 %v3213, %v3214
    %v3216 = vsub.f32 %v3193, %v89
    %v3217 = vmul.f32 %v3216, 0.2
    %3218 = vxpose.xlu0.b32.start [1/16] %v3105, 128
    %3219 = vxpose.xlu0.b32.cont [2/16] 0.0, 128
    %3220 = vxpose.xlu0.b32.cont [3/16] 0.0, 128
    %3221 = vxpose.xlu0.b32.cont [4/16] 0.0, 128
    %3222 = vxpose.xlu0.b32.cont [5/16] 0.0, 128
    %3223 = vxpose.xlu0.b32.cont [6/16] 0.0, 128
    %3224 = vxpose.xlu0.b32.cont [7/16] 0.0, 128
    %3225 = vxpose.xlu0.b32.cont [8/16] 0.0, 128
    %3226 = vxpose.xlu0.b32.cont [9/16] 0.0, 128
    %3227 = vxpose.xlu0.b32.cont [10/16] 0.0, 128
    %3228 = vxpose.xlu0.b32.cont [11/16] 0.0, 128
    %3229 = vxpose.xlu0.b32.cont [12/16] 0.0, 128
    %3230 = vxpose.xlu0.b32.cont [13/16] 0.0, 128
    %3231 = vxpose.xlu0.b32.cont [14/16] 0.0, 128
    %3232 = vxpose.xlu0.b32.cont [15/16] 0.0, 128
    %3233 = vxpose.xlu0.b32.end [16/16] 0.0, 128
    %v3234 = vpop.trf.xlu0
    %v3235 = vpop.trf.xlu0
    %v3236 = vpop.trf.xlu0
    %v3237 = vpop.trf.xlu0
    %v3238 = vpop.trf.xlu0
    %v3239 = vpop.trf.xlu0
    %v3240 = vpop.trf.xlu0
    %v3241 = vpop.trf.xlu0
    %v3242 = vpop.trf.xlu0
    %v3243 = vpop.trf.xlu0
    %v3244 = vpop.trf.xlu0
    %v3245 = vpop.trf.xlu0
    %v3246 = vpop.trf.xlu0
    %v3247 = vpop.trf.xlu0
    %v3248 = vpop.trf.xlu0
    %v3249 = vpop.trf.xlu0
    %v3251 = vsel %vm705, %v3234, 0
    %v3254 = vsel %vm705, %v3235, 0
    %v3257 = vsel %vm705, %v3236, 0
    %v3260 = vsel %vm705, %v3237, 0
    %v3263 = vsel %vm705, %v3238, 0
    %v3266 = vsel %vm705, %v3239, 0
    %v3269 = vsel %vm705, %v3240, 0
    %v3272 = vsel %vm705, %v3241, 0
    %v3275 = vsel %vm705, %v3242, 0
    %v3278 = vsel %vm705, %v3243, 0
    %v3281 = vsel %vm705, %v3244, 0
    %v3284 = vsel %vm705, %v3245, 0
    %v3287 = vsel %vm705, %v3246, 0
    %v3290 = vsel %vm705, %v3247, 0
    %v3293 = vsel %vm705, %v3248, 0
    %v3296 = vsel %vm705, %v3249, 0
    %v3299 = vsel %vm659, %v3217, 0
    %3301 = vmatprep.subr.mxu0 0.0
    %3302 = vmatpush1.msra.mxu0 %v3299
    %3303 = vmatprep.subr.mxu0 0.0
    %3304 = vmatpush1.msra.mxu0 0.0
    %3305 = vmatprep.subr.mxu0 0.0
    %3306 = vmatpush1.msra.mxu0 0.0
    %3307 = vmatprep.subr.mxu0 0.0
    %3308 = vmatpush1.msra.mxu0 0.0
    %3309 = vmatprep.subr.mxu0 0.0
    %3310 = vmatpush1.msra.mxu0 0.0
    %3311 = vmatprep.subr.mxu0 0.0
    %3312 = vmatpush1.msra.mxu0 0.0
    %3313 = vmatprep.subr.mxu0 0.0
    %3314 = vmatpush1.msra.mxu0 0.0
    %3315 = vmatprep.subr.mxu0 0.0
    %3316 = vmatpush1.msra.mxu0 0.0
    %3317 = vmatprep.subr.mxu0 0.0
    %3318 = vmatpush1.msra.mxu0 0.0
    %3319 = vmatprep.subr.mxu0 0.0
    %3320 = vmatpush1.msra.mxu0 0.0
    %3321 = vmatprep.subr.mxu0 0.0
    %3322 = vmatpush1.msra.mxu0 0.0
    %3323 = vmatprep.subr.mxu0 0.0
    %3324 = vmatpush1.msra.mxu0 0.0
    %3325 = vmatprep.subr.mxu0 0.0
    %3326 = vmatpush1.msra.mxu0 0.0
    %3327 = vmatprep.subr.mxu0 0.0
    %3328 = vmatpush1.msra.mxu0 0.0
    %3329 = vmatprep.subr.mxu0 0.0
    %3330 = vmatpush1.msra.mxu0 0.0
    %3331 = vmatprep.subr.mxu0 0.0
    %3332 = vmatpush1.msra.mxu0 0.0
    %3333 = vmatprep.subr.mxu0 0.0
    %3334 = vmatpush1.msra.mxu0 0.0
    %3335 = vmatprep.subr.mxu0 0.0
    %3336 = vmatpush1.msra.mxu0 0.0
    %3337 = vmatprep.subr.mxu0 0.0
    %3338 = vmatpush1.msra.mxu0 0.0
    %3339 = vmatprep.subr.mxu0 0.0
    %3340 = vmatpush1.msra.mxu0 0.0
    %3341 = vmatprep.subr.mxu0 0.0
    %3342 = vmatpush1.msra.mxu0 0.0
    %3343 = vmatprep.subr.mxu0 0.0
    %3344 = vmatpush1.msra.mxu0 0.0
    %3345 = vmatprep.subr.mxu0 0.0
    %3346 = vmatpush1.msra.mxu0 0.0
    %3347 = vmatprep.subr.mxu0 0.0
    %3348 = vmatpush1.msra.mxu0 0.0
    %3349 = vmatprep.subr.mxu0 0.0
    %3350 = vmatpush1.msra.mxu0 0.0
    %3351 = vmatprep.subr.mxu0 0.0
    %3352 = vmatpush1.msra.mxu0 0.0
    %3353 = vmatprep.subr.mxu0 0.0
    %3354 = vmatpush1.msra.mxu0 0.0
    %3355 = vmatprep.subr.mxu0 0.0
    %3356 = vmatpush1.msra.mxu0 0.0
    %3357 = vmatprep.subr.mxu0 0.0
    %3358 = vmatpush1.msra.mxu0 0.0
    %3359 = vmatprep.subr.mxu0 0.0
    %3360 = vmatpush1.msra.mxu0 0.0
    %3361 = vmatprep.subr.mxu0 0.0
    %3362 = vmatpush1.msra.mxu0 0.0
    %3363 = vmatprep.subr.mxu0 0.0
    %3364 = vmatpush1.msra.mxu0 0.0
    %3365 = vmatprep.mubr.f32.mxu0 0.0
    %3366 = vmatmul.mubr.f32.gmra.mrb[0].mxu0 %v3251
    %v3367 = vpop.f32.mrb[0].mxu0
    %v3368 = vadd.f32 0.0, %v3367
    %v3369 = vpop.f32.mrb[0].mxu0
    %3370 = vmatprep.mubr.f32.mxu0 0.0
    %3371 = vmatmul.mubr.f32.gmra.mrb[0].mxu0 %v3254
    %v3372 = vpop.f32.mrb[0].mxu0
    %v3373 = vadd.f32 0.0, %v3372
    %v3374 = vpop.f32.mrb[0].mxu0
    %3375 = vmatprep.mubr.f32.mxu0 0.0
    %3376 = vmatmul.mubr.f32.gmra.mrb[0].mxu0 %v3257
    %v3377 = vpop.f32.mrb[0].mxu0
    %v3378 = vadd.f32 0.0, %v3377
    %v3379 = vpop.f32.mrb[0].mxu0
    %3380 = vmatprep.mubr.f32.mxu0 0.0
    %3381 = vmatmul.mubr.f32.gmra.mrb[0].mxu0 %v3260
    %v3382 = vpop.f32.mrb[0].mxu0
    %v3383 = vadd.f32 0.0, %v3382
    %v3384 = vpop.f32.mrb[0].mxu0
    %3385 = vmatprep.mubr.f32.mxu0 0.0
    %3386 = vmatmul.mubr.f32.gmra.mrb[0].mxu0 %v3263
    %v3387 = vpop.f32.mrb[0].mxu0
    %v3388 = vadd.f32 0.0, %v3387
    %v3389 = vpop.f32.mrb[0].mxu0
    %3390 = vmatprep.mubr.f32.mxu0 0.0
    %3391 = vmatmul.mubr.f32.gmra.mrb[0].mxu0 %v3266
    %v3392 = vpop.f32.mrb[0].mxu0
    %v3393 = vadd.f32 0.0, %v3392
    %v3394 = vpop.f32.mrb[0].mxu0
    %3395 = vmatprep.mubr.f32.mxu0 0.0
    %3396 = vmatmul.mubr.f32.gmra.mrb[0].mxu0 %v3269
    %v3397 = vpop.f32.mrb[0].mxu0
    %v3398 = vadd.f32 0.0, %v3397
    %v3399 = vpop.f32.mrb[0].mxu0
    %3400 = vmatprep.mubr.f32.mxu0 0.0
    %3401 = vmatmul.mubr.f32.gmra.mrb[0].mxu0 %v3272
    %v3402 = vpop.f32.mrb[0].mxu0
    %v3403 = vadd.f32 0.0, %v3402
    %v3404 = vpop.f32.mrb[0].mxu0
    %3405 = vmatprep.mubr.f32.mxu0 0.0
    %3406 = vmatmul.mubr.f32.gmra.mrb[0].mxu0 %v3275
    %v3407 = vpop.f32.mrb[0].mxu0
    %v3408 = vadd.f32 0.0, %v3407
    %v3409 = vpop.f32.mrb[0].mxu0
    %3410 = vmatprep.mubr.f32.mxu0 0.0
    %3411 = vmatmul.mubr.f32.gmra.mrb[0].mxu0 %v3278
    %v3412 = vpop.f32.mrb[0].mxu0
    %v3413 = vadd.f32 0.0, %v3412
    %v3414 = vpop.f32.mrb[0].mxu0
    %3415 = vmatprep.mubr.f32.mxu0 0.0
    %3416 = vmatmul.mubr.f32.gmra.mrb[0].mxu0 %v3281
    %v3417 = vpop.f32.mrb[0].mxu0
    %v3418 = vadd.f32 0.0, %v3417
    %v3419 = vpop.f32.mrb[0].mxu0
    %3420 = vmatprep.mubr.f32.mxu0 0.0
    %3421 = vmatmul.mubr.f32.gmra.mrb[0].mxu0 %v3284
    %v3422 = vpop.f32.mrb[0].mxu0
    %v3423 = vadd.f32 0.0, %v3422
    %v3424 = vpop.f32.mrb[0].mxu0
    %3425 = vmatprep.mubr.f32.mxu0 0.0
    %3426 = vmatmul.mubr.f32.gmra.mrb[0].mxu0 %v3287
    %v3427 = vpop.f32.mrb[0].mxu0
    %v3428 = vadd.f32 0.0, %v3427
    %v3429 = vpop.f32.mrb[0].mxu0
    %3430 = vmatprep.mubr.f32.mxu0 0.0
    %3431 = vmatmul.mubr.f32.gmra.mrb[0].mxu0 %v3290
    %v3432 = vpop.f32.mrb[0].mxu0
    %v3433 = vadd.f32 0.0, %v3432
    %v3434 = vpop.f32.mrb[0].mxu0
    %3435 = vmatprep.mubr.f32.mxu0 0.0
    %3436 = vmatmul.mubr.f32.gmra.mrb[0].mxu0 %v3293
    %v3437 = vpop.f32.mrb[0].mxu0
    %v3438 = vadd.f32 0.0, %v3437
    %v3439 = vpop.f32.mrb[0].mxu0
    %3440 = vmatprep.mubr.f32.mxu0 0.0
    %3441 = vmatmul.mubr.f32.gmra.mrb[0].mxu0 %v3296
    %v3442 = vpop.f32.mrb[0].mxu0
    %v3443 = vadd.f32 0.0, %v3442
    %v3444 = vpop.f32.mrb[0].mxu0
    %3445 = vdwg.mxu0
    %v3446 = vsel %vm659, %v3217, 0.0
    %v3447 = vrot.slane %v3446, 4
    %v3448 = vadd.f32 %v3446, %v3447
    %v3449 = vrot.slane %v3448, 2
    %v3450 = vadd.f32 %v3448, %v3449
    %v3451 = vrot.slane %v3450, 1
    %v3452 = vadd.f32 %v3450, %v3451
    %3453 = vmatprep.subr.mxu0 0.0
    %3454 = vmatpush1.xpose.msra.mxu0 %v3012
    %3455 = vmatprep.subr.mxu0 0.0
    %3456 = vmatpush1.xpose.msra.mxu0 %v3013
    %3457 = vmatprep.subr.mxu0 0.0
    %3458 = vmatpush1.xpose.msra.mxu0 %v3014
    %3459 = vmatprep.subr.mxu0 0.0
    %3460 = vmatpush1.xpose.msra.mxu0 %v3015
    %3461 = vmatprep.subr.mxu0 0.0
    %3462 = vmatpush1.xpose.msra.mxu0 %v3016
    %3463 = vmatprep.subr.mxu0 0.0
    %3464 = vmatpush1.xpose.msra.mxu0 %v3017
    %3465 = vmatprep.subr.mxu0 0.0
    %3466 = vmatpush1.xpose.msra.mxu0 %v3018
    %3467 = vmatprep.subr.mxu0 0.0
    %3468 = vmatpush1.xpose.msra.mxu0 %v3019
    %3469 = vmatprep.subr.mxu0 0.0
    %3470 = vmatpush1.xpose.msra.mxu0 %v3020
    %3471 = vmatprep.subr.mxu0 0.0
    %3472 = vmatpush1.xpose.msra.mxu0 %v3021
    %3473 = vmatprep.subr.mxu0 0.0
    %3474 = vmatpush1.xpose.msra.mxu0 %v3022
    %3475 = vmatprep.subr.mxu0 0.0
    %3476 = vmatpush1.xpose.msra.mxu0 %v3023
    %3477 = vmatprep.subr.mxu0 0.0
    %3478 = vmatpush1.xpose.msra.mxu0 %v3024
    %3479 = vmatprep.subr.mxu0 0.0
    %3480 = vmatpush1.xpose.msra.mxu0 %v3025
    %3481 = vmatprep.subr.mxu0 0.0
    %3482 = vmatpush1.xpose.msra.mxu0 %v3026
    %3483 = vmatprep.subr.mxu0 0.0
    %3484 = vmatpush1.xpose.msra.mxu0 %v3027
    %3485 = vmatprep.subr.mxu0 0.0
    %3486 = vmatpush1.xpose.msra.mxu0 0.0
    %3487 = vmatprep.subr.mxu0 0.0
    %3488 = vmatpush1.xpose.msra.mxu0 0.0
    %3489 = vmatprep.subr.mxu0 0.0
    %3490 = vmatpush1.xpose.msra.mxu0 0.0
    %3491 = vmatprep.subr.mxu0 0.0
    %3492 = vmatpush1.xpose.msra.mxu0 0.0
    %3493 = vmatprep.subr.mxu0 0.0
    %3494 = vmatpush1.xpose.msra.mxu0 0.0
    %3495 = vmatprep.subr.mxu0 0.0
    %3496 = vmatpush1.xpose.msra.mxu0 0.0
    %3497 = vmatprep.subr.mxu0 0.0
    %3498 = vmatpush1.xpose.msra.mxu0 0.0
    %3499 = vmatprep.subr.mxu0 0.0
    %3500 = vmatpush1.xpose.msra.mxu0 0.0
    %3501 = vmatprep.subr.mxu0 0.0
    %3502 = vmatpush1.xpose.msra.mxu0 0.0
    %3503 = vmatprep.subr.mxu0 0.0
    %3504 = vmatpush1.xpose.msra.mxu0 0.0
    %3505 = vmatprep.subr.mxu0 0.0
    %3506 = vmatpush1.xpose.msra.mxu0 0.0
    %3507 = vmatprep.subr.mxu0 0.0
    %3508 = vmatpush1.xpose.msra.mxu0 0.0
    %3509 = vmatprep.subr.mxu0 0.0
    %3510 = vmatpush1.xpose.msra.mxu0 0.0
    %3511 = vmatprep.subr.mxu0 0.0
    %3512 = vmatpush1.xpose.msra.mxu0 0.0
    %3513 = vmatprep.subr.mxu0 0.0
    %3514 = vmatpush1.xpose.msra.mxu0 0.0
    %3515 = vmatprep.subr.mxu0 0.0
    %3516 = vmatpush1.xpose.msra.mxu0 0.0
    %3517 = vmatprep.mubr.f32.mxu0 0.0
    %3518 = vmatmul.mubr.f32.gmra.mrb[0].mxu0 %v3217
    %v3519 = vpop.f32.mrb[0].mxu0
    %v3520 = vadd.f32 0.0, %v3519
    %v3521 = vpop.f32.mrb[0].mxu0
    %3522 = vdwg.mxu0
    %vm3523 = vcmp.gt.f32.partialorder %v3102, 0.0
    %v3524 = vsel %vm3523, %v3520, 0.0
    %v3526 = vsel %vm659, %v3524, 0
    %3528 = vmatprep.subr.mxu0 0.0
    %3529 = vmatpush1.msra.mxu0 %v3526
    %3530 = vmatprep.subr.mxu0 0.0
    %3531 = vmatpush1.msra.mxu0 0.0
    %3532 = vmatprep.subr.mxu0 0.0
    %3533 = vmatpush1.msra.mxu0 0.0
    %3534 = vmatprep.subr.mxu0 0.0
    %3535 = vmatpush1.msra.mxu0 0.0
    %3536 = vmatprep.subr.mxu0 0.0
    %3537 = vmatpush1.msra.mxu0 0.0
    %3538 = vmatprep.subr.mxu0 0.0
    %3539 = vmatpush1.msra.mxu0 0.0
    %3540 = vmatprep.subr.mxu0 0.0
    %3541 = vmatpush1.msra.mxu0 0.0
    %3542 = vmatprep.subr.mxu0 0.0
    %3543 = vmatpush1.msra.mxu0 0.0
    %3544 = vmatprep.subr.mxu0 0.0
    %3545 = vmatpush1.msra.mxu0 0.0
    %3546 = vmatprep.subr.mxu0 0.0
    %3547 = vmatpush1.msra.mxu0 0.0
    %3548 = vmatprep.subr.mxu0 0.0
    %3549 = vmatpush1.msra.mxu0 0.0
    %3550 = vmatprep.subr.mxu0 0.0
    %3551 = vmatpush1.msra.mxu0 0.0
    %3552 = vmatprep.subr.mxu0 0.0
    %3553 = vmatpush1.msra.mxu0 0.0
    %3554 = vmatprep.subr.mxu0 0.0
    %3555 = vmatpush1.msra.mxu0 0.0
    %3556 = vmatprep.subr.mxu0 0.0
    %3557 = vmatpush1.msra.mxu0 0.0
    %3558 = vmatprep.subr.mxu0 0.0
    %3559 = vmatpush1.msra.mxu0 0.0
    %3560 = vmatprep.subr.mxu0 0.0
    %3561 = vmatpush1.msra.mxu0 0.0
    %3562 = vmatprep.subr.mxu0 0.0
    %3563 = vmatpush1.msra.mxu0 0.0
    %3564 = vmatprep.subr.mxu0 0.0
    %3565 = vmatpush1.msra.mxu0 0.0
    %3566 = vmatprep.subr.mxu0 0.0
    %3567 = vmatpush1.msra.mxu0 0.0
    %3568 = vmatprep.subr.mxu0 0.0
    %3569 = vmatpush1.msra.mxu0 0.0
    %3570 = vmatprep.subr.mxu0 0.0
    %3571 = vmatpush1.msra.mxu0 0.0
    %3572 = vmatprep.subr.mxu0 0.0
    %3573 = vmatpush1.msra.mxu0 0.0
    %3574 = vmatprep.subr.mxu0 0.0
    %3575 = vmatpush1.msra.mxu0 0.0
    %3576 = vmatprep.subr.mxu0 0.0
    %3577 = vmatpush1.msra.mxu0 0.0
    %3578 = vmatprep.subr.mxu0 0.0
    %3579 = vmatpush1.msra.mxu0 0.0
    %3580 = vmatprep.subr.mxu0 0.0
    %3581 = vmatpush1.msra.mxu0 0.0
    %3582 = vmatprep.subr.mxu0 0.0
    %3583 = vmatpush1.msra.mxu0 0.0
    %3584 = vmatprep.subr.mxu0 0.0
    %3585 = vmatpush1.msra.mxu0 0.0
    %3586 = vmatprep.subr.mxu0 0.0
    %3587 = vmatpush1.msra.mxu0 0.0
    %3588 = vmatprep.subr.mxu0 0.0
    %3589 = vmatpush1.msra.mxu0 0.0
    %3590 = vmatprep.subr.mxu0 0.0
    %3591 = vmatpush1.msra.mxu0 0.0
    %3592 = vmatprep.mubr.f32.mxu0 0.0
    %3593 = vmatmul.mubr.f32.gmra.mrb[0].mxu0 %v1046
    %v3594 = vpop.f32.mrb[0].mxu0
    %v3595 = vadd.f32 0.0, %v3594
    %v3596 = vpop.f32.mrb[0].mxu0
    %3597 = vmatprep.mubr.f32.mxu0 0.0
    %3598 = vmatmul.mubr.f32.gmra.mrb[0].mxu0 %v1049
    %v3599 = vpop.f32.mrb[0].mxu0
    %v3600 = vadd.f32 0.0, %v3599
    %v3601 = vpop.f32.mrb[0].mxu0
    %3602 = vmatprep.mubr.f32.mxu0 0.0
    %3603 = vmatmul.mubr.f32.gmra.mrb[0].mxu0 %v1052
    %v3604 = vpop.f32.mrb[0].mxu0
    %v3605 = vadd.f32 0.0, %v3604
    %v3606 = vpop.f32.mrb[0].mxu0
    %3607 = vmatprep.mubr.f32.mxu0 0.0
    %3608 = vmatmul.mubr.f32.gmra.mrb[0].mxu0 %v1055
    %v3609 = vpop.f32.mrb[0].mxu0
    %v3610 = vadd.f32 0.0, %v3609
    %v3611 = vpop.f32.mrb[0].mxu0
    %3612 = vmatprep.mubr.f32.mxu0 0.0
    %3613 = vmatmul.mubr.f32.gmra.mrb[0].mxu0 %v1058
    %v3614 = vpop.f32.mrb[0].mxu0
    %v3615 = vadd.f32 0.0, %v3614
    %v3616 = vpop.f32.mrb[0].mxu0
    %3617 = vmatprep.mubr.f32.mxu0 0.0
    %3618 = vmatmul.mubr.f32.gmra.mrb[0].mxu0 %v1061
    %v3619 = vpop.f32.mrb[0].mxu0
    %v3620 = vadd.f32 0.0, %v3619
    %v3621 = vpop.f32.mrb[0].mxu0
    %3622 = vmatprep.mubr.f32.mxu0 0.0
    %3623 = vmatmul.mubr.f32.gmra.mrb[0].mxu0 %v1064
    %v3624 = vpop.f32.mrb[0].mxu0
    %v3625 = vadd.f32 0.0, %v3624
    %v3626 = vpop.f32.mrb[0].mxu0
    %3627 = vmatprep.mubr.f32.mxu0 0.0
    %3628 = vmatmul.mubr.f32.gmra.mrb[0].mxu0 %v1067
    %v3629 = vpop.f32.mrb[0].mxu0
    %v3630 = vadd.f32 0.0, %v3629
    %v3631 = vpop.f32.mrb[0].mxu0
    %3632 = vmatprep.mubr.f32.mxu0 0.0
    %3633 = vmatmul.mubr.f32.gmra.mrb[0].mxu0 %v1070
    %v3634 = vpop.f32.mrb[0].mxu0
    %v3635 = vadd.f32 0.0, %v3634
    %v3636 = vpop.f32.mrb[0].mxu0
    %3637 = vmatprep.mubr.f32.mxu0 0.0
    %3638 = vmatmul.mubr.f32.gmra.mrb[0].mxu0 %v1073
    %v3639 = vpop.f32.mrb[0].mxu0
    %v3640 = vadd.f32 0.0, %v3639
    %v3641 = vpop.f32.mrb[0].mxu0
    %3642 = vmatprep.mubr.f32.mxu0 0.0
    %3643 = vmatmul.mubr.f32.gmra.mrb[0].mxu0 %v1076
    %v3644 = vpop.f32.mrb[0].mxu0
    %v3645 = vadd.f32 0.0, %v3644
    %v3646 = vpop.f32.mrb[0].mxu0
    %3647 = vmatprep.mubr.f32.mxu0 0.0
    %3648 = vmatmul.mubr.f32.gmra.mrb[0].mxu0 %v1079
    %v3649 = vpop.f32.mrb[0].mxu0
    %v3650 = vadd.f32 0.0, %v3649
    %v3651 = vpop.f32.mrb[0].mxu0
    %3652 = vmatprep.mubr.f32.mxu0 0.0
    %3653 = vmatmul.mubr.f32.gmra.mrb[0].mxu0 %v1082
    %v3654 = vpop.f32.mrb[0].mxu0
    %v3655 = vadd.f32 0.0, %v3654
    %v3656 = vpop.f32.mrb[0].mxu0
    %3657 = vmatprep.mubr.f32.mxu0 0.0
    %3658 = vmatmul.mubr.f32.gmra.mrb[0].mxu0 %v1085
    %v3659 = vpop.f32.mrb[0].mxu0
    %v3660 = vadd.f32 0.0, %v3659
    %v3661 = vpop.f32.mrb[0].mxu0
    %3662 = vmatprep.mubr.f32.mxu0 0.0
    %3663 = vmatmul.mubr.f32.gmra.mrb[0].mxu0 %v1088
    %v3664 = vpop.f32.mrb[0].mxu0
    %v3665 = vadd.f32 0.0, %v3664
    %v3666 = vpop.f32.mrb[0].mxu0
    %3667 = vmatprep.mubr.f32.mxu0 0.0
    %3668 = vmatmul.mubr.f32.gmra.mrb[0].mxu0 %v1091
    %v3669 = vpop.f32.mrb[0].mxu0
    %v3670 = vadd.f32 0.0, %v3669
    %v3671 = vpop.f32.mrb[0].mxu0
    %3672 = vmatprep.mubr.f32.mxu0 0.0
    %3673 = vmatmul.mubr.f32.gmra.mrb[0].mxu0 %v1094
    %v3674 = vpop.f32.mrb[0].mxu0
    %v3675 = vadd.f32 0.0, %v3674
    %v3676 = vpop.f32.mrb[0].mxu0
    %3677 = vmatprep.mubr.f32.mxu0 0.0
    %3678 = vmatmul.mubr.f32.gmra.mrb[0].mxu0 %v1097
    %v3679 = vpop.f32.mrb[0].mxu0
    %v3680 = vadd.f32 0.0, %v3679
    %v3681 = vpop.f32.mrb[0].mxu0
    %3682 = vmatprep.mubr.f32.mxu0 0.0
    %3683 = vmatmul.mubr.f32.gmra.mrb[0].mxu0 %v1100
    %v3684 = vpop.f32.mrb[0].mxu0
    %v3685 = vadd.f32 0.0, %v3684
    %v3686 = vpop.f32.mrb[0].mxu0
    %3687 = vmatprep.mubr.f32.mxu0 0.0
    %3688 = vmatmul.mubr.f32.gmra.mrb[0].mxu0 %v1103
    %v3689 = vpop.f32.mrb[0].mxu0
    %v3690 = vadd.f32 0.0, %v3689
    %v3691 = vpop.f32.mrb[0].mxu0
    %3692 = vmatprep.mubr.f32.mxu0 0.0
    %3693 = vmatmul.mubr.f32.gmra.mrb[0].mxu0 %v1106
    %v3694 = vpop.f32.mrb[0].mxu0
    %v3695 = vadd.f32 0.0, %v3694
    %v3696 = vpop.f32.mrb[0].mxu0
    %3697 = vmatprep.mubr.f32.mxu0 0.0
    %3698 = vmatmul.mubr.f32.gmra.mrb[0].mxu0 %v1109
    %v3699 = vpop.f32.mrb[0].mxu0
    %v3700 = vadd.f32 0.0, %v3699
    %v3701 = vpop.f32.mrb[0].mxu0
    %3702 = vmatprep.mubr.f32.mxu0 0.0
    %3703 = vmatmul.mubr.f32.gmra.mrb[0].mxu0 %v1112
    %v3704 = vpop.f32.mrb[0].mxu0
    %v3705 = vadd.f32 0.0, %v3704
    %v3706 = vpop.f32.mrb[0].mxu0
    %3707 = vmatprep.mubr.f32.mxu0 0.0
    %3708 = vmatmul.mubr.f32.gmra.mrb[0].mxu0 %v1115
    %v3709 = vpop.f32.mrb[0].mxu0
    %v3710 = vadd.f32 0.0, %v3709
    %v3711 = vpop.f32.mrb[0].mxu0
    %3712 = vmatprep.mubr.f32.mxu0 0.0
    %3713 = vmatmul.mubr.f32.gmra.mrb[0].mxu0 %v1118
    %v3714 = vpop.f32.mrb[0].mxu0
    %v3715 = vadd.f32 0.0, %v3714
    %v3716 = vpop.f32.mrb[0].mxu0
    %3717 = vmatprep.mubr.f32.mxu0 0.0
    %3718 = vmatmul.mubr.f32.gmra.mrb[0].mxu0 %v1121
    %v3719 = vpop.f32.mrb[0].mxu0
    %v3720 = vadd.f32 0.0, %v3719
    %v3721 = vpop.f32.mrb[0].mxu0
    %3722 = vmatprep.mubr.f32.mxu0 0.0
    %3723 = vmatmul.mubr.f32.gmra.mrb[0].mxu0 %v1124
    %v3724 = vpop.f32.mrb[0].mxu0
    %v3725 = vadd.f32 0.0, %v3724
    %v3726 = vpop.f32.mrb[0].mxu0
    %3727 = vmatprep.mubr.f32.mxu0 0.0
    %3728 = vmatmul.mubr.f32.gmra.mrb[0].mxu0 %v1127
    %v3729 = vpop.f32.mrb[0].mxu0
    %v3730 = vadd.f32 0.0, %v3729
    %v3731 = vpop.f32.mrb[0].mxu0
    %3732 = vmatprep.mubr.f32.mxu0 0.0
    %3733 = vmatmul.mubr.f32.gmra.mrb[0].mxu0 %v1130
    %v3734 = vpop.f32.mrb[0].mxu0
    %v3735 = vadd.f32 0.0, %v3734
    %v3736 = vpop.f32.mrb[0].mxu0
    %3737 = vmatprep.mubr.f32.mxu0 0.0
    %3738 = vmatmul.mubr.f32.gmra.mrb[0].mxu0 %v1133
    %v3739 = vpop.f32.mrb[0].mxu0
    %v3740 = vadd.f32 0.0, %v3739
    %v3741 = vpop.f32.mrb[0].mxu0
    %3742 = vmatprep.mubr.f32.mxu0 0.0
    %3743 = vmatmul.mubr.f32.gmra.mrb[0].mxu0 %v1136
    %v3744 = vpop.f32.mrb[0].mxu0
    %v3745 = vadd.f32 0.0, %v3744
    %v3746 = vpop.f32.mrb[0].mxu0
    %3747 = vmatprep.mubr.f32.mxu0 0.0
    %3748 = vmatmul.mubr.f32.gmra.mrb[0].mxu0 %v1139
    %v3749 = vpop.f32.mrb[0].mxu0
    %v3750 = vadd.f32 0.0, %v3749
    %v3751 = vpop.f32.mrb[0].mxu0
    %3752 = vdwg.mxu0
    %v3753 = vsel %vm659, %v3524, 0.0
    %v3754 = vrot.slane %v3753, 4
    %v3755 = vadd.f32 %v3753, %v3754
    %v3756 = vrot.slane %v3755, 2
    %v3757 = vadd.f32 %v3755, %v3756
    %v3758 = vrot.slane %v3757, 1
    %v3759 = vadd.f32 %v3757, %v3758
    %v3760 = vmul.f32 %v3595, 0.4
    %v3761 = vmul.f32 %v3600, 0.4
    %v3762 = vmul.f32 %v3605, 0.4
    %v3763 = vmul.f32 %v3610, 0.4
    %v3764 = vmul.f32 %v3615, 0.4
    %v3765 = vmul.f32 %v3620, 0.4
    %v3766 = vmul.f32 %v3625, 0.4
    %v3767 = vmul.f32 %v3630, 0.4
    %v3768 = vmul.f32 %v3635, 0.4
    %v3769 = vmul.f32 %v3640, 0.4
    %v3770 = vmul.f32 %v3645, 0.4
    %v3771 = vmul.f32 %v3650, 0.4
    %v3772 = vmul.f32 %v3655, 0.4
    %v3773 = vmul.f32 %v3660, 0.4
    %v3774 = vmul.f32 %v3665, 0.4
    %v3775 = vmul.f32 %v3670, 0.4
    %v3776 = vmul.f32 %v3675, 0.4
    %v3777 = vmul.f32 %v3680, 0.4
    %v3778 = vmul.f32 %v3685, 0.4
    %v3779 = vmul.f32 %v3690, 0.4
    %v3780 = vmul.f32 %v3695, 0.4
    %v3781 = vmul.f32 %v3700, 0.4
    %v3782 = vmul.f32 %v3705, 0.4
    %v3783 = vmul.f32 %v3710, 0.4
    %v3784 = vmul.f32 %v3715, 0.4
    %v3785 = vmul.f32 %v3720, 0.4
    %v3786 = vmul.f32 %v3725, 0.4
    %v3787 = vmul.f32 %v3730, 0.4
    %v3788 = vmul.f32 %v3735, 0.4
    %v3789 = vmul.f32 %v3740, 0.4
    %v3790 = vmul.f32 %v3745, 0.4
    %v3791 = vmul.f32 %v3750, 0.4
    %v3792 = vsub.f32 %v2979, %v3760
    %v3793 = vsub.f32 %v2980, %v3761
    %v3794 = vsub.f32 %v2981, %v3762
    %v3795 = vsub.f32 %v2982, %v3763
    %v3796 = vsub.f32 %v2983, %v3764
    %v3797 = vsub.f32 %v2984, %v3765
    %v3798 = vsub.f32 %v2985, %v3766
    %v3799 = vsub.f32 %v2986, %v3767
    %v3800 = vsub.f32 %v2987, %v3768
    %v3801 = vsub.f32 %v2988, %v3769
    %v3802 = vsub.f32 %v2989, %v3770
    %v3803 = vsub.f32 %v2990, %v3771
    %v3804 = vsub.f32 %v2991, %v3772
    %v3805 = vsub.f32 %v2992, %v3773
    %v3806 = vsub.f32 %v2993, %v3774
    %v3807 = vsub.f32 %v2994, %v3775
    %v3808 = vsub.f32 %v2995, %v3776
    %v3809 = vsub.f32 %v2996, %v3777
    %v3810 = vsub.f32 %v2997, %v3778
    %v3811 = vsub.f32 %v2998, %v3779
    %v3812 = vsub.f32 %v2999, %v3780
    %v3813 = vsub.f32 %v3000, %v3781
    %v3814 = vsub.f32 %v3001, %v3782
    %v3815 = vsub.f32 %v3002, %v3783
    %v3816 = vsub.f32 %v3003, %v3784
    %v3817 = vsub.f32 %v3004, %v3785
    %v3818 = vsub.f32 %v3005, %v3786
    %v3819 = vsub.f32 %v3006, %v3787
    %v3820 = vsub.f32 %v3007, %v3788
    %v3821 = vsub.f32 %v3008, %v3789
    %v3822 = vsub.f32 %v3009, %v3790
    %v3823 = vsub.f32 %v3010, %v3791
    %3824 = vst [vmem:[#allocation2] sm:$0xff] %v3792
    %3825 = vst [vmem:[#allocation2 + $0x8] sm:$0xff] %v3793
    %3826 = vst [vmem:[#allocation2 + $0x10] sm:$0xff] %v3794
    %3827 = vst [vmem:[#allocation2 + $0x18] sm:$0xff] %v3795
    %3828 = vst [vmem:[#allocation2 + $0x20] sm:$0xff] %v3796
    %3829 = vst [vmem:[#allocation2 + $0x28] sm:$0xff] %v3797
    %3830 = vst [vmem:[#allocation2 + $0x30] sm:$0xff] %v3798
    %3831 = vst [vmem:[#allocation2 + $0x38] sm:$0xff] %v3799
    %3832 = vst [vmem:[#allocation2 + $0x40] sm:$0xff] %v3800
    %3833 = vst [vmem:[#allocation2 + $0x48] sm:$0xff] %v3801
    %3834 = vst [vmem:[#allocation2 + $0x50] sm:$0xff] %v3802
    %3835 = vst [vmem:[#allocation2 + $0x58] sm:$0xff] %v3803
    %3836 = vst [vmem:[#allocation2 + $0x60] sm:$0xff] %v3804
    %3837 = vst [vmem:[#allocation2 + $0x68] sm:$0xff] %v3805
    %3838 = vst [vmem:[#allocation2 + $0x70] sm:$0xff] %v3806
    %3839 = vst [vmem:[#allocation2 + $0x78] sm:$0xff] %v3807
    %3840 = vst [vmem:[#allocation2 + $0x80] sm:$0xff] %v3808
    %3841 = vst [vmem:[#allocation2 + $0x88] sm:$0xff] %v3809
    %3842 = vst [vmem:[#allocation2 + $0x90] sm:$0xff] %v3810
    %3843 = vst [vmem:[#allocation2 + $0x98] sm:$0xff] %v3811
    %3844 = vst [vmem:[#allocation2 + $0xa0] sm:$0xff] %v3812
    %3845 = vst [vmem:[#allocation2 + $0xa8] sm:$0xff] %v3813
    %3846 = vst [vmem:[#allocation2 + $0xb0] sm:$0xff] %v3814
    %3847 = vst [vmem:[#allocation2 + $0xb8] sm:$0xff] %v3815
    %3848 = vst [vmem:[#allocation2 + $0xc0] sm:$0xff] %v3816
    %3849 = vst [vmem:[#allocation2 + $0xc8] sm:$0xff] %v3817
    %3850 = vst [vmem:[#allocation2 + $0xd0] sm:$0xff] %v3818
    %3851 = vst [vmem:[#allocation2 + $0xd8] sm:$0xff] %v3819
    %3852 = vst [vmem:[#allocation2 + $0xe0] sm:$0xff] %v3820
    %3853 = vst [vmem:[#allocation2 + $0xe8] sm:$0xff] %v3821
    %3854 = vst [vmem:[#allocation2 + $0xf0] sm:$0xff] %v3822
    %3855 = vst [vmem:[#allocation2 + $0xf8] sm:$0xff] %v3823
    %v3856 = vmul.f32 %v3759, 0.4
    %v3857 = vsub.f32 %v3011, %v3856
    %3858 = vst [vmem:[#allocation3] sm:$0x1] %v3857
    %v3859 = vmul.f32 %v3368, 0.4
    %v3860 = vmul.f32 %v3373, 0.4
    %v3861 = vmul.f32 %v3378, 0.4
    %v3862 = vmul.f32 %v3383, 0.4
    %v3863 = vmul.f32 %v3388, 0.4
    %v3864 = vmul.f32 %v3393, 0.4
    %v3865 = vmul.f32 %v3398, 0.4
    %v3866 = vmul.f32 %v3403, 0.4
    %v3867 = vmul.f32 %v3408, 0.4
    %v3868 = vmul.f32 %v3413, 0.4
    %v3869 = vmul.f32 %v3418, 0.4
    %v3870 = vmul.f32 %v3423, 0.4
    %v3871 = vmul.f32 %v3428, 0.4
    %v3872 = vmul.f32 %v3433, 0.4
    %v3873 = vmul.f32 %v3438, 0.4
    %v3874 = vmul.f32 %v3443, 0.4
    %v3875 = vsub.f32 %v3012, %v3859
    %v3876 = vsub.f32 %v3013, %v3860
    %v3877 = vsub.f32 %v3014, %v3861
    %v3878 = vsub.f32 %v3015, %v3862
    %v3879 = vsub.f32 %v3016, %v3863
    %v3880 = vsub.f32 %v3017, %v3864
    %v3881 = vsub.f32 %v3018, %v3865
    %v3882 = vsub.f32 %v3019, %v3866
    %v3883 = vsub.f32 %v3020, %v3867
    %v3884 = vsub.f32 %v3021, %v3868
    %v3885 = vsub.f32 %v3022, %v3869
    %v3886 = vsub.f32 %v3023, %v3870
    %v3887 = vsub.f32 %v3024, %v3871
    %v3888 = vsub.f32 %v3025, %v3872
    %v3889 = vsub.f32 %v3026, %v3873
    %v3890 = vsub.f32 %v3027, %v3874
    %3891 = vst [vmem:[#allocation4] sm:$0xff] %v3875
    %3892 = vst [vmem:[#allocation4 + $0x8] sm:$0xff] %v3876
    %3893 = vst [vmem:[#allocation4 + $0x10] sm:$0xff] %v3877
    %3894 = vst [vmem:[#allocation4 + $0x18] sm:$0xff] %v3878
    %3895 = vst [vmem:[#allocation4 + $0x20] sm:$0xff] %v3879
    %3896 = vst [vmem:[#allocation4 + $0x28] sm:$0xff] %v3880
    %3897 = vst [vmem:[#allocation4 + $0x30] sm:$0xff] %v3881
    %3898 = vst [vmem:[#allocation4 + $0x38] sm:$0xff] %v3882
    %3899 = vst [vmem:[#allocation4 + $0x40] sm:$0xff] %v3883
    %3900 = vst [vmem:[#allocation4 + $0x48] sm:$0xff] %v3884
    %3901 = vst [vmem:[#allocation4 + $0x50] sm:$0xff] %v3885
    %3902 = vst [vmem:[#allocation4 + $0x58] sm:$0xff] %v3886
    %3903 = vst [vmem:[#allocation4 + $0x60] sm:$0xff] %v3887
    %3904 = vst [vmem:[#allocation4 + $0x68] sm:$0xff] %v3888
    %3905 = vst [vmem:[#allocation4 + $0x70] sm:$0xff] %v3889
    %3906 = vst [vmem:[#allocation4 + $0x78] sm:$0xff] %v3890
    %v3907 = vmul.f32 %v3452, 0.4
    %v3908 = vsub.f32 %v3028, %v3907
    %3909 = vst [vmem:[#allocation5] sm:$0x1] %v3908
    %v3910 = vld [vmem:[#allocation2] sm:$0xff]
    %v3911 = vld [vmem:[#allocation2 + $0x8] sm:$0xff]
    %v3912 = vld [vmem:[#allocation2 + $0x10] sm:$0xff]
    %v3913 = vld [vmem:[#allocation2 + $0x18] sm:$0xff]
    %v3914 = vld [vmem:[#allocation2 + $0x20] sm:$0xff]
    %v3915 = vld [vmem:[#allocation2 + $0x28] sm:$0xff]
    %v3916 = vld [vmem:[#allocation2 + $0x30] sm:$0xff]
    %v3917 = vld [vmem:[#allocation2 + $0x38] sm:$0xff]
    %v3918 = vld [vmem:[#allocation2 + $0x40] sm:$0xff]
    %v3919 = vld [vmem:[#allocation2 + $0x48] sm:$0xff]
    %v3920 = vld [vmem:[#allocation2 + $0x50] sm:$0xff]
    %v3921 = vld [vmem:[#allocation2 + $0x58] sm:$0xff]
    %v3922 = vld [vmem:[#allocation2 + $0x60] sm:$0xff]
    %v3923 = vld [vmem:[#allocation2 + $0x68] sm:$0xff]
    %v3924 = vld [vmem:[#allocation2 + $0x70] sm:$0xff]
    %v3925 = vld [vmem:[#allocation2 + $0x78] sm:$0xff]
    %v3926 = vld [vmem:[#allocation2 + $0x80] sm:$0xff]
    %v3927 = vld [vmem:[#allocation2 + $0x88] sm:$0xff]
    %v3928 = vld [vmem:[#allocation2 + $0x90] sm:$0xff]
    %v3929 = vld [vmem:[#allocation2 + $0x98] sm:$0xff]
    %v3930 = vld [vmem:[#allocation2 + $0xa0] sm:$0xff]
    %v3931 = vld [vmem:[#allocation2 + $0xa8] sm:$0xff]
    %v3932 = vld [vmem:[#allocation2 + $0xb0] sm:$0xff]
    %v3933 = vld [vmem:[#allocation2 + $0xb8] sm:$0xff]
    %v3934 = vld [vmem:[#allocation2 + $0xc0] sm:$0xff]
    %v3935 = vld [vmem:[#allocation2 + $0xc8] sm:$0xff]
    %v3936 = vld [vmem:[#allocation2 + $0xd0] sm:$0xff]
    %v3937 = vld [vmem:[#allocation2 + $0xd8] sm:$0xff]
    %v3938 = vld [vmem:[#allocation2 + $0xe0] sm:$0xff]
    %v3939 = vld [vmem:[#allocation2 + $0xe8] sm:$0xff]
    %v3940 = vld [vmem:[#allocation2 + $0xf0] sm:$0xff]
    %v3941 = vld [vmem:[#allocation2 + $0xf8] sm:$0xff]
    %v3942 = vld [vmem:[#allocation3] sm:$0x1]
    %v3943 = vld [vmem:[#allocation4] sm:$0xff]
    %v3944 = vld [vmem:[#allocation4 + $0x8] sm:$0xff]
    %v3945 = vld [vmem:[#allocation4 + $0x10] sm:$0xff]
    %v3946 = vld [vmem:[#allocation4 + $0x18] sm:$0xff]
    %v3947 = vld [vmem:[#allocation4 + $0x20] sm:$0xff]
    %v3948 = vld [vmem:[#allocation4 + $0x28] sm:$0xff]
    %v3949 = vld [vmem:[#allocation4 + $0x30] sm:$0xff]
    %v3950 = vld [vmem:[#allocation4 + $0x38] sm:$0xff]
    %v3951 = vld [vmem:[#allocation4 + $0x40] sm:$0xff]
    %v3952 = vld [vmem:[#allocation4 + $0x48] sm:$0xff]
    %v3953 = vld [vmem:[#allocation4 + $0x50] sm:$0xff]
    %v3954 = vld [vmem:[#allocation4 + $0x58] sm:$0xff]
    %v3955 = vld [vmem:[#allocation4 + $0x60] sm:$0xff]
    %v3956 = vld [vmem:[#allocation4 + $0x68] sm:$0xff]
    %v3957 = vld [vmem:[#allocation4 + $0x70] sm:$0xff]
    %v3958 = vld [vmem:[#allocation4 + $0x78] sm:$0xff]
    %v3959 = vld [vmem:[#allocation5] sm:$0x1]
    %v3961 = vlaneseq
    %v3962 = vshrl.u32 %v3961, 7
    %v3963 = vsub.s32 0, %v3962
    %v3964 = vrot.slane %v3942, %v3963
    %3966 = vmatprep.subr.mxu0 0.0
    %3967 = vmatpush1.msra.mxu0 %v3910
    %3968 = vmatprep.subr.mxu0 0.0
    %3969 = vmatpush1.msra.mxu0 %v3911
    %3970 = vmatprep.subr.mxu0 0.0
    %3971 = vmatpush1.msra.mxu0 %v3912
    %3972 = vmatprep.subr.mxu0 0.0
    %3973 = vmatpush1.msra.mxu0 %v3913
    %3974 = vmatprep.subr.mxu0 0.0
    %3975 = vmatpush1.msra.mxu0 %v3914
    %3976 = vmatprep.subr.mxu0 0.0
    %3977 = vmatpush1.msra.mxu0 %v3915
    %3978 = vmatprep.subr.mxu0 0.0
    %3979 = vmatpush1.msra.mxu0 %v3916
    %3980 = vmatprep.subr.mxu0 0.0
    %3981 = vmatpush1.msra.mxu0 %v3917
    %3982 = vmatprep.subr.mxu0 0.0
    %3983 = vmatpush1.msra.mxu0 %v3918
    %3984 = vmatprep.subr.mxu0 0.0
    %3985 = vmatpush1.msra.mxu0 %v3919
    %3986 = vmatprep.subr.mxu0 0.0
    %3987 = vmatpush1.msra.mxu0 %v3920
    %3988 = vmatprep.subr.mxu0 0.0
    %3989 = vmatpush1.msra.mxu0 %v3921
    %3990 = vmatprep.subr.mxu0 0.0
    %3991 = vmatpush1.msra.mxu0 %v3922
    %3992 = vmatprep.subr.mxu0 0.0
    %3993 = vmatpush1.msra.mxu0 %v3923
    %3994 = vmatprep.subr.mxu0 0.0
    %3995 = vmatpush1.msra.mxu0 %v3924
    %3996 = vmatprep.subr.mxu0 0.0
    %3997 = vmatpush1.msra.mxu0 %v3925
    %3998 = vmatprep.subr.mxu0 0.0
    %3999 = vmatpush1.msra.mxu0 %v3926
    %4000 = vmatprep.subr.mxu0 0.0
    %4001 = vmatpush1.msra.mxu0 %v3927
    %4002 = vmatprep.subr.mxu0 0.0
    %4003 = vmatpush1.msra.mxu0 %v3928
    %4004 = vmatprep.subr.mxu0 0.0
    %4005 = vmatpush1.msra.mxu0 %v3929
    %4006 = vmatprep.subr.mxu0 0.0
    %4007 = vmatpush1.msra.mxu0 %v3930
    %4008 = vmatprep.subr.mxu0 0.0
    %4009 = vmatpush1.msra.mxu0 %v3931
    %4010 = vmatprep.subr.mxu0 0.0
    %4011 = vmatpush1.msra.mxu0 %v3932
    %4012 = vmatprep.subr.mxu0 0.0
    %4013 = vmatpush1.msra.mxu0 %v3933
    %4014 = vmatprep.subr.mxu0 0.0
    %4015 = vmatpush1.msra.mxu0 %v3934
    %4016 = vmatprep.subr.mxu0 0.0
    %4017 = vmatpush1.msra.mxu0 %v3935
    %4018 = vmatprep.subr.mxu0 0.0
    %4019 = vmatpush1.msra.mxu0 %v3936
    %4020 = vmatprep.subr.mxu0 0.0
    %4021 = vmatpush1.msra.mxu0 %v3937
    %4022 = vmatprep.subr.mxu0 0.0
    %4023 = vmatpush1.msra.mxu0 %v3938
    %4024 = vmatprep.subr.mxu0 0.0
    %4025 = vmatpush1.msra.mxu0 %v3939
    %4026 = vmatprep.subr.mxu0 0.0
    %4027 = vmatpush1.msra.mxu0 %v3940
    %4028 = vmatprep.subr.mxu0 0.0
    %4029 = vmatpush1.msra.mxu0 %v3941
    %4030 = vmatprep.mubr.f32.mxu0 %v74
    %4031 = vmatmul.mubr.f32.gmra.mrb[0].mxu0 %v73
    %v4032 = vpop.f32.mrb[0].mxu0
    %v4033 = vadd.f32 %v3964, %v4032
    %v4034 = vpop.f32.mrb[0].mxu0
    %4035 = vmatprep.mubr.f32.mxu0 %v76
    %4036 = vmatmul.mubr.f32.gmra.mrb[0].mxu0 %v75
    %v4037 = vpop.f32.mrb[0].mxu0
    %v4038 = vadd.f32 %v3964, %v4037
    %v4039 = vpop.f32.mrb[0].mxu0
    %4040 = vdwg.mxu0
    %v4041 = vmax.f32 %v4033, 0.0
    %v4042 = vmax.f32 %v4038, 0.0
    %v4044 = vlaneseq
    %v4045 = vshrl.u32 %v4044, 7
    %v4046 = vsub.s32 0, %v4045
    %v4047 = vrot.slane %v3959, %v4046
    %4049 = vmatprep.subr.mxu0 0.0
    %4050 = vmatpush1.msra.mxu0 %v3943
    %4051 = vmatprep.subr.mxu0 0.0
    %4052 = vmatpush1.msra.mxu0 %v3944
    %4053 = vmatprep.subr.mxu0 0.0
    %4054 = vmatpush1.msra.mxu0 %v3945
    %4055 = vmatprep.subr.mxu0 0.0
    %4056 = vmatpush1.msra.mxu0 %v3946
    %4057 = vmatprep.subr.mxu0 0.0
    %4058 = vmatpush1.msra.mxu0 %v3947
    %4059 = vmatprep.subr.mxu0 0.0
    %4060 = vmatpush1.msra.mxu0 %v3948
    %4061 = vmatprep.subr.mxu0 0.0
    %4062 = vmatpush1.msra.mxu0 %v3949
    %4063 = vmatprep.subr.mxu0 0.0
    %4064 = vmatpush1.msra.mxu0 %v3950
    %4065 = vmatprep.subr.mxu0 0.0
    %4066 = vmatpush1.msra.mxu0 %v3951
    %4067 = vmatprep.subr.mxu0 0.0
    %4068 = vmatpush1.msra.mxu0 %v3952
    %4069 = vmatprep.subr.mxu0 0.0
    %4070 = vmatpush1.msra.mxu0 %v3953
    %4071 = vmatprep.subr.mxu0 0.0
    %4072 = vmatpush1.msra.mxu0 %v3954
    %4073 = vmatprep.subr.mxu0 0.0
    %4074 = vmatpush1.msra.mxu0 %v3955
    %4075 = vmatprep.subr.mxu0 0.0
    %4076 = vmatpush1.msra.mxu0 %v3956
    %4077 = vmatprep.subr.mxu0 0.0
    %4078 = vmatpush1.msra.mxu0 %v3957
    %4079 = vmatprep.subr.mxu0 0.0
    %4080 = vmatpush1.msra.mxu0 %v3958
    %4081 = vmatprep.subr.mxu0 0.0
    %4082 = vmatpush1.msra.mxu0 0.0
    %4083 = vmatprep.subr.mxu0 0.0
    %4084 = vmatpush1.msra.mxu0 0.0
    %4085 = vmatprep.subr.mxu0 0.0
    %4086 = vmatpush1.msra.mxu0 0.0
    %4087 = vmatprep.subr.mxu0 0.0
    %4088 = vmatpush1.msra.mxu0 0.0
    %4089 = vmatprep.subr.mxu0 0.0
    %4090 = vmatpush1.msra.mxu0 0.0
    %4091 = vmatprep.subr.mxu0 0.0
    %4092 = vmatpush1.msra.mxu0 0.0
    %4093 = vmatprep.subr.mxu0 0.0
    %4094 = vmatpush1.msra.mxu0 0.0
    %4095 = vmatprep.subr.mxu0 0.0
    %4096 = vmatpush1.msra.mxu0 0.0
    %4097 = vmatprep.subr.mxu0 0.0
    %4098 = vmatpush1.msra.mxu0 0.0
    %4099 = vmatprep.subr.mxu0 0.0
    %4100 = vmatpush1.msra.mxu0 0.0
    %4101 = vmatprep.subr.mxu0 0.0
    %4102 = vmatpush1.msra.mxu0 0.0
    %4103 = vmatprep.subr.mxu0 0.0
    %4104 = vmatpush1.msra.mxu0 0.0
    %4105 = vmatprep.subr.mxu0 0.0
    %4106 = vmatpush1.msra.mxu0 0.0
    %4107 = vmatprep.subr.mxu0 0.0
    %4108 = vmatpush1.msra.mxu0 0.0
    %4109 = vmatprep.subr.mxu0 0.0
    %4110 = vmatpush1.msra.mxu0 0.0
    %4111 = vmatprep.subr.mxu0 0.0
    %4112 = vmatpush1.msra.mxu0 0.0
    %4113 = vmatprep.mubr.f32.mxu0 0.0
    %4114 = vmatmul.mubr.f32.gmra.mrb[0].mxu0 %v4041
    %v4115 = vpop.f32.mrb[0].mxu0
    %v4116 = vadd.f32 %v4047, %v4115
    %v4117 = vpop.f32.mrb[0].mxu0
    %4118 = vmatprep.mubr.f32.mxu0 0.0
    %4119 = vmatmul.mubr.f32.gmra.mrb[0].mxu0 %v4042
    %v4120 = vpop.f32.mrb[0].mxu0
    %v4121 = vadd.f32 %v4047, %v4120
    %v4122 = vpop.f32.mrb[0].mxu0
    %4123 = vdwg.mxu0
    %v4124 = vadd.f32 %v4116, %v83
    %v4125 = vadd.f32 %v4121, %v83
    %4126 = vmax.xlane.f32.xlu0 %v4124
    %v4127 = vpop.xlane.xlu0 %4126
    %v4128 = vsel %vm408, %v4125, -inf
    %4129 = vmax.xlane.f32.xlu0 %v4128
    %v4130 = vpop.xlane.xlu0 %4129
    %vm4131 = vcmp.ge.f32.partialorder %v4124, %v4127
    %vm4132 = vcmp.ge.f32.partialorder %v4125, %v4130
    %v4133 = vsel %vm4131, %v81, 128
    %v4134 = vsel %vm4132, %v81, 128
    %v4135 = vand.u32 %v4133, 65535
    %v4136 = vshra.s32 %v4133, 16
    %v4137 = vcvt.s32.f32 %v4135
    %v4138 = vcvt.s32.f32 %v4136
    %4139 = vmin.xlane.f32.xlu0 %v4138
    %v4140 = vpop.xlane.xlu0 %4139
    %vm4141 = vcmp.eq.f32.partialorder %v4138, %v4140
    %v4142 = vsel %vm4141, %v4137, inf
    %4143 = vmin.xlane.f32.xlu0 %v4142
    %v4144 = vpop.xlane.xlu0 %4143
    %v4145 = vcvt.f32.s32 %v4144
    %v4146 = vcvt.f32.s32 %v4140
    %v4147 = vshll.u32 %v4146, 16
    %v4148 = vadd.s32 %v4147, %v4145
    %v4149 = vsel %vm408, %v4134, 2147483647
    %v4150 = vand.u32 %v4149, 65535
    %v4151 = vshra.s32 %v4149, 16
    %v4152 = vcvt.s32.f32 %v4150
    %v4153 = vcvt.s32.f32 %v4151
    %4154 = vmin.xlane.f32.xlu0 %v4153
    %v4155 = vpop.xlane.xlu0 %4154
    %vm4156 = vcmp.eq.f32.partialorder %v4153, %v4155
    %v4157 = vsel %vm4156, %v4152, inf
    %4158 = vmin.xlane.f32.xlu0 %v4157
    %v4159 = vpop.xlane.xlu0 %4158
    %v4160 = vcvt.f32.s32 %v4159
    %v4161 = vcvt.f32.s32 %v4155
    %v4162 = vshll.u32 %v4161, 16
    %v4163 = vadd.s32 %v4162, %v4160
    %vm4164 = vcmp.eq.s32.totalorder %v4148, %v78
    %vm4165 = vcmp.eq.s32.totalorder %v4163, %v79
    %v4166 = vsel %vm4164, 1, 0
    %v4167 = vsel %vm4165, 1, 0
    %v4168 = vcvt.s32.f32 %v4166
    %v4169 = vcvt.s32.f32 %v4167
    %4172 = vrot.lane.b32.xlu0 %v4168, 3
    %v4173 = vpop.permute.xlu0 %4172
    %4174 = vrot.lane.b32.xlu0 %v4169, 3
    %v4175 = vpop.permute.xlu0 %4174
    %vm4178 = vcmask 31768
    %4179 = vst.msk [vmem:[%s8] sm:$0xff] %vm4178, %v4173
    %vm4180 = vcmask 30744
    %4181 = vst.msk [vmem:[%s8 + $0x8] sm:$0x7f] %vm4180, %v4175
    %vm4182 = vcmask 0
    %4183 = vst.msk [vmem:[#allocation12] sm:$0x1] %vm4182, %v3215
    // Predicated region
    $region46: #{run.1} parent=1 // pred_check
      _
    $region47: #{run.1} parent=1 // pred_check_branch
      %4185 = sbr.rel (0) target = $region49
    $region48: #{run.1} parent=1 // pred_region
      _
    $region49: #{run.1} parent=1 // pred_fallthru
      _
    // Predicated region
    $region50: #{run.1} parent=1 // pred_check
      _
    $region51: #{run.1} parent=1 // pred_check_branch
      %4187 = sbr.rel (0) target = $region53
    $region52: #{run.1} parent=1 // pred_region
      %s4189 = ssub.s32 16, 16
      %4190 = vsyncadd [#allocation8], %s4189
      %s4192 = sshll.u32 [#allocation12], 4
      %s4193 = int_to_ptr.vmem [resolvable:$true] %s4192
      %4195 = dma.vmem_to_hbm [thread:$0]  %s4193, 16, %s9, [#allocation8]
    $region53: #{run.1} parent=1 // pred_fallthru
      _
    // Predicated region
    $region54: #{run.1} parent=1 // pred_check
      _
    $region55: #{run.1} parent=1 // pred_check_branch
      %4197 = sbr.rel (0) target = $region57
    $region56: #{run.1} parent=1 // pred_region
      _
    $region57: #{run.1} parent=1 // pred_fallthru
      _
    // Predicated region
    $region58: #{run.1} parent=1 // pred_check
      _
    $region59: #{run.1} parent=1 // pred_check_branch
      %4199 = sbr.rel (0) target = $region61
    $region60: #{run.1} parent=1 // pred_region
      %4200 = dma.done [#allocation8], 16
    $region61: #{run.1} parent=1 // pred_fallthru
      _
    %4201 = vsyncpa [#allocation7], 1
    %4202 = vsyncpa [#allocation10], 1
    %4203 = vsyncpa [#allocation8], 1

</llo_original>
